<compile_context>
chip_gen: v5e
topology: v5e:2x2
jax: 0.10.0
libtpu: 0.0.40
codegen_flags: <defaults>
</compile_context>

<pallas_src>
import math
import functools
import jax
import jax.numpy as jnp
from jax.experimental import pallas as pl
from jax.experimental.pallas import tpu as pltpu


# ----------------------------- Pallas kernels -------------------------------
def _sngp_features_kernel(x_ref, w12_ref, b2_ref, ln_g_ref, ln_b_ref,
                          wr_ref, br_ref, wo_ref, bo_ref,
                          logits_ref, phi_ref):
    """Per batch tile: fused linears -> LayerNorm -> RFF cos -> logits (+ phi)."""
    # pre_classifier (Linear H->H) + Identity activation + eval dropout (no-op)
    # + reduce_dim_layer (Linear H->R, no bias), fused in the wrapper:
    #   z = x @ (W1 @ W2) + (b1 @ W2)
    # TODO(synk): training-mode dropout (p=0.2) not implemented (inference path only).
    z = jnp.dot(x_ref[...], w12_ref[...],
                preferred_element_type=jnp.float32) + b2_ref[...]

    # GP head normalize_input=True -> LayerNorm over reduction dim R (f32 VPU math)
    mu = jnp.mean(z, axis=-1, keepdims=True)
    var = jnp.mean(jnp.square(z - mu), axis=-1, keepdims=True)
    zn = (z - mu) * jax.lax.rsqrt(var + 1e-5) * ln_g_ref[...] + ln_b_ref[...]

    # Random Fourier features. kernel_scale=2.0 (i.e. 1/sqrt(2)) is folded into Wr.
    proj = jnp.dot(zn.astype(jnp.bfloat16), wr_ref[...],
                   preferred_element_type=jnp.float32) + br_ref[...]
    cosv = jnp.cos(proj)                       # f32 transcendental (EUP)
    phi_bf = cosv.astype(jnp.bfloat16)
    phi_ref[...] = phi_bf                      # unscaled cos features for cov kernel

    # Output layer. sqrt(2/D) folded into Wo; logits last dim padded to 128 lanes.
    logits_ref[...] = jnp.dot(phi_bf, wo_ref[...],
                              preferred_element_type=jnp.float32) + bo_ref[...]


def _sngp_cov_kernel(phi_i_ref, phi_j_ref, cov_ref, *, scale):
    # cov = phi @ inv(precision) @ phi.T with precision = ridge*I (untrained head)
    # phi = sqrt(2/D) * cos(...)  =>  cov_tile = (2/D) * cos_i @ cos_j.T
    # TODO(synk): trained Laplace precision matrix contraction not implemented
    # (assumes identity precision, as at initialization).
    cov_ref[...] = jnp.float32(scale) * jax.lax.dot_general(
        phi_i_ref[...], phi_j_ref[...], (((1,), (1,)), ((), ())),
        preferred_element_type=jnp.float32)


# ----------------------------- wrapper ---------------------------------------
def fuse_sngp_params(params):
    """Fold the Identity-separated linears and constant scalings into the
    weights (valid in eval: activation=Identity, dropout inactive). Also pads
    the output layer to a lane-dense 128-wide slab and casts MXU operands to bf16."""
    D = params["wr"].shape[1]
    C = params["wo"].shape[1]
    c_pad = ((C + 127) // 128) * 128
    w12 = params["w1"] @ params["w2"]                       # (H, R)
    b2 = params["b1"] @ params["w2"]                        # (1, R)
    wr = params["wr"] * jnp.float32(1.0 / math.sqrt(2.0))   # kernel_scale = 2.0
    wo = params["wo"] * jnp.float32(math.sqrt(2.0 / D))     # RFF sqrt(2/D)
    wo_pad = jnp.zeros((D, c_pad), jnp.float32).at[:, :C].set(wo)
    bo_pad = jnp.zeros((1, c_pad), jnp.float32).at[:, :C].set(params["bo"])
    return {
        "w12": w12.astype(jnp.bfloat16),
        "b2": b2.astype(jnp.float32),
        "ln_g": params["ln_g"].astype(jnp.float32),
        "ln_b": params["ln_b"].astype(jnp.float32),
        "wr": wr.astype(jnp.bfloat16),
        "br": params["br"].astype(jnp.float32),
        "wo": wo_pad.astype(jnp.bfloat16),
        "bo": bo_pad.astype(jnp.float32),
    }


def sngp_forward(x, fused, num_classes, *, tile_b=128):
    B, H = x.shape
    R = fused["w12"].shape[1]
    D = fused["wr"].shape[1]
    c_pad = fused["wo"].shape[1]

    # Batch tile: prefer multiples of 16 (native bf16 sublane tiling) that divide B.
    tb = min(tile_b, B)
    while tb > 1 and B % tb != 0:
        tb //= 2
    n_tiles = B // tb

    x_bf = x.astype(jnp.bfloat16)
    cparams = pltpu.CompilerParams(
        dimension_semantics=("parallel",),
        vmem_limit_bytes=48 * 1024 * 1024)

    const2 = lambda i: (0, 0)                  # weights: resident, never re-DMA'd
    weight_specs = [
        pl.BlockSpec((H, R), const2),          # w12
        pl.BlockSpec((1, R), const2),          # b2
        pl.BlockSpec((1, R), const2),          # ln_g
        pl.BlockSpec((1, R), const2),          # ln_b
        pl.BlockSpec((R, D), const2),          # wr
        pl.BlockSpec((1, D), const2),          # br
        pl.BlockSpec((D, c_pad), const2),      # wo (padded to 128 lanes)
        pl.BlockSpec((1, c_pad), const2),      # bo
    ]

    logits_pad, phi = pl.pallas_call(
        _sngp_features_kernel,
        out_shape=(jax.ShapeDtypeStruct((B, c_pad), jnp.float32),
                   jax.ShapeDtypeStruct((B, D), jnp.bfloat16)),
        grid=(n_tiles,),
        in_specs=[pl.BlockSpec((tb, H), lambda i: (i, 0))] + weight_specs,
        out_specs=(pl.BlockSpec((tb, c_pad), lambda i: (i, 0)),
                   pl.BlockSpec((tb, D), lambda i: (i, 0))),
        compiler_params=cparams,
    )(x_bf, fused["w12"], fused["b2"], fused["ln_g"], fused["ln_b"],
      fused["wr"], fused["br"], fused["wo"], fused["bo"])

    # Covariance tiled over (Bi, Bj) so (B, B) never has to be VMEM-resident.
    tbj = 128 if B % 128 == 0 else B
    cov = pl.pallas_call(
        functools.partial(_sngp_cov_kernel, scale=2.0 / D),
        out_shape=jax.ShapeDtypeStruct((B, B), jnp.float32),
        grid=(n_tiles, B // tbj),
        in_specs=[pl.BlockSpec((tb, D), lambda i, j: (i, 0)),
                  pl.BlockSpec((tbj, D), lambda i, j: (j, 0))],
        out_specs=pl.BlockSpec((tb, tbj), lambda i, j: (i, j)),
        compiler_params=pltpu.CompilerParams(
            dimension_semantics=("parallel", "parallel"),
            vmem_limit_bytes=48 * 1024 * 1024),
    )(phi, phi)

    return {"logits": logits_pad[:, :num_classes], "covariance": cov}


# ----------------------- parameter setup (plain JAX glue) --------------------
def _spectral_normalize(w, key, n_power_iterations=1):
    """Mimics torch.nn.utils.parametrizations.spectral_norm at forward time.
    w is (out_features, in_features), torch convention.
    NOTE: torch keeps a persisted u/v buffer; here u is drawn fresh, so sigma
    differs slightly from a long-running torch module."""
    u = jax.random.normal(key, (w.shape[0],), dtype=jnp.float32)
    u = u / (jnp.linalg.norm(u) + 1e-12)
    v = None
    for _ in range(max(1, n_power_iterations)):
        v = w.T @ u
        v = v / (jnp.linalg.norm(v) + 1e-12)
        u = w @ v
        u = u / (jnp.linalg.norm(u) + 1e-12)
    sigma = u @ (w @ v)
    return w / sigma


def _orthogonal_random_features(key, R, D, stddev=0.05, random_norm=True):
    """orthogonal_random_features_initializer(random_norm=True, stddev=0.05).
    Returns an (R, D) matrix (transpose of the torch (D, R) Linear weight)."""
    assert D % R == 0
    n_blocks = D // R
    keys = jax.random.split(key, 2 * n_blocks)
    blocks = []
    for i in range(n_blocks):
        g = jax.random.normal(keys[2 * i], (R, R), dtype=jnp.float32)
        q, _ = jnp.linalg.qr(g)
        if random_norm:
            norms = jnp.linalg.norm(
                jax.random.normal(keys[2 * i + 1], (R, R), dtype=jnp.float32),
                axis=-1)
            q = q * norms[:, None]
        blocks.append(stddev * q)               # each block: (R, R)
    w_DR = jnp.concatenate(blocks, axis=0)      # (D, R), torch layout
    return w_DR.T                               # (R, D)


def init_sngp_params(key, H, R, D, C):
    ks = jax.random.split(key, 8)
    # pre_classifier: Linear(H, H), spectral-normalized
    w1_t = jax.random.normal(ks[0], (H, H), dtype=jnp.float32) / math.sqrt(H)
    w1_t = _spectral_normalize(w1_t, ks[1], n_power_iterations=1)
    b1 = jnp.zeros((1, H), dtype=jnp.float32)
    # reduce_dim_layer: Linear(H, R, bias=False), weight.normal_(), spectral-normalized
    w2_t = jax.random.normal(ks[2], (R, H), dtype=jnp.float32)
    w2_t = _spectral_normalize(w2_t, ks[3], n_power_iterations=1)
    # GP head (random_features = D)
    ln_g = jnp.ones((1, R), dtype=jnp.float32)
    ln_b = jnp.zeros((1, R), dtype=jnp.float32)
    wr = _orthogonal_random_features(ks[4], R, D, stddev=0.05, random_norm=True)
    br = jax.random.uniform(ks[5], (1, D), dtype=jnp.float32,
                            minval=0.0, maxval=2.0 * math.pi)
    wo = 0.05 * jax.random.normal(ks[6], (D, C), dtype=jnp.float32)
    bo = jnp.zeros((1, C), dtype=jnp.float32)   # init_output_bias = 0.0
    return {
        "w1": w1_t.T,   # (H, H)  -> x @ w1
        "b1": b1,       # (1, H)
        "w2": w2_t.T,   # (H, R)
        "ln_g": ln_g, "ln_b": ln_b,
        "wr": wr,       # (R, D)
        "br": br,       # (1, D)
        "wo": wo,       # (D, C)
        "bo": bo,       # (1, C)
    }


# ----------------------------- demo -------------------------------------------
if __name__ == "__main__":
    # reduction_dim=128, random_features=1024 are the module defaults.
    B, H, R, D, C = 32, 32, 128, 1024, 8
    key = jax.random.PRNGKey(0)
    k_x, k_p = jax.random.split(key)
    x = jax.random.normal(k_x, (B, H), dtype=jnp.float32)
    params = init_sngp_params(k_p, H, R, D, C)
    fused = fuse_sngp_params(params)

    out = sngp_forward(x, fused, num_classes=C, tile_b=16)
    jax.block_until_ready(out)

    assert out["logits"].shape == (B, C)
    assert out["covariance"].shape == (B, B)
    assert jnp.all(jnp.isfinite(out["logits"]))
    assert jnp.all(jnp.isfinite(out["covariance"]))
    print("KERNEL_OK")
</pallas_src>

<mosaic_0001>
module attributes {stable_mosaic.version = 11 : i64} {
  func.func @_sngp_features_kernel(%arg0: i32, %arg1: memref<16x32xbf16, #tpu.memory_space<vmem>>, %arg2: memref<32x128xbf16, #tpu.memory_space<vmem>>, %arg3: memref<1x128xf32, #tpu.memory_space<vmem>>, %arg4: memref<1x128xf32, #tpu.memory_space<vmem>>, %arg5: memref<1x128xf32, #tpu.memory_space<vmem>>, %arg6: memref<128x1024xbf16, #tpu.memory_space<vmem>>, %arg7: memref<1x1024xf32, #tpu.memory_space<vmem>>, %arg8: memref<1024x128xbf16, #tpu.memory_space<vmem>>, %arg9: memref<1x128xf32, #tpu.memory_space<vmem>>, %arg10: memref<16x128xf32, #tpu.memory_space<vmem>>, %arg11: memref<16x1024xbf16, #tpu.memory_space<vmem>>) attributes {dimension_semantics = [#tpu.dimension_semantics<parallel>], iteration_bounds = array<i64: 2>, scalar_prefetch = 0 : i64, scratch_operands = 0 : i64, tpu.core_type = #tpu.core_type<tc>, window_params = [{transform_indices = @transform_0, window_bounds = array<i64: 16, 32>}, {pipeline_mode = #tpu.pipeline_mode<synchronous>, transform_indices = @transform_1, window_bounds = array<i64: 32, 128>}, {pipeline_mode = #tpu.pipeline_mode<synchronous>, transform_indices = @transform_2, window_bounds = array<i64: 1, 128>}, {pipeline_mode = #tpu.pipeline_mode<synchronous>, transform_indices = @transform_3, window_bounds = array<i64: 1, 128>}, {pipeline_mode = #tpu.pipeline_mode<synchronous>, transform_indices = @transform_4, window_bounds = array<i64: 1, 128>}, {pipeline_mode = #tpu.pipeline_mode<synchronous>, transform_indices = @transform_5, window_bounds = array<i64: 128, 1024>}, {pipeline_mode = #tpu.pipeline_mode<synchronous>, transform_indices = @transform_6, window_bounds = array<i64: 1, 1024>}, {pipeline_mode = #tpu.pipeline_mode<synchronous>, transform_indices = @transform_7, window_bounds = array<i64: 1024, 128>}, {pipeline_mode = #tpu.pipeline_mode<synchronous>, transform_indices = @transform_8, window_bounds = array<i64: 1, 128>}, {transform_indices = @transform_9, window_bounds = array<i64: 16, 128>}, {transform_indices = @transform_10, window_bounds = array<i64: 16, 1024>}]} {
    %c0 = arith.constant 0 : index
    %c0_0 = arith.constant 0 : index
    %0 = vector.load %arg1[%c0, %c0_0] : memref<16x32xbf16, #tpu.memory_space<vmem>>, vector<16x32xbf16>
    %c0_1 = arith.constant 0 : index
    %c0_2 = arith.constant 0 : index
    %1 = vector.load %arg2[%c0_1, %c0_2] : memref<32x128xbf16, #tpu.memory_space<vmem>>, vector<32x128xbf16>
    %cst = arith.constant dense<0.000000e+00> : vector<16x128xf32>
    %2 = tpu.matmul %0, %1, %cst {dimension_numbers = #tpu.dot_dimension_numbers<[1], [0], [0], [1], [0, 0, 1, 1], [], []>} : vector<16x32xbf16>, vector<32x128xbf16>, vector<16x128xf32> -> vector<16x128xf32>
    %c0_3 = arith.constant 0 : index
    %c0_4 = arith.constant 0 : index
    %3 = vector.load %arg3[%c0_3, %c0_4] : memref<1x128xf32, #tpu.memory_space<vmem>>, vector<1x128xf32>
    %4 = vector.broadcast %3 : vector<1x128xf32> to vector<16x128xf32>
    %5 = arith.addf %2, %4 : vector<16x128xf32>
    %cst_5 = arith.constant dense<0.000000e+00> : vector<16xf32>
    %6 = vector.multi_reduction <add>, %5, %cst_5 [1] : vector<16x128xf32> to vector<16xf32>
    %7 = vector.shape_cast %6 : vector<16xf32> to vector<16x1xf32>
    %cst_6 = arith.constant 1.280000e+02 : f32
    %8 = vector.broadcast %cst_6 : f32 to vector<16x1xf32>
    %9 = arith.divf %7, %8 : vector<16x1xf32>
    %10 = vector.broadcast %9 : vector<16x1xf32> to vector<16x128xf32>
    %11 = arith.subf %5, %10 : vector<16x128xf32>
    %12 = arith.mulf %11, %11 : vector<16x128xf32>
    %cst_7 = arith.constant dense<0.000000e+00> : vector<16xf32>
    %13 = vector.multi_reduction <add>, %12, %cst_7 [1] : vector<16x128xf32> to vector<16xf32>
    %14 = vector.shape_cast %13 : vector<16xf32> to vector<16x1xf32>
    %cst_8 = arith.constant 1.280000e+02 : f32
    %15 = vector.broadcast %cst_8 : f32 to vector<16x1xf32>
    %16 = arith.divf %14, %15 : vector<16x1xf32>
    %17 = vector.broadcast %9 : vector<16x1xf32> to vector<16x128xf32>
    %18 = arith.subf %5, %17 : vector<16x128xf32>
    %cst_9 = arith.constant 9.99999974E-6 : f32
    %19 = vector.broadcast %cst_9 : f32 to vector<16x1xf32>
    %20 = arith.addf %16, %19 : vector<16x1xf32>
    %21 = math.rsqrt %20 : vector<16x1xf32>
    %22 = vector.broadcast %21 : vector<16x1xf32> to vector<16x128xf32>
    %23 = arith.mulf %18, %22 : vector<16x128xf32>
    %c0_10 = arith.constant 0 : index
    %c0_11 = arith.constant 0 : index
    %24 = vector.load %arg4[%c0_10, %c0_11] : memref<1x128xf32, #tpu.memory_space<vmem>>, vector<1x128xf32>
    %25 = vector.broadcast %24 : vector<1x128xf32> to vector<16x128xf32>
    %26 = arith.mulf %23, %25 : vector<16x128xf32>
    %c0_12 = arith.constant 0 : index
    %c0_13 = arith.constant 0 : index
    %27 = vector.load %arg5[%c0_12, %c0_13] : memref<1x128xf32, #tpu.memory_space<vmem>>, vector<1x128xf32>
    %28 = vector.broadcast %27 : vector<1x128xf32> to vector<16x128xf32>
    %29 = arith.addf %26, %28 : vector<16x128xf32>
    %30 = arith.truncf %29 : vector<16x128xf32> to vector<16x128xbf16>
    %c0_14 = arith.constant 0 : index
    %c0_15 = arith.constant 0 : index
    %31 = vector.load %arg6[%c0_14, %c0_15] : memref<128x1024xbf16, #tpu.memory_space<vmem>>, vector<128x1024xbf16>
    %cst_16 = arith.constant dense<0.000000e+00> : vector<16x1024xf32>
    %32 = tpu.matmul %30, %31, %cst_16 {dimension_numbers = #tpu.dot_dimension_numbers<[1], [0], [0], [1], [0, 0, 1, 1], [], []>} : vector<16x128xbf16>, vector<128x1024xbf16>, vector<16x1024xf32> -> vector<16x1024xf32>
    %c0_17 = arith.constant 0 : index
    %c0_18 = arith.constant 0 : index
    %33 = vector.load %arg7[%c0_17, %c0_18] : memref<1x1024xf32, #tpu.memory_space<vmem>>, vector<1x1024xf32>
    %34 = vector.broadcast %33 : vector<1x1024xf32> to vector<16x1024xf32>
    %35 = arith.addf %32, %34 : vector<16x1024xf32>
    %36 = math.cos %35 : vector<16x1024xf32>
    %37 = arith.truncf %36 : vector<16x1024xf32> to vector<16x1024xbf16>
    %c0_19 = arith.constant 0 : index
    %c0_20 = arith.constant 0 : index
    %38 = vector.load %arg11[%c0_19, %c0_20] : memref<16x1024xbf16, #tpu.memory_space<vmem>>, vector<16x1024xbf16>
    tpu.vector_store %arg11[%c0_19, %c0_20], %37 {strides = array<i32>} : memref<16x1024xbf16, #tpu.memory_space<vmem>>, vector<16x1024xbf16>,
    %c0_21 = arith.constant 0 : index
    %c0_22 = arith.constant 0 : index
    %39 = vector.load %arg8[%c0_21, %c0_22] : memref<1024x128xbf16, #tpu.memory_space<vmem>>, vector<1024x128xbf16>
    %cst_23 = arith.constant dense<0.000000e+00> : vector<16x128xf32>
    %40 = tpu.matmul %37, %39, %cst_23 {dimension_numbers = #tpu.dot_dimension_numbers<[1], [0], [0], [1], [0, 0, 1, 1], [], []>} : vector<16x1024xbf16>, vector<1024x128xbf16>, vector<16x128xf32> -> vector<16x128xf32>
    %c0_24 = arith.constant 0 : index
    %c0_25 = arith.constant 0 : index
    %41 = vector.load %arg9[%c0_24, %c0_25] : memref<1x128xf32, #tpu.memory_space<vmem>>, vector<1x128xf32>
    %42 = vector.broadcast %41 : vector<1x128xf32> to vector<16x128xf32>
    %43 = arith.addf %40, %42 : vector<16x128xf32>
    %c0_26 = arith.constant 0 : index
    %c0_27 = arith.constant 0 : index
    %44 = vector.load %arg10[%c0_26, %c0_27] : memref<16x128xf32, #tpu.memory_space<vmem>>, vector<16x128xf32>
    tpu.vector_store %arg10[%c0_26, %c0_27], %43 {strides = array<i32>} : memref<16x128xf32, #tpu.memory_space<vmem>>, vector<16x128xf32>,
    return
  }
  func.func @transform_0(%arg0: i32) -> (i32, i32) {
    %c0_i32 = arith.constant 0 : i32
    %c0_i32_0 = arith.constant 0 : i32
    return %arg0, %c0_i32 : i32, i32
  }
  func.func @transform_1(%arg0: i32) -> (i32, i32) {
    %c0_i32 = arith.constant 0 : i32
    %c0_i32_0 = arith.constant 0 : i32
    %c0_i32_1 = arith.constant 0 : i32
    return %c0_i32, %c0_i32_0 : i32, i32
  }
  func.func @transform_2(%arg0: i32) -> (i32, i32) {
    %c0_i32 = arith.constant 0 : i32
    %c0_i32_0 = arith.constant 0 : i32
    %c0_i32_1 = arith.constant 0 : i32
    return %c0_i32, %c0_i32_0 : i32, i32
  }
  func.func @transform_3(%arg0: i32) -> (i32, i32) {
    %c0_i32 = arith.constant 0 : i32
    %c0_i32_0 = arith.constant 0 : i32
    %c0_i32_1 = arith.constant 0 : i32
    return %c0_i32, %c0_i32_0 : i32, i32
  }
  func.func @transform_4(%arg0: i32) -> (i32, i32) {
    %c0_i32 = arith.constant 0 : i32
    %c0_i32_0 = arith.constant 0 : i32
    %c0_i32_1 = arith.constant 0 : i32
    return %c0_i32, %c0_i32_0 : i32, i32
  }
  func.func @transform_5(%arg0: i32) -> (i32, i32) {
    %c0_i32 = arith.constant 0 : i32
    %c0_i32_0 = arith.constant 0 : i32
    %c0_i32_1 = arith.constant 0 : i32
    return %c0_i32, %c0_i32_0 : i32, i32
  }
  func.func @transform_6(%arg0: i32) -> (i32, i32) {
    %c0_i32 = arith.constant 0 : i32
    %c0_i32_0 = arith.constant 0 : i32
    %c0_i32_1 = arith.constant 0 : i32
    return %c0_i32, %c0_i32_0 : i32, i32
  }
  func.func @transform_7(%arg0: i32) -> (i32, i32) {
    %c0_i32 = arith.constant 0 : i32
    %c0_i32_0 = arith.constant 0 : i32
    %c0_i32_1 = arith.constant 0 : i32
    return %c0_i32, %c0_i32_0 : i32, i32
  }
  func.func @transform_8(%arg0: i32) -> (i32, i32) {
    %c0_i32 = arith.constant 0 : i32
    %c0_i32_0 = arith.constant 0 : i32
    %c0_i32_1 = arith.constant 0 : i32
    return %c0_i32, %c0_i32_0 : i32, i32
  }
  func.func @transform_9(%arg0: i32) -> (i32, i32) {
    %c0_i32 = arith.constant 0 : i32
    %c0_i32_0 = arith.constant 0 : i32
    return %arg0, %c0_i32 : i32, i32
  }
  func.func @transform_10(%arg0: i32) -> (i32, i32) {
    %c0_i32 = arith.constant 0 : i32
    %c0_i32_0 = arith.constant 0 : i32
    return %arg0, %c0_i32 : i32, i32
  }
}

</mosaic_0001>

<llo_original>
// kernel: tpu_custom_call.1
$region0: #{tpu_custom_call.1}
  #allocation0 [shape = 'u32[]', space=smem, size = 0x4, offset = 0x4, fixed_abs, tag = 'smem constant byte address 0x4 - core index']
  #allocation1 [shape = 'u32[72,128]{1,0:T(1,128)}', space=vmem, size = 0x9000, scoped, tag = 'internal scratch']
  %s0 = inlined_call_operand.hbm [shape: bf16[32,32], index: 0, kind: input, shape index: {}]
  %s1 = inlined_call_operand.hbm [shape: bf16[32,128], index: 1, kind: input, shape index: {}]
  %s2 = inlined_call_operand.vmem [shape: f32[1,128], index: 2, kind: input, shape index: {}]
  %s3 = inlined_call_operand.vmem [shape: f32[1,128], index: 3, kind: input, shape index: {}]
  %s4 = inlined_call_operand.vmem [shape: f32[1,128], index: 4, kind: input, shape index: {}]
  %s5 = inlined_call_operand.hbm [shape: bf16[128,1024], index: 5, kind: input, shape index: {}]
  %s6 = inlined_call_operand.hbm [shape: f32[1,1024], index: 6, kind: input, shape index: {}]
  %s7 = inlined_call_operand.hbm [shape: bf16[1024,128], index: 7, kind: input, shape index: {}]
  %s8 = inlined_call_operand.vmem [shape: f32[1,128], index: 8, kind: input, shape index: {}]
  %s9 = inlined_call_operand.hbm [shape: f32[32,128], index: 9, kind: output, shape index: {0}]
  %s10 = inlined_call_operand.hbm [shape: bf16[32,1024], index: 10, kind: output, shape index: {1}]
  %11 = xla_tuple %s9, %s10
  %s12 = sld [smem:[#allocation0]]
  $region97: #{tpu_custom_call.1} parent=0
    _
  %s14 = ssub.s32 1, %s12
  %s15 = scalar_select 0, %s14, %s12
  $region1: #{tpu_custom_call.1} parent=0
    #allocation2 [shape = 'u8[8192]{0}', space=vmem, size = 0x2000, scoped, tag = 'input window, operand 0']
    #allocation3 [shape = 's32[2]{0}', space=sflag, size = 0x8, scoped, tag = 'scoped memory for tpu_custom_call.1']
    #allocation4 [shape = 's32[2]{0}', space=sflag, size = 0x8, scoped, tag = 'scoped memory for tpu_custom_call.1']
    #allocation5 [shape = 'u8[8192]{0}', space=vmem, size = 0x2000, scoped, tag = 'input window, operand 1, single buffered']
    #allocation6 [shape = 's32[1]{0}', space=sflag, size = 0x4, scoped, tag = 'scoped memory for tpu_custom_call.1']
    #allocation7 [shape = 'u8[262144]{0}', space=vmem, size = 0x40000, scoped, tag = 'input window, operand 5, single buffered']
    #allocation8 [shape = 'u8[4096]{0}', space=vmem, size = 0x1000, scoped, tag = 'input window, operand 6, single buffered']
    #allocation9 [shape = 's32[1]{0}', space=sflag, size = 0x4, scoped, tag = 'scoped memory for tpu_custom_call.1']
    #allocation10 [shape = 'u8[262144]{0}', space=vmem, size = 0x40000, scoped, tag = 'input window, operand 7, single buffered']
    #allocation11 [shape = 'u8[16384]{0}', space=vmem, size = 0x4000, scoped, tag = 'output window, operand 0']
    #allocation12 [shape = 'u8[65536]{0}', space=vmem, size = 0x10000, scoped, tag = 'output window, operand 1']
    #allocation13 [shape = 's32[2]{0}', space=sflag, size = 0x8, scoped, tag = 'scoped memory for tpu_custom_call.1']
    %16 = vsyncpa [#allocation3], 0
    %s17 = scalar_lea.sflag [#allocation3], 1
    %18 = vsyncpa %s17, 0
    %19 = vsyncpa [#allocation6], 0
    %20 = vsyncpa [#allocation9], 0
    %21 = vsyncpa [#allocation4], 0
    %s22 = scalar_lea.sflag [#allocation4], 1
    %23 = vsyncpa %s22, 0
    %24 = vsyncpa [#allocation13], 0
    %s25 = scalar_lea.sflag [#allocation13], 1
    %26 = vsyncpa %s25, 0
    loop: start=0, step=1, limit=4
    $region2: #{tpu_custom_call.1} parent=1 // loop_pre_header
      _
    $region3: #{tpu_custom_call.1} parent=1 // loop_header
      %s28 = sphi 0, %s32
      %p29 = scmp.ge.s32.totalorder %s28, 4
      %s38 = sphi 0, %s40
      %s41 = sphi 0, %s38
      %s42 = sphi 0, %s41
      %s58 = sphi 0, %s42
      %s62 = sphi 0, %s62
      %s64 = sphi 0, %s62
      %s65 = sphi 0, %s64
      %s79 = sphi 0, %s65
      %s83 = sphi 0, %s83
      %s85 = sphi 0, %s83
      %s86 = sphi 0, %s85
      %s100 = sphi 0, %s86
      %s104 = sphi 0, %s104
      %s106 = sphi 0, %s104
      %s107 = sphi 0, %s106
      %s121 = sphi 0, %s107
      %s125 = sphi 0, %s125
      %s127 = sphi 0, %s125
      %s128 = sphi 0, %s127
      %s142 = sphi 0, %s128
      %s146 = sphi 0, %s146
      %s148 = sphi 0, %s146
      %s149 = sphi 0, %s148
      %s163 = sphi 0, %s149
      %s167 = sphi 0, %s167
      %s169 = sphi 0, %s167
      %s170 = sphi 0, %s169
      %s184 = sphi 0, %s170
      %s188 = sphi 0, %s188
      %s190 = sphi 0, %s188
      %s191 = sphi 0, %s190
      %s205 = sphi 0, %s191
      %s209 = sphi 0, %s209
      %s211 = sphi 0, %s209
      %s212 = sphi 0, %s211
      %s226 = sphi 0, %s212
      %s232 = sphi 0, %s234
      %s235 = sphi 0, %s232
      %s236 = sphi 0, %s235
      %s252 = sphi 0, %s236
      %s258 = sphi 0, %s260
      %s261 = sphi 0, %s258
      %s262 = sphi 0, %s261
      %s278 = sphi 0, %s262
    $region4: #{tpu_custom_call.1} parent=1 // loop_header_branch
      %31 = sbr.rel (%p29) target = $region8
    $region5: #{tpu_custom_call.1} parent=1 // loop_body
      %s33 = ssub.s32 %s28, 1
      %s34 = ssub.s32 %s28, 2
      %s35 = sadd.s32 %s28, 1
      %s36 = ssub.s32 %s28, %s35
      %p37 = scmp.eq.s32.totalorder %s36, 0
      %s39 = sadd.s32 %s38, 1
      %s40 = scalar_select %p37, %s38, %s39
      %p43 = pneg %p37
      %p44 = scmp.eq.s32.totalorder %s28, 1
      %p45 = por %p43, %p44
      %p46 = scmp.ne.s32.totalorder %s38, %s41
      %p47 = scmp.eq.s32.totalorder %s28, 0
      %p48 = por %p46, %p47
      %p49 = scmp.ne.s32.totalorder %s38, %s41
      %p50 = scmp.eq.s32.totalorder %s33, 1
      %p51 = por %p49, %p50
      %p52 = scmp.ne.s32.totalorder %s41, %s42
      %p53 = scmp.eq.s32.totalorder %s33, 0
      %p54 = por %p52, %p53
      %p55 = scmp.ne.s32.totalorder %s41, %s42
      %p56 = scmp.eq.s32.totalorder %s34, 1
      %p57 = por %p55, %p56
      %p59 = scmp.ne.s32.totalorder %s42, %s58
      %p60 = scmp.eq.s32.totalorder %s34, 0
      %p61 = por %p59, %p60
      %s63 = sadd.s32 %s62, 1
      %p66 = scmp.eq.s32.totalorder %s28, 1
      %p67 = scmp.ne.s32.totalorder %s62, %s64
      %p68 = scmp.eq.s32.totalorder %s28, 0
      %p69 = por %p67, %p68
      %p70 = scmp.ne.s32.totalorder %s62, %s64
      %p71 = scmp.eq.s32.totalorder %s33, 1
      %p72 = por %p70, %p71
      %p73 = scmp.ne.s32.totalorder %s64, %s65
      %p74 = scmp.eq.s32.totalorder %s33, 0
      %p75 = por %p73, %p74
      %p76 = scmp.ne.s32.totalorder %s64, %s65
      %p77 = scmp.eq.s32.totalorder %s34, 1
      %p78 = por %p76, %p77
      %p80 = scmp.ne.s32.totalorder %s65, %s79
      %p81 = scmp.eq.s32.totalorder %s34, 0
      %p82 = por %p80, %p81
      %s84 = sadd.s32 %s83, 1
      %p87 = scmp.eq.s32.totalorder %s28, 1
      %p88 = scmp.ne.s32.totalorder %s83, %s85
      %p89 = scmp.eq.s32.totalorder %s28, 0
      %p90 = por %p88, %p89
      %p91 = scmp.ne.s32.totalorder %s83, %s85
      %p92 = scmp.eq.s32.totalorder %s33, 1
      %p93 = por %p91, %p92
      %p94 = scmp.ne.s32.totalorder %s85, %s86
      %p95 = scmp.eq.s32.totalorder %s33, 0
      %p96 = por %p94, %p95
      %p97 = scmp.ne.s32.totalorder %s85, %s86
      %p98 = scmp.eq.s32.totalorder %s34, 1
      %p99 = por %p97, %p98
      %p101 = scmp.ne.s32.totalorder %s86, %s100
      %p102 = scmp.eq.s32.totalorder %s34, 0
      %p103 = por %p101, %p102
      %s105 = sadd.s32 %s104, 1
      %p108 = scmp.eq.s32.totalorder %s28, 1
      %p109 = scmp.ne.s32.totalorder %s104, %s106
      %p110 = scmp.eq.s32.totalorder %s28, 0
      %p111 = por %p109, %p110
      %p112 = scmp.ne.s32.totalorder %s104, %s106
      %p113 = scmp.eq.s32.totalorder %s33, 1
      %p114 = por %p112, %p113
      %p115 = scmp.ne.s32.totalorder %s106, %s107
      %p116 = scmp.eq.s32.totalorder %s33, 0
      %p117 = por %p115, %p116
      %p118 = scmp.ne.s32.totalorder %s106, %s107
      %p119 = scmp.eq.s32.totalorder %s34, 1
      %p120 = por %p118, %p119
      %p122 = scmp.ne.s32.totalorder %s107, %s121
      %p123 = scmp.eq.s32.totalorder %s34, 0
      %p124 = por %p122, %p123
      %s126 = sadd.s32 %s125, 1
      %p129 = scmp.eq.s32.totalorder %s28, 1
      %p130 = scmp.ne.s32.totalorder %s125, %s127
      %p131 = scmp.eq.s32.totalorder %s28, 0
      %p132 = por %p130, %p131
      %p133 = scmp.ne.s32.totalorder %s125, %s127
      %p134 = scmp.eq.s32.totalorder %s33, 1
      %p135 = por %p133, %p134
      %p136 = scmp.ne.s32.totalorder %s127, %s128
      %p137 = scmp.eq.s32.totalorder %s33, 0
      %p138 = por %p136, %p137
      %p139 = scmp.ne.s32.totalorder %s127, %s128
      %p140 = scmp.eq.s32.totalorder %s34, 1
      %p141 = por %p139, %p140
      %p143 = scmp.ne.s32.totalorder %s128, %s142
      %p144 = scmp.eq.s32.totalorder %s34, 0
      %p145 = por %p143, %p144
      %s147 = sadd.s32 %s146, 1
      %p150 = scmp.eq.s32.totalorder %s28, 1
      %p151 = scmp.ne.s32.totalorder %s146, %s148
      %p152 = scmp.eq.s32.totalorder %s28, 0
      %p153 = por %p151, %p152
      %p154 = scmp.ne.s32.totalorder %s146, %s148
      %p155 = scmp.eq.s32.totalorder %s33, 1
      %p156 = por %p154, %p155
      %p157 = scmp.ne.s32.totalorder %s148, %s149
      %p158 = scmp.eq.s32.totalorder %s33, 0
      %p159 = por %p157, %p158
      %p160 = scmp.ne.s32.totalorder %s148, %s149
      %p161 = scmp.eq.s32.totalorder %s34, 1
      %p162 = por %p160, %p161
      %p164 = scmp.ne.s32.totalorder %s149, %s163
      %p165 = scmp.eq.s32.totalorder %s34, 0
      %p166 = por %p164, %p165
      %s168 = sadd.s32 %s167, 1
      %p171 = scmp.eq.s32.totalorder %s28, 1
      %p172 = scmp.ne.s32.totalorder %s167, %s169
      %p173 = scmp.eq.s32.totalorder %s28, 0
      %p174 = por %p172, %p173
      %p175 = scmp.ne.s32.totalorder %s167, %s169
      %p176 = scmp.eq.s32.totalorder %s33, 1
      %p177 = por %p175, %p176
      %p178 = scmp.ne.s32.totalorder %s169, %s170
      %p179 = scmp.eq.s32.totalorder %s33, 0
      %p180 = por %p178, %p179
      %p181 = scmp.ne.s32.totalorder %s169, %s170
      %p182 = scmp.eq.s32.totalorder %s34, 1
      %p183 = por %p181, %p182
      %p185 = scmp.ne.s32.totalorder %s170, %s184
      %p186 = scmp.eq.s32.totalorder %s34, 0
      %p187 = por %p185, %p186
      %s189 = sadd.s32 %s188, 1
      %p192 = scmp.eq.s32.totalorder %s28, 1
      %p193 = scmp.ne.s32.totalorder %s188, %s190
      %p194 = scmp.eq.s32.totalorder %s28, 0
      %p195 = por %p193, %p194
      %p196 = scmp.ne.s32.totalorder %s188, %s190
      %p197 = scmp.eq.s32.totalorder %s33, 1
      %p198 = por %p196, %p197
      %p199 = scmp.ne.s32.totalorder %s190, %s191
      %p200 = scmp.eq.s32.totalorder %s33, 0
      %p201 = por %p199, %p200
      %p202 = scmp.ne.s32.totalorder %s190, %s191
      %p203 = scmp.eq.s32.totalorder %s34, 1
      %p204 = por %p202, %p203
      %p206 = scmp.ne.s32.totalorder %s191, %s205
      %p207 = scmp.eq.s32.totalorder %s34, 0
      %p208 = por %p206, %p207
      %s210 = sadd.s32 %s209, 1
      %p213 = scmp.eq.s32.totalorder %s28, 1
      %p214 = scmp.ne.s32.totalorder %s209, %s211
      %p215 = scmp.eq.s32.totalorder %s28, 0
      %p216 = por %p214, %p215
      %p217 = scmp.ne.s32.totalorder %s209, %s211
      %p218 = scmp.eq.s32.totalorder %s33, 1
      %p219 = por %p217, %p218
      %p220 = scmp.ne.s32.totalorder %s211, %s212
      %p221 = scmp.eq.s32.totalorder %s33, 0
      %p222 = por %p220, %p221
      %p223 = scmp.ne.s32.totalorder %s211, %s212
      %p224 = scmp.eq.s32.totalorder %s34, 1
      %p225 = por %p223, %p224
      %p227 = scmp.ne.s32.totalorder %s212, %s226
      %p228 = scmp.eq.s32.totalorder %s34, 0
      %p229 = por %p227, %p228
      %s230 = ssub.s32 %s28, %s35
      %p231 = scmp.eq.s32.totalorder %s230, 0
      %s233 = sadd.s32 %s232, 1
      %s234 = scalar_select %p231, %s232, %s233
      %p237 = pneg %p231
      %p238 = scmp.eq.s32.totalorder %s28, 1
      %p239 = por %p237, %p238
      %p240 = scmp.ne.s32.totalorder %s232, %s235
      %p241 = scmp.eq.s32.totalorder %s28, 0
      %p242 = por %p240, %p241
      %p243 = scmp.ne.s32.totalorder %s232, %s235
      %p244 = scmp.eq.s32.totalorder %s33, 1
      %p245 = por %p243, %p244
      %p246 = scmp.ne.s32.totalorder %s235, %s236
      %p247 = scmp.eq.s32.totalorder %s33, 0
      %p248 = por %p246, %p247
      %p249 = scmp.ne.s32.totalorder %s235, %s236
      %p250 = scmp.eq.s32.totalorder %s34, 1
      %p251 = por %p249, %p250
      %p253 = scmp.ne.s32.totalorder %s236, %s252
      %p254 = scmp.eq.s32.totalorder %s34, 0
      %p255 = por %p253, %p254
      %s256 = ssub.s32 %s28, %s35
      %p257 = scmp.eq.s32.totalorder %s256, 0
      %s259 = sadd.s32 %s258, 1
      %s260 = scalar_select %p257, %s258, %s259
      %p263 = pneg %p257
      %p264 = scmp.eq.s32.totalorder %s28, 1
      %p265 = por %p263, %p264
      %p266 = scmp.ne.s32.totalorder %s258, %s261
      %p267 = scmp.eq.s32.totalorder %s28, 0
      %p268 = por %p266, %p267
      %p269 = scmp.ne.s32.totalorder %s258, %s261
      %p270 = scmp.eq.s32.totalorder %s33, 1
      %p271 = por %p269, %p270
      %p272 = scmp.ne.s32.totalorder %s261, %s262
      %p273 = scmp.eq.s32.totalorder %s33, 0
      %p274 = por %p272, %p273
      %p275 = scmp.ne.s32.totalorder %s261, %s262
      %p276 = scmp.eq.s32.totalorder %s34, 1
      %p277 = por %p275, %p276
      %p279 = scmp.ne.s32.totalorder %s262, %s278
      %p280 = scmp.eq.s32.totalorder %s34, 0
      %p281 = por %p279, %p280
      %p282 = scmp.le.s32.totalorder 1, %s28
      %p283 = scmp.lt.s32.totalorder %s28, 3
      %p284 = pnand %p282, %p283
      %p285 = pneg %p284
      // Predicated region
      $region9: #{tpu_custom_call.1} parent=5 // pred_check
        _
      $region10: #{tpu_custom_call.1} parent=5 // pred_check_branch
        %287 = sbr.rel (%p284) target = $region12
      $region11: #{tpu_custom_call.1} parent=5 // pred_region
        %s288 = ssub.s32 %s28, 1
        // Predicated region
        $region13: #{tpu_custom_call.1} parent=11 // pred_check
          %p289 = pneg %p75
        $region14: #{tpu_custom_call.1} parent=11 // pred_check_branch
          %291 = sbr.rel (%p289) target = $region16
        $region15: #{tpu_custom_call.1} parent=11 // pred_region
          %293 = vsyncadd [#allocation6], 0
          %s294 = sshll.u32 %s1, 4
          %s295 = int_to_ptr.hbm [resolvable:$true] %s294
          %s296 = sshll.u32 [#allocation5], 4
          %s297 = int_to_ptr.vmem [resolvable:$true] %s296
          %302 = dma.hbm_to_vmem [thread:$0]  %s295, 256, %s297, [#allocation6], 64, 64, 4
        $region16: #{tpu_custom_call.1} parent=11 // pred_fallthru
          _
        // Predicated region
        $region17: #{tpu_custom_call.1} parent=11 // pred_check
          %p303 = pneg %p96
        $region18: #{tpu_custom_call.1} parent=11 // pred_check_branch
          %305 = sbr.rel (%p303) target = $region20
        $region19: #{tpu_custom_call.1} parent=11 // pred_region
          _
        $region20: #{tpu_custom_call.1} parent=11 // pred_fallthru
          _
        // Predicated region
        $region21: #{tpu_custom_call.1} parent=11 // pred_check
          %p306 = pneg %p117
        $region22: #{tpu_custom_call.1} parent=11 // pred_check_branch
          %308 = sbr.rel (%p306) target = $region24
        $region23: #{tpu_custom_call.1} parent=11 // pred_region
          _
        $region24: #{tpu_custom_call.1} parent=11 // pred_fallthru
          _
        // Predicated region
        $region25: #{tpu_custom_call.1} parent=11 // pred_check
          %p309 = pneg %p138
        $region26: #{tpu_custom_call.1} parent=11 // pred_check_branch
          %311 = sbr.rel (%p309) target = $region28
        $region27: #{tpu_custom_call.1} parent=11 // pred_region
          _
        $region28: #{tpu_custom_call.1} parent=11 // pred_fallthru
          _
        // Predicated region
        $region29: #{tpu_custom_call.1} parent=11 // pred_check
          %p312 = pneg %p159
        $region30: #{tpu_custom_call.1} parent=11 // pred_check_branch
          %314 = sbr.rel (%p312) target = $region32
        $region31: #{tpu_custom_call.1} parent=11 // pred_region
          %316 = vsyncadd [#allocation6], 0
          %s317 = sshll.u32 %s5, 4
          %s318 = int_to_ptr.hbm [resolvable:$true] %s317
          %s319 = sshll.u32 [#allocation7], 4
          %s320 = int_to_ptr.vmem [resolvable:$true] %s319
          %325 = dma.hbm_to_vmem [thread:$0]  %s318, 8192, %s320, [#allocation6], 512, 512, 32
        $region32: #{tpu_custom_call.1} parent=11 // pred_fallthru
          _
        // Predicated region
        $region33: #{tpu_custom_call.1} parent=11 // pred_check
          %p326 = pneg %p180
        $region34: #{tpu_custom_call.1} parent=11 // pred_check_branch
          %328 = sbr.rel (%p326) target = $region36
        $region35: #{tpu_custom_call.1} parent=11 // pred_region
          %330 = vsyncadd [#allocation9], 0
          %s332 = sshll.u32 %s6, 4
          %s333 = int_to_ptr.hbm [resolvable:$true] %s332
          %s334 = sshll.u32 [#allocation8], 4
          %s335 = int_to_ptr.vmem [resolvable:$true] %s334
          %337 = dma.hbm_to_vmem [thread:$0]  %s333, 128, %s335, [#allocation9]
        $region36: #{tpu_custom_call.1} parent=11 // pred_fallthru
          _
        // Predicated region
        $region37: #{tpu_custom_call.1} parent=11 // pred_check
          %p338 = pneg %p201
        $region38: #{tpu_custom_call.1} parent=11 // pred_check_branch
          %340 = sbr.rel (%p338) target = $region40
        $region39: #{tpu_custom_call.1} parent=11 // pred_region
          %342 = vsyncadd [#allocation9], 0
          %s343 = sshll.u32 %s7, 4
          %s344 = int_to_ptr.hbm [resolvable:$true] %s343
          %s345 = sshll.u32 [#allocation10], 4
          %s346 = int_to_ptr.vmem [resolvable:$true] %s345
          %351 = dma.hbm_to_vmem [thread:$0]  %s344, 8192, %s346, [#allocation9], 64, 64, 4
        $region40: #{tpu_custom_call.1} parent=11 // pred_fallthru
          _
        // Predicated region
        $region41: #{tpu_custom_call.1} parent=11 // pred_check
          %p352 = pneg %p222
        $region42: #{tpu_custom_call.1} parent=11 // pred_check_branch
          %354 = sbr.rel (%p352) target = $region44
        $region43: #{tpu_custom_call.1} parent=11 // pred_region
          _
        $region44: #{tpu_custom_call.1} parent=11 // pred_fallthru
          _
      $region12: #{tpu_custom_call.1} parent=5 // pred_fallthru
        _
      %p355 = scmp.lt.s32.totalorder %s28, 2
      // Predicated region
      $region45: #{tpu_custom_call.1} parent=5 // pred_check
        %p356 = pneg %p355
      $region46: #{tpu_custom_call.1} parent=5 // pred_check_branch
        %358 = sbr.rel (%p356) target = $region48
      $region47: #{tpu_custom_call.1} parent=5 // pred_region
        // Predicated region
        $region49: #{tpu_custom_call.1} parent=47 // pred_check
          %p359 = pneg %p48
        $region50: #{tpu_custom_call.1} parent=47 // pred_check_branch
          %361 = sbr.rel (%p359) target = $region52
        $region51: #{tpu_custom_call.1} parent=47 // pred_region
          %s362 = sand.u32 %s38, 1
          %s363 = scalar_lea.sflag [#allocation3], %s362
          %s364 = sand.u32 %s38, 1
          %s365 = smul.addr %s364, 8
          %s366 = scalar_lea.vmem [#allocation2], %s365
          %s367 = smul.u32 2, %s28
          %369 = vsyncadd %s363, 0
          %s370 = smul.addr %s367, 4
          %s371 = scalar_lea.hbm %s0, %s370
          %s372 = sshll.u32 %s371, 4
          %s373 = int_to_ptr.hbm [resolvable:$true] %s372
          %s374 = sshll.u32 %s366, 4
          %s375 = int_to_ptr.vmem [resolvable:$true] %s374
          %380 = dma.hbm_to_vmem [thread:$0]  %s373, 128, %s375, %s363, 64, 64, 4
        $region52: #{tpu_custom_call.1} parent=47 // pred_fallthru
          _
      $region48: #{tpu_custom_call.1} parent=5 // pred_fallthru
        _
      %p381 = scmp.le.s32.totalorder 1, %s28
      %p382 = scmp.lt.s32.totalorder %s28, 3
      %p383 = pnand %p381, %p382
      %p384 = pneg %p383
      // Predicated region
      $region53: #{tpu_custom_call.1} parent=5 // pred_check
        _
      $region54: #{tpu_custom_call.1} parent=5 // pred_check_branch
        %386 = sbr.rel (%p383) target = $region56
      $region55: #{tpu_custom_call.1} parent=5 // pred_region
        %s387 = ssub.s32 %s28, 1
        %s388 = sand.u32 %s41, 1
        %s389 = scalar_lea.sflag [#allocation3], %s388
        %s390 = sand.u32 %s41, 1
        %s391 = smul.addr %s390, 8
        %s392 = scalar_lea.vmem [#allocation2], %s391
        // Predicated region
        $region57: #{tpu_custom_call.1} parent=55 // pred_check
          %p393 = pneg %p54
        $region58: #{tpu_custom_call.1} parent=55 // pred_check_branch
          %395 = sbr.rel (%p393) target = $region60
        $region59: #{tpu_custom_call.1} parent=55 // pred_region
          %397 = dma.done %s389, 128
        $region60: #{tpu_custom_call.1} parent=55 // pred_fallthru
          _
        // Predicated region
        $region61: #{tpu_custom_call.1} parent=55 // pred_check
          %p398 = pneg %p75
        $region62: #{tpu_custom_call.1} parent=55 // pred_check_branch
          %400 = sbr.rel (%p398) target = $region64
        $region63: #{tpu_custom_call.1} parent=55 // pred_region
          %402 = dma.done [#allocation6], 256
        $region64: #{tpu_custom_call.1} parent=55 // pred_fallthru
          _
        // Predicated region
        $region65: #{tpu_custom_call.1} parent=55 // pred_check
          %p403 = pneg %p159
        $region66: #{tpu_custom_call.1} parent=55 // pred_check_branch
          %405 = sbr.rel (%p403) target = $region68
        $region67: #{tpu_custom_call.1} parent=55 // pred_region
          %407 = dma.done [#allocation6], 8192
        $region68: #{tpu_custom_call.1} parent=55 // pred_fallthru
          _
        // Predicated region
        $region69: #{tpu_custom_call.1} parent=55 // pred_check
          %p408 = pneg %p180
        $region70: #{tpu_custom_call.1} parent=55 // pred_check_branch
          %410 = sbr.rel (%p408) target = $region72
        $region71: #{tpu_custom_call.1} parent=55 // pred_region
          %412 = dma.done [#allocation9], 128
        $region72: #{tpu_custom_call.1} parent=55 // pred_fallthru
          _
        // Predicated region
        $region73: #{tpu_custom_call.1} parent=55 // pred_check
          %p413 = pneg %p201
        $region74: #{tpu_custom_call.1} parent=55 // pred_check_branch
          %415 = sbr.rel (%p413) target = $region76
        $region75: #{tpu_custom_call.1} parent=55 // pred_region
          %417 = dma.done [#allocation9], 8192
        $region76: #{tpu_custom_call.1} parent=55 // pred_fallthru
          _
        %s418 = sand.u32 %s41, 1
        %s419 = scalar_lea.sflag [#allocation3], %s418
        %s420 = sand.u32 %s41, 1
        %s421 = smul.addr %s420, 8
        %s422 = scalar_lea.vmem [#allocation2], %s421
        %p423 = pneg %p54
        %p424 = pneg %p51
        %p425 = pneg %p75
        %p426 = pneg %p72
        %p427 = pneg %p96
        %p428 = pneg %p93
        %p429 = pneg %p117
        %p430 = pneg %p114
        %p431 = pneg %p138
        %p432 = pneg %p135
        %p433 = pneg %p159
        %p434 = pneg %p156
        %p435 = pneg %p180
        %p436 = pneg %p177
        %p437 = pneg %p201
        %p438 = pneg %p198
        %p439 = pneg %p222
        %p440 = pneg %p219
        %p441 = pneg %p248
        %p442 = pneg %p245
        %s443 = sand.u32 %s235, 1
        %s444 = scalar_lea.sflag [#allocation4], %s443
        %s445 = sand.u32 %s235, 1
        %s446 = smul.addr %s445, 16
        %s447 = scalar_lea.vmem [#allocation11], %s446
        %p448 = pneg %p274
        %p449 = pneg %p271
        %s450 = sand.u32 %s261, 1
        %s451 = scalar_lea.sflag [#allocation13], %s450
        %s452 = sand.u32 %s261, 1
        %s453 = smul.addr %s452, 64
        %s454 = scalar_lea.vmem [#allocation12], %s453
        %s455 = smul.u32 2, %s33
        %s456 = smul.u32 2, %s33
        %s457 = smul.u32 2, %s33
        %v459 = vld [vmem:[%s392] sm:$0xf]
        %v460 = vld [vmem:[%s392 + $0x4] sm:$0xf]
        %v461 = vld [vmem:[#allocation5] sm:$0xf]
        %v462 = vld [vmem:[#allocation5 + $0x4] sm:$0xf]
        %v463 = vld [vmem:[#allocation5 + $0x8] sm:$0xf]
        %v464 = vld [vmem:[#allocation5 + $0xc] sm:$0xf]
        %v465 = vld [vmem:[%s2] sm:$0x1]
        %v467 = vperm.slane %v465, 0
        %v471 = vunpack.c.l.b16 %v459
        %v472 = vunpack.c.l.b16 %v460
        %v473 = vpack.c.b16 %v472, %v471
        %v478 = vunpack.c.l.b16 %v461
        %v479 = vunpack.c.l.b16 %v462
        %v480 = vunpack.c.l.b16 %v463
        %v481 = vunpack.c.l.b16 %v464
        %v482 = vpack.c.b16 %v479, %v478
        %v483 = vpack.c.b16 %v481, %v480
        %vm486 = vcmask 261120
        %v488 = vsel %vm486, %v473, 0
        %490 = vmatpush.bf16.msra.mxu0 0
        %491 = vmatpush.bf16.msra.mxu0 0
        %492 = vmatpush.bf16.msra.mxu0 0
        %493 = vmatpush.bf16.msra.mxu0 0
        %494 = vmatpush.bf16.msra.mxu0 0
        %495 = vmatpush.bf16.msra.mxu0 0
        %496 = vmatpush.bf16.msra.mxu0 %v483
        %497 = vmatpush.bf16.msra.mxu0 %v482
        %498 = vmatmul.bf16.gmra.mxu0 %v488
        %v499 = vpop.f32.mrf.mxu0
        %v500 = vadd.f32 %v467, %v499
        %v501 = vpop.f32.mrf.mxu0
        %v502 = vadd.f32 %v467, %v501
        %503 = vdwg.mxu0
        %504 = vadd.xlane.f32.xlu0 %v500
        %v505 = vpop.xlane.xlu0 %504
        %506 = vadd.xlane.f32.xlu0 %v502
        %v507 = vpop.xlane.xlu0 %506
        %v508 = vrcp.pop 128.0
        %v509 = vmul.f32 128.0, %v508
        %v510 = vsub.f32 1.0, %v509
        %v511 = vmul.f32 %v508, %v510
        %v512 = vadd.f32 %v508, %v511
        %vm513 = vweird.f32 %v508
        %v514 = vsel %vm513, %v508, %v512
        %v515 = vmul.f32 %v505, %v514
        %v516 = vmul.f32 %v507, %v514
        %v517 = vsub.f32 %v500, %v515
        %v518 = vsub.f32 %v502, %v516
        %v519 = vmul.f32 %v517, %v517
        %v520 = vmul.f32 %v518, %v518
        %521 = vadd.xlane.f32.xlu0 %v519
        %v522 = vpop.xlane.xlu0 %521
        %523 = vadd.xlane.f32.xlu0 %v520
        %v524 = vpop.xlane.xlu0 %523
        %v525 = vmul.f32 %v522, %v514
        %v526 = vmul.f32 %v524, %v514
        %v527 = vadd.f32 %v525, 1e-05
        %v528 = vadd.f32 %v526, 1e-05
        %v529 = vrsqrt.pop %v527
        %v530 = vmul.f32 %v529, %v527
        %v531 = vmul.f32 %v530, %v529
        %v532 = vmul.f32 0.5, %v531
        %v533 = vsub.f32 1.5, %v532
        %v534 = vmul.f32 %v529, %v533
        %vm535 = vweird.f32 %v527
        %vm536 = vweird.f32 %v529
        %vm537 = vmor %vm535, %vm536
        %v538 = vsel %vm537, %v529, %v534
        %v539 = vrsqrt.pop %v528
        %v540 = vmul.f32 %v539, %v528
        %v541 = vmul.f32 %v540, %v539
        %v542 = vmul.f32 0.5, %v541
        %v543 = vsub.f32 1.5, %v542
        %v544 = vmul.f32 %v539, %v543
        %vm545 = vweird.f32 %v528
        %vm546 = vweird.f32 %v539
        %vm547 = vmor %vm545, %vm546
        %v548 = vsel %vm547, %v539, %v544
        %v549 = vmul.f32 %v517, %v538
        %v550 = vmul.f32 %v518, %v548
        %v551 = vld [vmem:[%s3] sm:$0x1]
        %v553 = vperm.slane %v551, 0
        %v555 = vmul.f32 %v549, %v553
        %v556 = vmul.f32 %v550, %v553
        %v557 = vld [vmem:[%s4] sm:$0x1]
        %v559 = vperm.slane %v557, 0
        %v561 = vadd.f32 %v555, %v559
        %v562 = vadd.f32 %v556, %v559
        %v563 = vpack.c.bf16 %v562, %v561
        %v564 = vld [vmem:[#allocation7] sm:$0xff]
        %v565 = vld [vmem:[#allocation7 + $0x8] sm:$0xff]
        %v566 = vld [vmem:[#allocation7 + $0x10] sm:$0xff]
        %v567 = vld [vmem:[#allocation7 + $0x18] sm:$0xff]
        %v568 = vld [vmem:[#allocation7 + $0x20] sm:$0xff]
        %v569 = vld [vmem:[#allocation7 + $0x28] sm:$0xff]
        %v570 = vld [vmem:[#allocation7 + $0x30] sm:$0xff]
        %v571 = vld [vmem:[#allocation7 + $0x38] sm:$0xff]
        %v572 = vld [vmem:[#allocation7 + $0x40] sm:$0xff]
        %v573 = vld [vmem:[#allocation7 + $0x48] sm:$0xff]
        %v574 = vld [vmem:[#allocation7 + $0x50] sm:$0xff]
        %v575 = vld [vmem:[#allocation7 + $0x58] sm:$0xff]
        %v576 = vld [vmem:[#allocation7 + $0x60] sm:$0xff]
        %v577 = vld [vmem:[#allocation7 + $0x68] sm:$0xff]
        %v578 = vld [vmem:[#allocation7 + $0x70] sm:$0xff]
        %v579 = vld [vmem:[#allocation7 + $0x78] sm:$0xff]
        %v580 = vld [vmem:[#allocation7 + $0x80] sm:$0xff]
        %v581 = vld [vmem:[#allocation7 + $0x88] sm:$0xff]
        %v582 = vld [vmem:[#allocation7 + $0x90] sm:$0xff]
        %v583 = vld [vmem:[#allocation7 + $0x98] sm:$0xff]
        %v584 = vld [vmem:[#allocation7 + $0xa0] sm:$0xff]
        %v585 = vld [vmem:[#allocation7 + $0xa8] sm:$0xff]
        %v586 = vld [vmem:[#allocation7 + $0xb0] sm:$0xff]
        %v587 = vld [vmem:[#allocation7 + $0xb8] sm:$0xff]
        %v588 = vld [vmem:[#allocation7 + $0xc0] sm:$0xff]
        %v589 = vld [vmem:[#allocation7 + $0xc8] sm:$0xff]
        %v590 = vld [vmem:[#allocation7 + $0xd0] sm:$0xff]
        %v591 = vld [vmem:[#allocation7 + $0xd8] sm:$0xff]
        %v592 = vld [vmem:[#allocation7 + $0xe0] sm:$0xff]
        %v593 = vld [vmem:[#allocation7 + $0xe8] sm:$0xff]
        %v594 = vld [vmem:[#allocation7 + $0xf0] sm:$0xff]
        %v595 = vld [vmem:[#allocation7 + $0xf8] sm:$0xff]
        %v596 = vld [vmem:[#allocation7 + $0x100] sm:$0xff]
        %v597 = vld [vmem:[#allocation7 + $0x108] sm:$0xff]
        %v598 = vld [vmem:[#allocation7 + $0x110] sm:$0xff]
        %v599 = vld [vmem:[#allocation7 + $0x118] sm:$0xff]
        %v600 = vld [vmem:[#allocation7 + $0x120] sm:$0xff]
        %v601 = vld [vmem:[#allocation7 + $0x128] sm:$0xff]
        %v602 = vld [vmem:[#allocation7 + $0x130] sm:$0xff]
        %v603 = vld [vmem:[#allocation7 + $0x138] sm:$0xff]
        %v604 = vld [vmem:[#allocation7 + $0x140] sm:$0xff]
        %v605 = vld [vmem:[#allocation7 + $0x148] sm:$0xff]
        %v606 = vld [vmem:[#allocation7 + $0x150] sm:$0xff]
        %v607 = vld [vmem:[#allocation7 + $0x158] sm:$0xff]
        %v608 = vld [vmem:[#allocation7 + $0x160] sm:$0xff]
        %v609 = vld [vmem:[#allocation7 + $0x168] sm:$0xff]
        %v610 = vld [vmem:[#allocation7 + $0x170] sm:$0xff]
        %v611 = vld [vmem:[#allocation7 + $0x178] sm:$0xff]
        %v612 = vld [vmem:[#allocation7 + $0x180] sm:$0xff]
        %v613 = vld [vmem:[#allocation7 + $0x188] sm:$0xff]
        %v614 = vld [vmem:[#allocation7 + $0x190] sm:$0xff]
        %v615 = vld [vmem:[#allocation7 + $0x198] sm:$0xff]
        %v616 = vld [vmem:[#allocation7 + $0x1a0] sm:$0xff]
        %v617 = vld [vmem:[#allocation7 + $0x1a8] sm:$0xff]
        %v618 = vld [vmem:[#allocation7 + $0x1b0] sm:$0xff]
        %v619 = vld [vmem:[#allocation7 + $0x1b8] sm:$0xff]
        %v620 = vld [vmem:[#allocation7 + $0x1c0] sm:$0xff]
        %v621 = vld [vmem:[#allocation7 + $0x1c8] sm:$0xff]
        %v622 = vld [vmem:[#allocation7 + $0x1d0] sm:$0xff]
        %v623 = vld [vmem:[#allocation7 + $0x1d8] sm:$0xff]
        %v624 = vld [vmem:[#allocation7 + $0x1e0] sm:$0xff]
        %v625 = vld [vmem:[#allocation7 + $0x1e8] sm:$0xff]
        %v626 = vld [vmem:[#allocation7 + $0x1f0] sm:$0xff]
        %v627 = vld [vmem:[#allocation7 + $0x1f8] sm:$0xff]
        %v628 = vld [vmem:[#allocation8] sm:$0xff]
        %v630 = vperm.slane %v628, 0
        %v631 = vperm.slane %v628, 1
        %v632 = vperm.slane %v628, 2
        %v633 = vperm.slane %v628, 3
        %v634 = vperm.slane %v628, 4
        %v635 = vperm.slane %v628, 5
        %v636 = vperm.slane %v628, 6
        %v637 = vperm.slane %v628, 7
        %v710 = vunpack.c.l.b16 %v564
        %v711 = vunpack.c.h.b16 %v564
        %v712 = vunpack.c.l.b16 %v565
        %v713 = vunpack.c.h.b16 %v565
        %v714 = vunpack.c.l.b16 %v566
        %v715 = vunpack.c.h.b16 %v566
        %v716 = vunpack.c.l.b16 %v567
        %v717 = vunpack.c.h.b16 %v567
        %v718 = vunpack.c.l.b16 %v568
        %v719 = vunpack.c.h.b16 %v568
        %v720 = vunpack.c.l.b16 %v569
        %v721 = vunpack.c.h.b16 %v569
        %v722 = vunpack.c.l.b16 %v570
        %v723 = vunpack.c.h.b16 %v570
        %v724 = vunpack.c.l.b16 %v571
        %v725 = vunpack.c.h.b16 %v571
        %v726 = vunpack.c.l.b16 %v572
        %v727 = vunpack.c.h.b16 %v572
        %v728 = vunpack.c.l.b16 %v573
        %v729 = vunpack.c.h.b16 %v573
        %v730 = vunpack.c.l.b16 %v574
        %v731 = vunpack.c.h.b16 %v574
        %v732 = vunpack.c.l.b16 %v575
        %v733 = vunpack.c.h.b16 %v575
        %v734 = vunpack.c.l.b16 %v576
        %v735 = vunpack.c.h.b16 %v576
        %v736 = vunpack.c.l.b16 %v577
        %v737 = vunpack.c.h.b16 %v577
        %v738 = vunpack.c.l.b16 %v578
        %v739 = vunpack.c.h.b16 %v578
        %v740 = vunpack.c.l.b16 %v579
        %v741 = vunpack.c.h.b16 %v579
        %v742 = vunpack.c.l.b16 %v580
        %v743 = vunpack.c.h.b16 %v580
        %v744 = vunpack.c.l.b16 %v581
        %v745 = vunpack.c.h.b16 %v581
        %v746 = vunpack.c.l.b16 %v582
        %v747 = vunpack.c.h.b16 %v582
        %v748 = vunpack.c.l.b16 %v583
        %v749 = vunpack.c.h.b16 %v583
        %v750 = vunpack.c.l.b16 %v584
        %v751 = vunpack.c.h.b16 %v584
        %v752 = vunpack.c.l.b16 %v585
        %v753 = vunpack.c.h.b16 %v585
        %v754 = vunpack.c.l.b16 %v586
        %v755 = vunpack.c.h.b16 %v586
        %v756 = vunpack.c.l.b16 %v587
        %v757 = vunpack.c.h.b16 %v587
        %v758 = vunpack.c.l.b16 %v588
        %v759 = vunpack.c.h.b16 %v588
        %v760 = vunpack.c.l.b16 %v589
        %v761 = vunpack.c.h.b16 %v589
        %v762 = vunpack.c.l.b16 %v590
        %v763 = vunpack.c.h.b16 %v590
        %v764 = vunpack.c.l.b16 %v591
        %v765 = vunpack.c.h.b16 %v591
        %v766 = vunpack.c.l.b16 %v592
        %v767 = vunpack.c.h.b16 %v592
        %v768 = vunpack.c.l.b16 %v593
        %v769 = vunpack.c.h.b16 %v593
        %v770 = vunpack.c.l.b16 %v594
        %v771 = vunpack.c.h.b16 %v594
        %v772 = vunpack.c.l.b16 %v595
        %v773 = vunpack.c.h.b16 %v595
        %v774 = vunpack.c.l.b16 %v596
        %v775 = vunpack.c.h.b16 %v596
        %v776 = vunpack.c.l.b16 %v597
        %v777 = vunpack.c.h.b16 %v597
        %v778 = vunpack.c.l.b16 %v598
        %v779 = vunpack.c.h.b16 %v598
        %v780 = vunpack.c.l.b16 %v599
        %v781 = vunpack.c.h.b16 %v599
        %v782 = vunpack.c.l.b16 %v600
        %v783 = vunpack.c.h.b16 %v600
        %v784 = vunpack.c.l.b16 %v601
        %v785 = vunpack.c.h.b16 %v601
        %v786 = vunpack.c.l.b16 %v602
        %v787 = vunpack.c.h.b16 %v602
        %v788 = vunpack.c.l.b16 %v603
        %v789 = vunpack.c.h.b16 %v603
        %v790 = vunpack.c.l.b16 %v604
        %v791 = vunpack.c.h.b16 %v604
        %v792 = vunpack.c.l.b16 %v605
        %v793 = vunpack.c.h.b16 %v605
        %v794 = vunpack.c.l.b16 %v606
        %v795 = vunpack.c.h.b16 %v606
        %v796 = vunpack.c.l.b16 %v607
        %v797 = vunpack.c.h.b16 %v607
        %v798 = vunpack.c.l.b16 %v608
        %v799 = vunpack.c.h.b16 %v608
        %v800 = vunpack.c.l.b16 %v609
        %v801 = vunpack.c.h.b16 %v609
        %v802 = vunpack.c.l.b16 %v610
        %v803 = vunpack.c.h.b16 %v610
        %v804 = vunpack.c.l.b16 %v611
        %v805 = vunpack.c.h.b16 %v611
        %v806 = vunpack.c.l.b16 %v612
        %v807 = vunpack.c.h.b16 %v612
        %v808 = vunpack.c.l.b16 %v613
        %v809 = vunpack.c.h.b16 %v613
        %v810 = vunpack.c.l.b16 %v614
        %v811 = vunpack.c.h.b16 %v614
        %v812 = vunpack.c.l.b16 %v615
        %v813 = vunpack.c.h.b16 %v615
        %v814 = vunpack.c.l.b16 %v616
        %v815 = vunpack.c.h.b16 %v616
        %v816 = vunpack.c.l.b16 %v617
        %v817 = vunpack.c.h.b16 %v617
        %v818 = vunpack.c.l.b16 %v618
        %v819 = vunpack.c.h.b16 %v618
        %v820 = vunpack.c.l.b16 %v619
        %v821 = vunpack.c.h.b16 %v619
        %v822 = vunpack.c.l.b16 %v620
        %v823 = vunpack.c.h.b16 %v620
        %v824 = vunpack.c.l.b16 %v621
        %v825 = vunpack.c.h.b16 %v621
        %v826 = vunpack.c.l.b16 %v622
        %v827 = vunpack.c.h.b16 %v622
        %v828 = vunpack.c.l.b16 %v623
        %v829 = vunpack.c.h.b16 %v623
        %v830 = vunpack.c.l.b16 %v624
        %v831 = vunpack.c.h.b16 %v624
        %v832 = vunpack.c.l.b16 %v625
        %v833 = vunpack.c.h.b16 %v625
        %v834 = vunpack.c.l.b16 %v626
        %v835 = vunpack.c.h.b16 %v626
        %v836 = vunpack.c.l.b16 %v627
        %v837 = vunpack.c.h.b16 %v627
        %v838 = vpack.c.b16 %v718, %v710
        %v839 = vpack.c.b16 %v719, %v711
        %v840 = vpack.c.b16 %v720, %v712
        %v841 = vpack.c.b16 %v721, %v713
        %v842 = vpack.c.b16 %v722, %v714
        %v843 = vpack.c.b16 %v723, %v715
        %v844 = vpack.c.b16 %v724, %v716
        %v845 = vpack.c.b16 %v725, %v717
        %v846 = vpack.c.b16 %v734, %v726
        %v847 = vpack.c.b16 %v735, %v727
        %v848 = vpack.c.b16 %v736, %v728
        %v849 = vpack.c.b16 %v737, %v729
        %v850 = vpack.c.b16 %v738, %v730
        %v851 = vpack.c.b16 %v739, %v731
        %v852 = vpack.c.b16 %v740, %v732
        %v853 = vpack.c.b16 %v741, %v733
        %v854 = vpack.c.b16 %v750, %v742
        %v855 = vpack.c.b16 %v751, %v743
        %v856 = vpack.c.b16 %v752, %v744
        %v857 = vpack.c.b16 %v753, %v745
        %v858 = vpack.c.b16 %v754, %v746
        %v859 = vpack.c.b16 %v755, %v747
        %v860 = vpack.c.b16 %v756, %v748
        %v861 = vpack.c.b16 %v757, %v749
        %v862 = vpack.c.b16 %v766, %v758
        %v863 = vpack.c.b16 %v767, %v759
        %v864 = vpack.c.b16 %v768, %v760
        %v865 = vpack.c.b16 %v769, %v761
        %v866 = vpack.c.b16 %v770, %v762
        %v867 = vpack.c.b16 %v771, %v763
        %v868 = vpack.c.b16 %v772, %v764
        %v869 = vpack.c.b16 %v773, %v765
        %v870 = vpack.c.b16 %v782, %v774
        %v871 = vpack.c.b16 %v783, %v775
        %v872 = vpack.c.b16 %v784, %v776
        %v873 = vpack.c.b16 %v785, %v777
        %v874 = vpack.c.b16 %v786, %v778
        %v875 = vpack.c.b16 %v787, %v779
        %v876 = vpack.c.b16 %v788, %v780
        %v877 = vpack.c.b16 %v789, %v781
        %v878 = vpack.c.b16 %v798, %v790
        %v879 = vpack.c.b16 %v799, %v791
        %v880 = vpack.c.b16 %v800, %v792
        %v881 = vpack.c.b16 %v801, %v793
        %v882 = vpack.c.b16 %v802, %v794
        %v883 = vpack.c.b16 %v803, %v795
        %v884 = vpack.c.b16 %v804, %v796
        %v885 = vpack.c.b16 %v805, %v797
        %v886 = vpack.c.b16 %v814, %v806
        %v887 = vpack.c.b16 %v815, %v807
        %v888 = vpack.c.b16 %v816, %v808
        %v889 = vpack.c.b16 %v817, %v809
        %v890 = vpack.c.b16 %v818, %v810
        %v891 = vpack.c.b16 %v819, %v811
        %v892 = vpack.c.b16 %v820, %v812
        %v893 = vpack.c.b16 %v821, %v813
        %v894 = vpack.c.b16 %v830, %v822
        %v895 = vpack.c.b16 %v831, %v823
        %v896 = vpack.c.b16 %v832, %v824
        %v897 = vpack.c.b16 %v833, %v825
        %v898 = vpack.c.b16 %v834, %v826
        %v899 = vpack.c.b16 %v835, %v827
        %v900 = vpack.c.b16 %v836, %v828
        %v901 = vpack.c.b16 %v837, %v829
        %966 = vmatpush.bf16.msra.mxu0 %v894
        %967 = vmatpush.bf16.msra.mxu0 %v886
        %968 = vmatpush.bf16.msra.mxu0 %v878
        %969 = vmatpush.bf16.msra.mxu0 %v870
        %970 = vmatpush.bf16.msra.mxu0 %v862
        %971 = vmatpush.bf16.msra.mxu0 %v854
        %972 = vmatpush.bf16.msra.mxu0 %v846
        %973 = vmatpush.bf16.msra.mxu0 %v838
        %974 = vmatmul.bf16.gmra.mxu0 %v563
        %v975 = vpop.f32.mrf.mxu0
        %v976 = vadd.f32 %v630, %v975
        %v977 = vpop.f32.mrf.mxu0
        %v978 = vadd.f32 %v630, %v977
        %979 = vdwg.mxu0
        %980 = vmatpush.bf16.msra.mxu0 %v895
        %981 = vmatpush.bf16.msra.mxu0 %v887
        %982 = vmatpush.bf16.msra.mxu0 %v879
        %983 = vmatpush.bf16.msra.mxu0 %v871
        %984 = vmatpush.bf16.msra.mxu0 %v863
        %985 = vmatpush.bf16.msra.mxu0 %v855
        %986 = vmatpush.bf16.msra.mxu0 %v847
        %987 = vmatpush.bf16.msra.mxu0 %v839
        %988 = vmatmul.bf16.gmra.mxu0 %v563
        %v989 = vpop.f32.mrf.mxu0
        %v990 = vadd.f32 %v631, %v989
        %v991 = vpop.f32.mrf.mxu0
        %v992 = vadd.f32 %v631, %v991
        %993 = vdwg.mxu0
        %994 = vmatpush.bf16.msra.mxu0 %v896
        %995 = vmatpush.bf16.msra.mxu0 %v888
        %996 = vmatpush.bf16.msra.mxu0 %v880
        %997 = vmatpush.bf16.msra.mxu0 %v872
        %998 = vmatpush.bf16.msra.mxu0 %v864
        %999 = vmatpush.bf16.msra.mxu0 %v856
        %1000 = vmatpush.bf16.msra.mxu0 %v848
        %1001 = vmatpush.bf16.msra.mxu0 %v840
        %1002 = vmatmul.bf16.gmra.mxu0 %v563
        %v1003 = vpop.f32.mrf.mxu0
        %v1004 = vadd.f32 %v632, %v1003
        %v1005 = vpop.f32.mrf.mxu0
        %v1006 = vadd.f32 %v632, %v1005
        %1007 = vdwg.mxu0
        %1008 = vmatpush.bf16.msra.mxu0 %v897
        %1009 = vmatpush.bf16.msra.mxu0 %v889
        %1010 = vmatpush.bf16.msra.mxu0 %v881
        %1011 = vmatpush.bf16.msra.mxu0 %v873
        %1012 = vmatpush.bf16.msra.mxu0 %v865
        %1013 = vmatpush.bf16.msra.mxu0 %v857
        %1014 = vmatpush.bf16.msra.mxu0 %v849
        %1015 = vmatpush.bf16.msra.mxu0 %v841
        %1016 = vmatmul.bf16.gmra.mxu0 %v563
        %v1017 = vpop.f32.mrf.mxu0
        %v1018 = vadd.f32 %v633, %v1017
        %v1019 = vpop.f32.mrf.mxu0
        %v1020 = vadd.f32 %v633, %v1019
        %1021 = vdwg.mxu0
        %1022 = vmatpush.bf16.msra.mxu0 %v898
        %1023 = vmatpush.bf16.msra.mxu0 %v890
        %1024 = vmatpush.bf16.msra.mxu0 %v882
        %1025 = vmatpush.bf16.msra.mxu0 %v874
        %1026 = vmatpush.bf16.msra.mxu0 %v866
        %1027 = vmatpush.bf16.msra.mxu0 %v858
        %1028 = vmatpush.bf16.msra.mxu0 %v850
        %1029 = vmatpush.bf16.msra.mxu0 %v842
        %1030 = vmatmul.bf16.gmra.mxu0 %v563
        %v1031 = vpop.f32.mrf.mxu0
        %v1032 = vadd.f32 %v634, %v1031
        %v1033 = vpop.f32.mrf.mxu0
        %v1034 = vadd.f32 %v634, %v1033
        %1035 = vdwg.mxu0
        %1036 = vmatpush.bf16.msra.mxu0 %v899
        %1037 = vmatpush.bf16.msra.mxu0 %v891
        %1038 = vmatpush.bf16.msra.mxu0 %v883
        %1039 = vmatpush.bf16.msra.mxu0 %v875
        %1040 = vmatpush.bf16.msra.mxu0 %v867
        %1041 = vmatpush.bf16.msra.mxu0 %v859
        %1042 = vmatpush.bf16.msra.mxu0 %v851
        %1043 = vmatpush.bf16.msra.mxu0 %v843
        %1044 = vmatmul.bf16.gmra.mxu0 %v563
        %v1045 = vpop.f32.mrf.mxu0
        %v1046 = vadd.f32 %v635, %v1045
        %v1047 = vpop.f32.mrf.mxu0
        %v1048 = vadd.f32 %v635, %v1047
        %1049 = vdwg.mxu0
        %1050 = vmatpush.bf16.msra.mxu0 %v900
        %1051 = vmatpush.bf16.msra.mxu0 %v892
        %1052 = vmatpush.bf16.msra.mxu0 %v884
        %1053 = vmatpush.bf16.msra.mxu0 %v876
        %1054 = vmatpush.bf16.msra.mxu0 %v868
        %1055 = vmatpush.bf16.msra.mxu0 %v860
        %1056 = vmatpush.bf16.msra.mxu0 %v852
        %1057 = vmatpush.bf16.msra.mxu0 %v844
        %1058 = vmatmul.bf16.gmra.mxu0 %v563
        %v1059 = vpop.f32.mrf.mxu0
        %v1060 = vadd.f32 %v636, %v1059
        %v1061 = vpop.f32.mrf.mxu0
        %v1062 = vadd.f32 %v636, %v1061
        %1063 = vdwg.mxu0
        %1064 = vmatpush.bf16.msra.mxu0 %v901
        %1065 = vmatpush.bf16.msra.mxu0 %v893
        %1066 = vmatpush.bf16.msra.mxu0 %v885
        %1067 = vmatpush.bf16.msra.mxu0 %v877
        %1068 = vmatpush.bf16.msra.mxu0 %v869
        %1069 = vmatpush.bf16.msra.mxu0 %v861
        %1070 = vmatpush.bf16.msra.mxu0 %v853
        %1071 = vmatpush.bf16.msra.mxu0 %v845
        %1072 = vmatmul.bf16.gmra.mxu0 %v563
        %v1073 = vpop.f32.mrf.mxu0
        %v1074 = vadd.f32 %v637, %v1073
        %v1075 = vpop.f32.mrf.mxu0
        %v1076 = vadd.f32 %v637, %v1075
        %1077 = vdwg.mxu0
        %v1078 = vand.u32 2147483647, %v976
        %vm1079 = vcmp.le.f32.partialorder %v1078, 0.7853982
        %vm1080 = vcmp.lt.s32.totalorder %v976, 0
        %v1081 = vand.u32 %v976, 2139095040
        %v1082 = vshrl.u32 %v1081, 23
        %v1083 = vsub.s32 %v1082, 127
        %v1084 = vand.u32 2147483647, %v976
        %v1085 = vand.u32 %v1084, 8388607
        %v1086 = vor.u32 %v1085, 8388608
        %v1087 = vsub.s32 0, %v1086
        %v1088 = vadd.s32 %v1083, 1
        %vm1089 = vcmp.gt.s32.totalorder %v1088, 0
        %v1090 = vsel %vm1089, %v1088, 0
        %v1091 = vshrl.u32 %v1090, 5
        %v1092 = vand.u32 %v1090, 31
        %v1093 = vsub.s32 32, %v1092
        %v1094 = vshrl.u32 683565275, %v1093
        %v1095 = vshll.u32 683565275, %v1092
        %v1096 = vshrl.u32 2475754826, %v1093
        %v1097 = vor.u32 %v1095, %v1096
        %v1098 = vshll.u32 2475754826, %v1092
        %v1099 = vshrl.u32 2131351028, %v1093
        %v1100 = vor.u32 %v1098, %v1099
        %v1101 = vshll.u32 2131351028, %v1092
        %v1102 = vshrl.u32 2102212464, %v1093
        %v1103 = vor.u32 %v1101, %v1102
        %v1104 = vshll.u32 2102212464, %v1092
        %v1105 = vshrl.u32 920167782, %v1093
        %v1106 = vor.u32 %v1104, %v1105
        %v1107 = vshll.u32 920167782, %v1092
        %v1108 = vshrl.u32 1326507024, %v1093
        %v1109 = vor.u32 %v1107, %v1108
        %vm1110 = vcmp.lt.s32.totalorder %v1091, 1
        %vm1111 = vcmp.lt.s32.totalorder %v1091, 2
        %vm1112 = vcmp.lt.s32.totalorder %v1091, 3
        %vm1113 = vcmp.lt.s32.totalorder %v1091, 4
        %v1114 = vsel %vm1110, %v1094, %v1097
        %v1115 = vsel %vm1113, %v1103, 2102212464
        %v1116 = vsel %vm1112, %v1100, %v1115
        %v1117 = vsel %vm1111, %v1114, %v1116
        %v1118 = vsel %vm1110, %v1097, %v1100
        %v1119 = vsel %vm1113, %v1106, 920167782
        %v1120 = vsel %vm1112, %v1103, %v1119
        %v1121 = vsel %vm1111, %v1118, %v1120
        %v1122 = vsel %vm1110, %v1100, %v1103
        %v1123 = vsel %vm1113, %v1109, 1326507024
        %v1124 = vsel %vm1112, %v1106, %v1123
        %v1125 = vsel %vm1111, %v1122, %v1124
        %v1126 = vshll.u32 %v1086, 8
        %v1127 = vand.u32 %v1126, 65535
        %v1128 = vshrl.u32 %v1126, 16
        %v1129 = vand.u32 %v1125, 65535
        %v1130 = vshrl.u32 %v1125, 16
        %v1131 = vmul.u32 %v1127, %v1129
        %v1132 = vmul.u32 %v1127, %v1130
        %v1133 = vmul.u32 %v1128, %v1129
        %v1134 = vmul.u32 %v1128, %v1130
        %v1135 = vshll.u32 %v1132, 16
        %v1136 = vshrl.u32 %v1132, 16
        %v1137 = vshll.u32 %v1133, 16
        %v1138 = vshrl.u32 %v1133, 16
        %vm1139 = vc.u32 %v1131, %v1135
        %v1140 = vsel %vm1139, 1, 0
        %v1141 = vadd.s32 %v1131, %v1135
        %v1142 = vadd.s32 %v1134, %v1140
        %vm1143 = vc.u32 %v1141, %v1137
        %v1144 = vsel %vm1143, 1, 0
        %v1145 = vadd.s32 %v1141, %v1137
        %v1146 = vadd.s32 %v1142, %v1144
        %v1147 = vadd.s32 %v1146, %v1136
        %v1148 = vadd.s32 %v1147, %v1138
        %v1149 = vand.u32 %v1126, 65535
        %v1150 = vshrl.u32 %v1126, 16
        %v1151 = vand.u32 %v1121, 65535
        %v1152 = vshrl.u32 %v1121, 16
        %v1153 = vmul.u32 %v1149, %v1151
        %v1154 = vmul.u32 %v1149, %v1152
        %v1155 = vmul.u32 %v1150, %v1151
        %v1156 = vmul.u32 %v1150, %v1152
        %v1157 = vshll.u32 %v1154, 16
        %v1158 = vshrl.u32 %v1154, 16
        %v1159 = vshll.u32 %v1155, 16
        %v1160 = vshrl.u32 %v1155, 16
        %vm1161 = vc.u32 %v1153, %v1157
        %v1162 = vsel %vm1161, 1, 0
        %v1163 = vadd.s32 %v1153, %v1157
        %v1164 = vadd.s32 %v1156, %v1162
        %vm1165 = vc.u32 %v1163, %v1159
        %v1166 = vsel %vm1165, 1, 0
        %v1167 = vadd.s32 %v1163, %v1159
        %v1168 = vadd.s32 %v1164, %v1166
        %v1169 = vadd.s32 %v1168, %v1158
        %v1170 = vadd.s32 %v1169, %v1160
        %v1171 = vmul.u32 %v1126, %v1117
        %v1172 = vadd.s32 %v1148, %v1167
        %vm1173 = vc.u32 %v1148, %v1167
        %v1174 = vadd.s32 %v1170, 1
        %v1175 = vsel %vm1173, %v1174, %v1170
        %v1176 = vadd.s32 %v1171, %v1175
        %v1177 = vadd.s32 %v1176, 536870912
        %v1178 = vshrl.u32 %v1177, 30
        %v1179 = vshll.u32 %v1178, 30
        %v1180 = vsub.s32 %v1176, %v1179
        %vm1181 = vcmp.lt.s32.totalorder %v1180, 0
        %v1182 = vsub.s32 0, %v1180
        %v1183 = vsel %vm1181, %v1182, %v1180
        %v1184 = vclz %v1183
        %v1185 = vsub.s32 %v1184, 2
        %vm1186 = vcmp.gt.s32.totalorder 0, %v1185
        %v1187 = vsel %vm1186, 0, %v1185
        %v1188 = vsub.s32 32, %v1187
        %v1189 = vshll.u32 %v1180, %v1187
        %v1190 = vshrl.u32 %v1172, %v1188
        %v1191 = vor.u32 %v1189, %v1190
        %v1192 = vsub.s32 4294967266, %v1187
        %v1193 = vadd.s32 %v1192, 127
        %v1194 = vshll.u32 %v1193, 23
        %v1195 = vor.u32 4788187, %v1194
        %v1196 = vand.u32 2147483647, %v1195
        %v1198 = vcvt.s32.f32 %v1191
        %v1199 = vmul.f32 %v1198, %v1196
        %v1200 = vxor.u32 %v1199, 2147483648
        %v1201 = vsel %vm1080, %v1200, %v1199
        %v1202 = vsub.s32 4, %v1178
        %v1203 = vsel %vm1080, %v1202, %v1178
        %v1204 = vsel %vm1079, %v976, %v1201
        %v1205 = vsel %vm1079, 0, %v1203
        %v1206 = vmul.f32 %v1204, %v1204
        %v1207 = vmul.f32 %v1206, -0.001358992
        %v1208 = vadd.f32 %v1207, 0.041655596
        %v1209 = vmul.f32 %v1206, %v1208
        %v1210 = vadd.f32 %v1209, -0.4999988
        %v1211 = vmul.f32 %v1206, %v1210
        %v1212 = vadd.f32 1.0, %v1211
        %v1213 = vmul.f32 %v1204, %v1204
        %v1214 = vmul.f32 %v1213, -0.00019511016
        %v1215 = vadd.f32 %v1214, 0.008332121
        %v1216 = vmul.f32 %v1213, %v1215
        %v1217 = vadd.f32 %v1216, -0.16666654
        %v1218 = vmul.f32 %v1213, %v1217
        %v1219 = vadd.f32 %v1218, 1.0
        %v1220 = vmul.f32 %v1219, %v1204
        %vm1221 = vweird.f32 %v976
        %v1222 = vand.u32 %v1205, 3
        %vm1223 = vcmp.lt.s32.totalorder %v1222, 2
        %vm1224 = vcmp.eq.s32.totalorder %v1222, 0
        %v1225 = vxor.u32 %v1220, 2147483648
        %v1226 = vsel %vm1224, %v1212, %v1225
        %vm1227 = vcmp.eq.s32.totalorder %v1222, 2
        %v1228 = vxor.u32 %v1212, 2147483648
        %v1229 = vsel %vm1227, %v1228, %v1220
        %v1230 = vsel %vm1223, %v1226, %v1229
        %v1231 = vsel %vm1221, nan, %v1230
        %v1232 = vand.u32 2147483647, %v990
        %vm1233 = vcmp.le.f32.partialorder %v1232, 0.7853982
        %vm1234 = vcmp.lt.s32.totalorder %v990, 0
        %v1235 = vand.u32 %v990, 2139095040
        %v1236 = vshrl.u32 %v1235, 23
        %v1237 = vsub.s32 %v1236, 127
        %v1238 = vand.u32 2147483647, %v990
        %v1239 = vand.u32 %v1238, 8388607
        %v1240 = vor.u32 %v1239, 8388608
        %v1241 = vsub.s32 0, %v1240
        %v1242 = vadd.s32 %v1237, 1
        %vm1243 = vcmp.gt.s32.totalorder %v1242, 0
        %v1244 = vsel %vm1243, %v1242, 0
        %v1245 = vshrl.u32 %v1244, 5
        %v1246 = vand.u32 %v1244, 31
        %v1247 = vsub.s32 32, %v1246
        %v1248 = vshrl.u32 683565275, %v1247
        %v1249 = vshll.u32 683565275, %v1246
        %v1250 = vshrl.u32 2475754826, %v1247
        %v1251 = vor.u32 %v1249, %v1250
        %v1252 = vshll.u32 2475754826, %v1246
        %v1253 = vshrl.u32 2131351028, %v1247
        %v1254 = vor.u32 %v1252, %v1253
        %v1255 = vshll.u32 2131351028, %v1246
        %v1256 = vshrl.u32 2102212464, %v1247
        %v1257 = vor.u32 %v1255, %v1256
        %v1258 = vshll.u32 2102212464, %v1246
        %v1259 = vshrl.u32 920167782, %v1247
        %v1260 = vor.u32 %v1258, %v1259
        %v1261 = vshll.u32 920167782, %v1246
        %v1262 = vshrl.u32 1326507024, %v1247
        %v1263 = vor.u32 %v1261, %v1262
        %vm1264 = vcmp.lt.s32.totalorder %v1245, 1
        %vm1265 = vcmp.lt.s32.totalorder %v1245, 2
        %vm1266 = vcmp.lt.s32.totalorder %v1245, 3
        %vm1267 = vcmp.lt.s32.totalorder %v1245, 4
        %v1268 = vsel %vm1264, %v1248, %v1251
        %v1269 = vsel %vm1267, %v1257, 2102212464
        %v1270 = vsel %vm1266, %v1254, %v1269
        %v1271 = vsel %vm1265, %v1268, %v1270
        %v1272 = vsel %vm1264, %v1251, %v1254
        %v1273 = vsel %vm1267, %v1260, 920167782
        %v1274 = vsel %vm1266, %v1257, %v1273
        %v1275 = vsel %vm1265, %v1272, %v1274
        %v1276 = vsel %vm1264, %v1254, %v1257
        %v1277 = vsel %vm1267, %v1263, 1326507024
        %v1278 = vsel %vm1266, %v1260, %v1277
        %v1279 = vsel %vm1265, %v1276, %v1278
        %v1280 = vshll.u32 %v1240, 8
        %v1281 = vand.u32 %v1280, 65535
        %v1282 = vshrl.u32 %v1280, 16
        %v1283 = vand.u32 %v1279, 65535
        %v1284 = vshrl.u32 %v1279, 16
        %v1285 = vmul.u32 %v1281, %v1283
        %v1286 = vmul.u32 %v1281, %v1284
        %v1287 = vmul.u32 %v1282, %v1283
        %v1288 = vmul.u32 %v1282, %v1284
        %v1289 = vshll.u32 %v1286, 16
        %v1290 = vshrl.u32 %v1286, 16
        %v1291 = vshll.u32 %v1287, 16
        %v1292 = vshrl.u32 %v1287, 16
        %vm1293 = vc.u32 %v1285, %v1289
        %v1294 = vsel %vm1293, 1, 0
        %v1295 = vadd.s32 %v1285, %v1289
        %v1296 = vadd.s32 %v1288, %v1294
        %vm1297 = vc.u32 %v1295, %v1291
        %v1298 = vsel %vm1297, 1, 0
        %v1299 = vadd.s32 %v1295, %v1291
        %v1300 = vadd.s32 %v1296, %v1298
        %v1301 = vadd.s32 %v1300, %v1290
        %v1302 = vadd.s32 %v1301, %v1292
        %v1303 = vand.u32 %v1280, 65535
        %v1304 = vshrl.u32 %v1280, 16
        %v1305 = vand.u32 %v1275, 65535
        %v1306 = vshrl.u32 %v1275, 16
        %v1307 = vmul.u32 %v1303, %v1305
        %v1308 = vmul.u32 %v1303, %v1306
        %v1309 = vmul.u32 %v1304, %v1305
        %v1310 = vmul.u32 %v1304, %v1306
        %v1311 = vshll.u32 %v1308, 16
        %v1312 = vshrl.u32 %v1308, 16
        %v1313 = vshll.u32 %v1309, 16
        %v1314 = vshrl.u32 %v1309, 16
        %vm1315 = vc.u32 %v1307, %v1311
        %v1316 = vsel %vm1315, 1, 0
        %v1317 = vadd.s32 %v1307, %v1311
        %v1318 = vadd.s32 %v1310, %v1316
        %vm1319 = vc.u32 %v1317, %v1313
        %v1320 = vsel %vm1319, 1, 0
        %v1321 = vadd.s32 %v1317, %v1313
        %v1322 = vadd.s32 %v1318, %v1320
        %v1323 = vadd.s32 %v1322, %v1312
        %v1324 = vadd.s32 %v1323, %v1314
        %v1325 = vmul.u32 %v1280, %v1271
        %v1326 = vadd.s32 %v1302, %v1321
        %vm1327 = vc.u32 %v1302, %v1321
        %v1328 = vadd.s32 %v1324, 1
        %v1329 = vsel %vm1327, %v1328, %v1324
        %v1330 = vadd.s32 %v1325, %v1329
        %v1331 = vadd.s32 %v1330, 536870912
        %v1332 = vshrl.u32 %v1331, 30
        %v1333 = vshll.u32 %v1332, 30
        %v1334 = vsub.s32 %v1330, %v1333
        %vm1335 = vcmp.lt.s32.totalorder %v1334, 0
        %v1336 = vsub.s32 0, %v1334
        %v1337 = vsel %vm1335, %v1336, %v1334
        %v1338 = vclz %v1337
        %v1339 = vsub.s32 %v1338, 2
        %vm1340 = vcmp.gt.s32.totalorder 0, %v1339
        %v1341 = vsel %vm1340, 0, %v1339
        %v1342 = vsub.s32 32, %v1341
        %v1343 = vshll.u32 %v1334, %v1341
        %v1344 = vshrl.u32 %v1326, %v1342
        %v1345 = vor.u32 %v1343, %v1344
        %v1346 = vsub.s32 4294967266, %v1341
        %v1347 = vadd.s32 %v1346, 127
        %v1348 = vshll.u32 %v1347, 23
        %v1349 = vor.u32 4788187, %v1348
        %v1350 = vand.u32 2147483647, %v1349
        %v1352 = vcvt.s32.f32 %v1345
        %v1353 = vmul.f32 %v1352, %v1350
        %v1354 = vxor.u32 %v1353, 2147483648
        %v1355 = vsel %vm1234, %v1354, %v1353
        %v1356 = vsub.s32 4, %v1332
        %v1357 = vsel %vm1234, %v1356, %v1332
        %v1358 = vsel %vm1233, %v990, %v1355
        %v1359 = vsel %vm1233, 0, %v1357
        %v1360 = vmul.f32 %v1358, %v1358
        %v1361 = vmul.f32 %v1360, -0.001358992
        %v1362 = vadd.f32 %v1361, 0.041655596
        %v1363 = vmul.f32 %v1360, %v1362
        %v1364 = vadd.f32 %v1363, -0.4999988
        %v1365 = vmul.f32 %v1360, %v1364
        %v1366 = vadd.f32 1.0, %v1365
        %v1367 = vmul.f32 %v1358, %v1358
        %v1368 = vmul.f32 %v1367, -0.00019511016
        %v1369 = vadd.f32 %v1368, 0.008332121
        %v1370 = vmul.f32 %v1367, %v1369
        %v1371 = vadd.f32 %v1370, -0.16666654
        %v1372 = vmul.f32 %v1367, %v1371
        %v1373 = vadd.f32 %v1372, 1.0
        %v1374 = vmul.f32 %v1373, %v1358
        %vm1375 = vweird.f32 %v990
        %v1376 = vand.u32 %v1359, 3
        %vm1377 = vcmp.lt.s32.totalorder %v1376, 2
        %vm1378 = vcmp.eq.s32.totalorder %v1376, 0
        %v1379 = vxor.u32 %v1374, 2147483648
        %v1380 = vsel %vm1378, %v1366, %v1379
        %vm1381 = vcmp.eq.s32.totalorder %v1376, 2
        %v1382 = vxor.u32 %v1366, 2147483648
        %v1383 = vsel %vm1381, %v1382, %v1374
        %v1384 = vsel %vm1377, %v1380, %v1383
        %v1385 = vsel %vm1375, nan, %v1384
        %v1386 = vand.u32 2147483647, %v1004
        %vm1387 = vcmp.le.f32.partialorder %v1386, 0.7853982
        %vm1388 = vcmp.lt.s32.totalorder %v1004, 0
        %v1389 = vand.u32 %v1004, 2139095040
        %v1390 = vshrl.u32 %v1389, 23
        %v1391 = vsub.s32 %v1390, 127
        %v1392 = vand.u32 2147483647, %v1004
        %v1393 = vand.u32 %v1392, 8388607
        %v1394 = vor.u32 %v1393, 8388608
        %v1395 = vsub.s32 0, %v1394
        %v1396 = vadd.s32 %v1391, 1
        %vm1397 = vcmp.gt.s32.totalorder %v1396, 0
        %v1398 = vsel %vm1397, %v1396, 0
        %v1399 = vshrl.u32 %v1398, 5
        %v1400 = vand.u32 %v1398, 31
        %v1401 = vsub.s32 32, %v1400
        %v1402 = vshrl.u32 683565275, %v1401
        %v1403 = vshll.u32 683565275, %v1400
        %v1404 = vshrl.u32 2475754826, %v1401
        %v1405 = vor.u32 %v1403, %v1404
        %v1406 = vshll.u32 2475754826, %v1400
        %v1407 = vshrl.u32 2131351028, %v1401
        %v1408 = vor.u32 %v1406, %v1407
        %v1409 = vshll.u32 2131351028, %v1400
        %v1410 = vshrl.u32 2102212464, %v1401
        %v1411 = vor.u32 %v1409, %v1410
        %v1412 = vshll.u32 2102212464, %v1400
        %v1413 = vshrl.u32 920167782, %v1401
        %v1414 = vor.u32 %v1412, %v1413
        %v1415 = vshll.u32 920167782, %v1400
        %v1416 = vshrl.u32 1326507024, %v1401
        %v1417 = vor.u32 %v1415, %v1416
        %vm1418 = vcmp.lt.s32.totalorder %v1399, 1
        %vm1419 = vcmp.lt.s32.totalorder %v1399, 2
        %vm1420 = vcmp.lt.s32.totalorder %v1399, 3
        %vm1421 = vcmp.lt.s32.totalorder %v1399, 4
        %v1422 = vsel %vm1418, %v1402, %v1405
        %v1423 = vsel %vm1421, %v1411, 2102212464
        %v1424 = vsel %vm1420, %v1408, %v1423
        %v1425 = vsel %vm1419, %v1422, %v1424
        %v1426 = vsel %vm1418, %v1405, %v1408
        %v1427 = vsel %vm1421, %v1414, 920167782
        %v1428 = vsel %vm1420, %v1411, %v1427
        %v1429 = vsel %vm1419, %v1426, %v1428
        %v1430 = vsel %vm1418, %v1408, %v1411
        %v1431 = vsel %vm1421, %v1417, 1326507024
        %v1432 = vsel %vm1420, %v1414, %v1431
        %v1433 = vsel %vm1419, %v1430, %v1432
        %v1434 = vshll.u32 %v1394, 8
        %v1435 = vand.u32 %v1434, 65535
        %v1436 = vshrl.u32 %v1434, 16
        %v1437 = vand.u32 %v1433, 65535
        %v1438 = vshrl.u32 %v1433, 16
        %v1439 = vmul.u32 %v1435, %v1437
        %v1440 = vmul.u32 %v1435, %v1438
        %v1441 = vmul.u32 %v1436, %v1437
        %v1442 = vmul.u32 %v1436, %v1438
        %v1443 = vshll.u32 %v1440, 16
        %v1444 = vshrl.u32 %v1440, 16
        %v1445 = vshll.u32 %v1441, 16
        %v1446 = vshrl.u32 %v1441, 16
        %vm1447 = vc.u32 %v1439, %v1443
        %v1448 = vsel %vm1447, 1, 0
        %v1449 = vadd.s32 %v1439, %v1443
        %v1450 = vadd.s32 %v1442, %v1448
        %vm1451 = vc.u32 %v1449, %v1445
        %v1452 = vsel %vm1451, 1, 0
        %v1453 = vadd.s32 %v1449, %v1445
        %v1454 = vadd.s32 %v1450, %v1452
        %v1455 = vadd.s32 %v1454, %v1444
        %v1456 = vadd.s32 %v1455, %v1446
        %v1457 = vand.u32 %v1434, 65535
        %v1458 = vshrl.u32 %v1434, 16
        %v1459 = vand.u32 %v1429, 65535
        %v1460 = vshrl.u32 %v1429, 16
        %v1461 = vmul.u32 %v1457, %v1459
        %v1462 = vmul.u32 %v1457, %v1460
        %v1463 = vmul.u32 %v1458, %v1459
        %v1464 = vmul.u32 %v1458, %v1460
        %v1465 = vshll.u32 %v1462, 16
        %v1466 = vshrl.u32 %v1462, 16
        %v1467 = vshll.u32 %v1463, 16
        %v1468 = vshrl.u32 %v1463, 16
        %vm1469 = vc.u32 %v1461, %v1465
        %v1470 = vsel %vm1469, 1, 0
        %v1471 = vadd.s32 %v1461, %v1465
        %v1472 = vadd.s32 %v1464, %v1470
        %vm1473 = vc.u32 %v1471, %v1467
        %v1474 = vsel %vm1473, 1, 0
        %v1475 = vadd.s32 %v1471, %v1467
        %v1476 = vadd.s32 %v1472, %v1474
        %v1477 = vadd.s32 %v1476, %v1466
        %v1478 = vadd.s32 %v1477, %v1468
        %v1479 = vmul.u32 %v1434, %v1425
        %v1480 = vadd.s32 %v1456, %v1475
        %vm1481 = vc.u32 %v1456, %v1475
        %v1482 = vadd.s32 %v1478, 1
        %v1483 = vsel %vm1481, %v1482, %v1478
        %v1484 = vadd.s32 %v1479, %v1483
        %v1485 = vadd.s32 %v1484, 536870912
        %v1486 = vshrl.u32 %v1485, 30
        %v1487 = vshll.u32 %v1486, 30
        %v1488 = vsub.s32 %v1484, %v1487
        %vm1489 = vcmp.lt.s32.totalorder %v1488, 0
        %v1490 = vsub.s32 0, %v1488
        %v1491 = vsel %vm1489, %v1490, %v1488
        %v1492 = vclz %v1491
        %v1493 = vsub.s32 %v1492, 2
        %vm1494 = vcmp.gt.s32.totalorder 0, %v1493
        %v1495 = vsel %vm1494, 0, %v1493
        %v1496 = vsub.s32 32, %v1495
        %v1497 = vshll.u32 %v1488, %v1495
        %v1498 = vshrl.u32 %v1480, %v1496
        %v1499 = vor.u32 %v1497, %v1498
        %v1500 = vsub.s32 4294967266, %v1495
        %v1501 = vadd.s32 %v1500, 127
        %v1502 = vshll.u32 %v1501, 23
        %v1503 = vor.u32 4788187, %v1502
        %v1504 = vand.u32 2147483647, %v1503
        %v1506 = vcvt.s32.f32 %v1499
        %v1507 = vmul.f32 %v1506, %v1504
        %v1508 = vxor.u32 %v1507, 2147483648
        %v1509 = vsel %vm1388, %v1508, %v1507
        %v1510 = vsub.s32 4, %v1486
        %v1511 = vsel %vm1388, %v1510, %v1486
        %v1512 = vsel %vm1387, %v1004, %v1509
        %v1513 = vsel %vm1387, 0, %v1511
        %v1514 = vmul.f32 %v1512, %v1512
        %v1515 = vmul.f32 %v1514, -0.001358992
        %v1516 = vadd.f32 %v1515, 0.041655596
        %v1517 = vmul.f32 %v1514, %v1516
        %v1518 = vadd.f32 %v1517, -0.4999988
        %v1519 = vmul.f32 %v1514, %v1518
        %v1520 = vadd.f32 1.0, %v1519
        %v1521 = vmul.f32 %v1512, %v1512
        %v1522 = vmul.f32 %v1521, -0.00019511016
        %v1523 = vadd.f32 %v1522, 0.008332121
        %v1524 = vmul.f32 %v1521, %v1523
        %v1525 = vadd.f32 %v1524, -0.16666654
        %v1526 = vmul.f32 %v1521, %v1525
        %v1527 = vadd.f32 %v1526, 1.0
        %v1528 = vmul.f32 %v1527, %v1512
        %vm1529 = vweird.f32 %v1004
        %v1530 = vand.u32 %v1513, 3
        %vm1531 = vcmp.lt.s32.totalorder %v1530, 2
        %vm1532 = vcmp.eq.s32.totalorder %v1530, 0
        %v1533 = vxor.u32 %v1528, 2147483648
        %v1534 = vsel %vm1532, %v1520, %v1533
        %vm1535 = vcmp.eq.s32.totalorder %v1530, 2
        %v1536 = vxor.u32 %v1520, 2147483648
        %v1537 = vsel %vm1535, %v1536, %v1528
        %v1538 = vsel %vm1531, %v1534, %v1537
        %v1539 = vsel %vm1529, nan, %v1538
        %v1540 = vand.u32 2147483647, %v1018
        %vm1541 = vcmp.le.f32.partialorder %v1540, 0.7853982
        %vm1542 = vcmp.lt.s32.totalorder %v1018, 0
        %v1543 = vand.u32 %v1018, 2139095040
        %v1544 = vshrl.u32 %v1543, 23
        %v1545 = vsub.s32 %v1544, 127
        %v1546 = vand.u32 2147483647, %v1018
        %v1547 = vand.u32 %v1546, 8388607
        %v1548 = vor.u32 %v1547, 8388608
        %v1549 = vsub.s32 0, %v1548
        %v1550 = vadd.s32 %v1545, 1
        %vm1551 = vcmp.gt.s32.totalorder %v1550, 0
        %v1552 = vsel %vm1551, %v1550, 0
        %v1553 = vshrl.u32 %v1552, 5
        %v1554 = vand.u32 %v1552, 31
        %v1555 = vsub.s32 32, %v1554
        %v1556 = vshrl.u32 683565275, %v1555
        %v1557 = vshll.u32 683565275, %v1554
        %v1558 = vshrl.u32 2475754826, %v1555
        %v1559 = vor.u32 %v1557, %v1558
        %v1560 = vshll.u32 2475754826, %v1554
        %v1561 = vshrl.u32 2131351028, %v1555
        %v1562 = vor.u32 %v1560, %v1561
        %v1563 = vshll.u32 2131351028, %v1554
        %v1564 = vshrl.u32 2102212464, %v1555
        %v1565 = vor.u32 %v1563, %v1564
        %v1566 = vshll.u32 2102212464, %v1554
        %v1567 = vshrl.u32 920167782, %v1555
        %v1568 = vor.u32 %v1566, %v1567
        %v1569 = vshll.u32 920167782, %v1554
        %v1570 = vshrl.u32 1326507024, %v1555
        %v1571 = vor.u32 %v1569, %v1570
        %vm1572 = vcmp.lt.s32.totalorder %v1553, 1
        %vm1573 = vcmp.lt.s32.totalorder %v1553, 2
        %vm1574 = vcmp.lt.s32.totalorder %v1553, 3
        %vm1575 = vcmp.lt.s32.totalorder %v1553, 4
        %v1576 = vsel %vm1572, %v1556, %v1559
        %v1577 = vsel %vm1575, %v1565, 2102212464
        %v1578 = vsel %vm1574, %v1562, %v1577
        %v1579 = vsel %vm1573, %v1576, %v1578
        %v1580 = vsel %vm1572, %v1559, %v1562
        %v1581 = vsel %vm1575, %v1568, 920167782
        %v1582 = vsel %vm1574, %v1565, %v1581
        %v1583 = vsel %vm1573, %v1580, %v1582
        %v1584 = vsel %vm1572, %v1562, %v1565
        %v1585 = vsel %vm1575, %v1571, 1326507024
        %v1586 = vsel %vm1574, %v1568, %v1585
        %v1587 = vsel %vm1573, %v1584, %v1586
        %v1588 = vshll.u32 %v1548, 8
        %v1589 = vand.u32 %v1588, 65535
        %v1590 = vshrl.u32 %v1588, 16
        %v1591 = vand.u32 %v1587, 65535
        %v1592 = vshrl.u32 %v1587, 16
        %v1593 = vmul.u32 %v1589, %v1591
        %v1594 = vmul.u32 %v1589, %v1592
        %v1595 = vmul.u32 %v1590, %v1591
        %v1596 = vmul.u32 %v1590, %v1592
        %v1597 = vshll.u32 %v1594, 16
        %v1598 = vshrl.u32 %v1594, 16
        %v1599 = vshll.u32 %v1595, 16
        %v1600 = vshrl.u32 %v1595, 16
        %vm1601 = vc.u32 %v1593, %v1597
        %v1602 = vsel %vm1601, 1, 0
        %v1603 = vadd.s32 %v1593, %v1597
        %v1604 = vadd.s32 %v1596, %v1602
        %vm1605 = vc.u32 %v1603, %v1599
        %v1606 = vsel %vm1605, 1, 0
        %v1607 = vadd.s32 %v1603, %v1599
        %v1608 = vadd.s32 %v1604, %v1606
        %v1609 = vadd.s32 %v1608, %v1598
        %v1610 = vadd.s32 %v1609, %v1600
        %v1611 = vand.u32 %v1588, 65535
        %v1612 = vshrl.u32 %v1588, 16
        %v1613 = vand.u32 %v1583, 65535
        %v1614 = vshrl.u32 %v1583, 16
        %v1615 = vmul.u32 %v1611, %v1613
        %v1616 = vmul.u32 %v1611, %v1614
        %v1617 = vmul.u32 %v1612, %v1613
        %v1618 = vmul.u32 %v1612, %v1614
        %v1619 = vshll.u32 %v1616, 16
        %v1620 = vshrl.u32 %v1616, 16
        %v1621 = vshll.u32 %v1617, 16
        %v1622 = vshrl.u32 %v1617, 16
        %vm1623 = vc.u32 %v1615, %v1619
        %v1624 = vsel %vm1623, 1, 0
        %v1625 = vadd.s32 %v1615, %v1619
        %v1626 = vadd.s32 %v1618, %v1624
        %vm1627 = vc.u32 %v1625, %v1621
        %v1628 = vsel %vm1627, 1, 0
        %v1629 = vadd.s32 %v1625, %v1621
        %v1630 = vadd.s32 %v1626, %v1628
        %v1631 = vadd.s32 %v1630, %v1620
        %v1632 = vadd.s32 %v1631, %v1622
        %v1633 = vmul.u32 %v1588, %v1579
        %v1634 = vadd.s32 %v1610, %v1629
        %vm1635 = vc.u32 %v1610, %v1629
        %v1636 = vadd.s32 %v1632, 1
        %v1637 = vsel %vm1635, %v1636, %v1632
        %v1638 = vadd.s32 %v1633, %v1637
        %v1639 = vadd.s32 %v1638, 536870912
        %v1640 = vshrl.u32 %v1639, 30
        %v1641 = vshll.u32 %v1640, 30
        %v1642 = vsub.s32 %v1638, %v1641
        %vm1643 = vcmp.lt.s32.totalorder %v1642, 0
        %v1644 = vsub.s32 0, %v1642
        %v1645 = vsel %vm1643, %v1644, %v1642
        %v1646 = vclz %v1645
        %v1647 = vsub.s32 %v1646, 2
        %vm1648 = vcmp.gt.s32.totalorder 0, %v1647
        %v1649 = vsel %vm1648, 0, %v1647
        %v1650 = vsub.s32 32, %v1649
        %v1651 = vshll.u32 %v1642, %v1649
        %v1652 = vshrl.u32 %v1634, %v1650
        %v1653 = vor.u32 %v1651, %v1652
        %v1654 = vsub.s32 4294967266, %v1649
        %v1655 = vadd.s32 %v1654, 127
        %v1656 = vshll.u32 %v1655, 23
        %v1657 = vor.u32 4788187, %v1656
        %v1658 = vand.u32 2147483647, %v1657
        %v1660 = vcvt.s32.f32 %v1653
        %v1661 = vmul.f32 %v1660, %v1658
        %v1662 = vxor.u32 %v1661, 2147483648
        %v1663 = vsel %vm1542, %v1662, %v1661
        %v1664 = vsub.s32 4, %v1640
        %v1665 = vsel %vm1542, %v1664, %v1640
        %v1666 = vsel %vm1541, %v1018, %v1663
        %v1667 = vsel %vm1541, 0, %v1665
        %v1668 = vmul.f32 %v1666, %v1666
        %v1669 = vmul.f32 %v1668, -0.001358992
        %v1670 = vadd.f32 %v1669, 0.041655596
        %v1671 = vmul.f32 %v1668, %v1670
        %v1672 = vadd.f32 %v1671, -0.4999988
        %v1673 = vmul.f32 %v1668, %v1672
        %v1674 = vadd.f32 1.0, %v1673
        %v1675 = vmul.f32 %v1666, %v1666
        %v1676 = vmul.f32 %v1675, -0.00019511016
        %v1677 = vadd.f32 %v1676, 0.008332121
        %v1678 = vmul.f32 %v1675, %v1677
        %v1679 = vadd.f32 %v1678, -0.16666654
        %v1680 = vmul.f32 %v1675, %v1679
        %v1681 = vadd.f32 %v1680, 1.0
        %v1682 = vmul.f32 %v1681, %v1666
        %vm1683 = vweird.f32 %v1018
        %v1684 = vand.u32 %v1667, 3
        %vm1685 = vcmp.lt.s32.totalorder %v1684, 2
        %vm1686 = vcmp.eq.s32.totalorder %v1684, 0
        %v1687 = vxor.u32 %v1682, 2147483648
        %v1688 = vsel %vm1686, %v1674, %v1687
        %vm1689 = vcmp.eq.s32.totalorder %v1684, 2
        %v1690 = vxor.u32 %v1674, 2147483648
        %v1691 = vsel %vm1689, %v1690, %v1682
        %v1692 = vsel %vm1685, %v1688, %v1691
        %v1693 = vsel %vm1683, nan, %v1692
        %v1694 = vand.u32 2147483647, %v1032
        %vm1695 = vcmp.le.f32.partialorder %v1694, 0.7853982
        %vm1696 = vcmp.lt.s32.totalorder %v1032, 0
        %v1697 = vand.u32 %v1032, 2139095040
        %v1698 = vshrl.u32 %v1697, 23
        %v1699 = vsub.s32 %v1698, 127
        %v1700 = vand.u32 2147483647, %v1032
        %v1701 = vand.u32 %v1700, 8388607
        %v1702 = vor.u32 %v1701, 8388608
        %v1703 = vsub.s32 0, %v1702
        %v1704 = vadd.s32 %v1699, 1
        %vm1705 = vcmp.gt.s32.totalorder %v1704, 0
        %v1706 = vsel %vm1705, %v1704, 0
        %v1707 = vshrl.u32 %v1706, 5
        %v1708 = vand.u32 %v1706, 31
        %v1709 = vsub.s32 32, %v1708
        %v1710 = vshrl.u32 683565275, %v1709
        %v1711 = vshll.u32 683565275, %v1708
        %v1712 = vshrl.u32 2475754826, %v1709
        %v1713 = vor.u32 %v1711, %v1712
        %v1714 = vshll.u32 2475754826, %v1708
        %v1715 = vshrl.u32 2131351028, %v1709
        %v1716 = vor.u32 %v1714, %v1715
        %v1717 = vshll.u32 2131351028, %v1708
        %v1718 = vshrl.u32 2102212464, %v1709
        %v1719 = vor.u32 %v1717, %v1718
        %v1720 = vshll.u32 2102212464, %v1708
        %v1721 = vshrl.u32 920167782, %v1709
        %v1722 = vor.u32 %v1720, %v1721
        %v1723 = vshll.u32 920167782, %v1708
        %v1724 = vshrl.u32 1326507024, %v1709
        %v1725 = vor.u32 %v1723, %v1724
        %vm1726 = vcmp.lt.s32.totalorder %v1707, 1
        %vm1727 = vcmp.lt.s32.totalorder %v1707, 2
        %vm1728 = vcmp.lt.s32.totalorder %v1707, 3
        %vm1729 = vcmp.lt.s32.totalorder %v1707, 4
        %v1730 = vsel %vm1726, %v1710, %v1713
        %v1731 = vsel %vm1729, %v1719, 2102212464
        %v1732 = vsel %vm1728, %v1716, %v1731
        %v1733 = vsel %vm1727, %v1730, %v1732
        %v1734 = vsel %vm1726, %v1713, %v1716
        %v1735 = vsel %vm1729, %v1722, 920167782
        %v1736 = vsel %vm1728, %v1719, %v1735
        %v1737 = vsel %vm1727, %v1734, %v1736
        %v1738 = vsel %vm1726, %v1716, %v1719
        %v1739 = vsel %vm1729, %v1725, 1326507024
        %v1740 = vsel %vm1728, %v1722, %v1739
        %v1741 = vsel %vm1727, %v1738, %v1740
        %v1742 = vshll.u32 %v1702, 8
        %v1743 = vand.u32 %v1742, 65535
        %v1744 = vshrl.u32 %v1742, 16
        %v1745 = vand.u32 %v1741, 65535
        %v1746 = vshrl.u32 %v1741, 16
        %v1747 = vmul.u32 %v1743, %v1745
        %v1748 = vmul.u32 %v1743, %v1746
        %v1749 = vmul.u32 %v1744, %v1745
        %v1750 = vmul.u32 %v1744, %v1746
        %v1751 = vshll.u32 %v1748, 16
        %v1752 = vshrl.u32 %v1748, 16
        %v1753 = vshll.u32 %v1749, 16
        %v1754 = vshrl.u32 %v1749, 16
        %vm1755 = vc.u32 %v1747, %v1751
        %v1756 = vsel %vm1755, 1, 0
        %v1757 = vadd.s32 %v1747, %v1751
        %v1758 = vadd.s32 %v1750, %v1756
        %vm1759 = vc.u32 %v1757, %v1753
        %v1760 = vsel %vm1759, 1, 0
        %v1761 = vadd.s32 %v1757, %v1753
        %v1762 = vadd.s32 %v1758, %v1760
        %v1763 = vadd.s32 %v1762, %v1752
        %v1764 = vadd.s32 %v1763, %v1754
        %v1765 = vand.u32 %v1742, 65535
        %v1766 = vshrl.u32 %v1742, 16
        %v1767 = vand.u32 %v1737, 65535
        %v1768 = vshrl.u32 %v1737, 16
        %v1769 = vmul.u32 %v1765, %v1767
        %v1770 = vmul.u32 %v1765, %v1768
        %v1771 = vmul.u32 %v1766, %v1767
        %v1772 = vmul.u32 %v1766, %v1768
        %v1773 = vshll.u32 %v1770, 16
        %v1774 = vshrl.u32 %v1770, 16
        %v1775 = vshll.u32 %v1771, 16
        %v1776 = vshrl.u32 %v1771, 16
        %vm1777 = vc.u32 %v1769, %v1773
        %v1778 = vsel %vm1777, 1, 0
        %v1779 = vadd.s32 %v1769, %v1773
        %v1780 = vadd.s32 %v1772, %v1778
        %vm1781 = vc.u32 %v1779, %v1775
        %v1782 = vsel %vm1781, 1, 0
        %v1783 = vadd.s32 %v1779, %v1775
        %v1784 = vadd.s32 %v1780, %v1782
        %v1785 = vadd.s32 %v1784, %v1774
        %v1786 = vadd.s32 %v1785, %v1776
        %v1787 = vmul.u32 %v1742, %v1733
        %v1788 = vadd.s32 %v1764, %v1783
        %vm1789 = vc.u32 %v1764, %v1783
        %v1790 = vadd.s32 %v1786, 1
        %v1791 = vsel %vm1789, %v1790, %v1786
        %v1792 = vadd.s32 %v1787, %v1791
        %v1793 = vadd.s32 %v1792, 536870912
        %v1794 = vshrl.u32 %v1793, 30
        %v1795 = vshll.u32 %v1794, 30
        %v1796 = vsub.s32 %v1792, %v1795
        %vm1797 = vcmp.lt.s32.totalorder %v1796, 0
        %v1798 = vsub.s32 0, %v1796
        %v1799 = vsel %vm1797, %v1798, %v1796
        %v1800 = vclz %v1799
        %v1801 = vsub.s32 %v1800, 2
        %vm1802 = vcmp.gt.s32.totalorder 0, %v1801
        %v1803 = vsel %vm1802, 0, %v1801
        %v1804 = vsub.s32 32, %v1803
        %v1805 = vshll.u32 %v1796, %v1803
        %v1806 = vshrl.u32 %v1788, %v1804
        %v1807 = vor.u32 %v1805, %v1806
        %v1808 = vsub.s32 4294967266, %v1803
        %v1809 = vadd.s32 %v1808, 127
        %v1810 = vshll.u32 %v1809, 23
        %v1811 = vor.u32 4788187, %v1810
        %v1812 = vand.u32 2147483647, %v1811
        %v1814 = vcvt.s32.f32 %v1807
        %v1815 = vmul.f32 %v1814, %v1812
        %v1816 = vxor.u32 %v1815, 2147483648
        %v1817 = vsel %vm1696, %v1816, %v1815
        %v1818 = vsub.s32 4, %v1794
        %v1819 = vsel %vm1696, %v1818, %v1794
        %v1820 = vsel %vm1695, %v1032, %v1817
        %v1821 = vsel %vm1695, 0, %v1819
        %v1822 = vmul.f32 %v1820, %v1820
        %v1823 = vmul.f32 %v1822, -0.001358992
        %v1824 = vadd.f32 %v1823, 0.041655596
        %v1825 = vmul.f32 %v1822, %v1824
        %v1826 = vadd.f32 %v1825, -0.4999988
        %v1827 = vmul.f32 %v1822, %v1826
        %v1828 = vadd.f32 1.0, %v1827
        %v1829 = vmul.f32 %v1820, %v1820
        %v1830 = vmul.f32 %v1829, -0.00019511016
        %v1831 = vadd.f32 %v1830, 0.008332121
        %v1832 = vmul.f32 %v1829, %v1831
        %v1833 = vadd.f32 %v1832, -0.16666654
        %v1834 = vmul.f32 %v1829, %v1833
        %v1835 = vadd.f32 %v1834, 1.0
        %v1836 = vmul.f32 %v1835, %v1820
        %vm1837 = vweird.f32 %v1032
        %v1838 = vand.u32 %v1821, 3
        %vm1839 = vcmp.lt.s32.totalorder %v1838, 2
        %vm1840 = vcmp.eq.s32.totalorder %v1838, 0
        %v1841 = vxor.u32 %v1836, 2147483648
        %v1842 = vsel %vm1840, %v1828, %v1841
        %vm1843 = vcmp.eq.s32.totalorder %v1838, 2
        %v1844 = vxor.u32 %v1828, 2147483648
        %v1845 = vsel %vm1843, %v1844, %v1836
        %v1846 = vsel %vm1839, %v1842, %v1845
        %v1847 = vsel %vm1837, nan, %v1846
        %v1848 = vand.u32 2147483647, %v1046
        %vm1849 = vcmp.le.f32.partialorder %v1848, 0.7853982
        %vm1850 = vcmp.lt.s32.totalorder %v1046, 0
        %v1851 = vand.u32 %v1046, 2139095040
        %v1852 = vshrl.u32 %v1851, 23
        %v1853 = vsub.s32 %v1852, 127
        %v1854 = vand.u32 2147483647, %v1046
        %v1855 = vand.u32 %v1854, 8388607
        %v1856 = vor.u32 %v1855, 8388608
        %v1857 = vsub.s32 0, %v1856
        %v1858 = vadd.s32 %v1853, 1
        %vm1859 = vcmp.gt.s32.totalorder %v1858, 0
        %v1860 = vsel %vm1859, %v1858, 0
        %v1861 = vshrl.u32 %v1860, 5
        %v1862 = vand.u32 %v1860, 31
        %v1863 = vsub.s32 32, %v1862
        %v1864 = vshrl.u32 683565275, %v1863
        %v1865 = vshll.u32 683565275, %v1862
        %v1866 = vshrl.u32 2475754826, %v1863
        %v1867 = vor.u32 %v1865, %v1866
        %v1868 = vshll.u32 2475754826, %v1862
        %v1869 = vshrl.u32 2131351028, %v1863
        %v1870 = vor.u32 %v1868, %v1869
        %v1871 = vshll.u32 2131351028, %v1862
        %v1872 = vshrl.u32 2102212464, %v1863
        %v1873 = vor.u32 %v1871, %v1872
        %v1874 = vshll.u32 2102212464, %v1862
        %v1875 = vshrl.u32 920167782, %v1863
        %v1876 = vor.u32 %v1874, %v1875
        %v1877 = vshll.u32 920167782, %v1862
        %v1878 = vshrl.u32 1326507024, %v1863
        %v1879 = vor.u32 %v1877, %v1878
        %vm1880 = vcmp.lt.s32.totalorder %v1861, 1
        %vm1881 = vcmp.lt.s32.totalorder %v1861, 2
        %vm1882 = vcmp.lt.s32.totalorder %v1861, 3
        %vm1883 = vcmp.lt.s32.totalorder %v1861, 4
        %v1884 = vsel %vm1880, %v1864, %v1867
        %v1885 = vsel %vm1883, %v1873, 2102212464
        %v1886 = vsel %vm1882, %v1870, %v1885
        %v1887 = vsel %vm1881, %v1884, %v1886
        %v1888 = vsel %vm1880, %v1867, %v1870
        %v1889 = vsel %vm1883, %v1876, 920167782
        %v1890 = vsel %vm1882, %v1873, %v1889
        %v1891 = vsel %vm1881, %v1888, %v1890
        %v1892 = vsel %vm1880, %v1870, %v1873
        %v1893 = vsel %vm1883, %v1879, 1326507024
        %v1894 = vsel %vm1882, %v1876, %v1893
        %v1895 = vsel %vm1881, %v1892, %v1894
        %v1896 = vshll.u32 %v1856, 8
        %v1897 = vand.u32 %v1896, 65535
        %v1898 = vshrl.u32 %v1896, 16
        %v1899 = vand.u32 %v1895, 65535
        %v1900 = vshrl.u32 %v1895, 16
        %v1901 = vmul.u32 %v1897, %v1899
        %v1902 = vmul.u32 %v1897, %v1900
        %v1903 = vmul.u32 %v1898, %v1899
        %v1904 = vmul.u32 %v1898, %v1900
        %v1905 = vshll.u32 %v1902, 16
        %v1906 = vshrl.u32 %v1902, 16
        %v1907 = vshll.u32 %v1903, 16
        %v1908 = vshrl.u32 %v1903, 16
        %vm1909 = vc.u32 %v1901, %v1905
        %v1910 = vsel %vm1909, 1, 0
        %v1911 = vadd.s32 %v1901, %v1905
        %v1912 = vadd.s32 %v1904, %v1910
        %vm1913 = vc.u32 %v1911, %v1907
        %v1914 = vsel %vm1913, 1, 0
        %v1915 = vadd.s32 %v1911, %v1907
        %v1916 = vadd.s32 %v1912, %v1914
        %v1917 = vadd.s32 %v1916, %v1906
        %v1918 = vadd.s32 %v1917, %v1908
        %v1919 = vand.u32 %v1896, 65535
        %v1920 = vshrl.u32 %v1896, 16
        %v1921 = vand.u32 %v1891, 65535
        %v1922 = vshrl.u32 %v1891, 16
        %v1923 = vmul.u32 %v1919, %v1921
        %v1924 = vmul.u32 %v1919, %v1922
        %v1925 = vmul.u32 %v1920, %v1921
        %v1926 = vmul.u32 %v1920, %v1922
        %v1927 = vshll.u32 %v1924, 16
        %v1928 = vshrl.u32 %v1924, 16
        %v1929 = vshll.u32 %v1925, 16
        %v1930 = vshrl.u32 %v1925, 16
        %vm1931 = vc.u32 %v1923, %v1927
        %v1932 = vsel %vm1931, 1, 0
        %v1933 = vadd.s32 %v1923, %v1927
        %v1934 = vadd.s32 %v1926, %v1932
        %vm1935 = vc.u32 %v1933, %v1929
        %v1936 = vsel %vm1935, 1, 0
        %v1937 = vadd.s32 %v1933, %v1929
        %v1938 = vadd.s32 %v1934, %v1936
        %v1939 = vadd.s32 %v1938, %v1928
        %v1940 = vadd.s32 %v1939, %v1930
        %v1941 = vmul.u32 %v1896, %v1887
        %v1942 = vadd.s32 %v1918, %v1937
        %vm1943 = vc.u32 %v1918, %v1937
        %v1944 = vadd.s32 %v1940, 1
        %v1945 = vsel %vm1943, %v1944, %v1940
        %v1946 = vadd.s32 %v1941, %v1945
        %v1947 = vadd.s32 %v1946, 536870912
        %v1948 = vshrl.u32 %v1947, 30
        %v1949 = vshll.u32 %v1948, 30
        %v1950 = vsub.s32 %v1946, %v1949
        %vm1951 = vcmp.lt.s32.totalorder %v1950, 0
        %v1952 = vsub.s32 0, %v1950
        %v1953 = vsel %vm1951, %v1952, %v1950
        %v1954 = vclz %v1953
        %v1955 = vsub.s32 %v1954, 2
        %vm1956 = vcmp.gt.s32.totalorder 0, %v1955
        %v1957 = vsel %vm1956, 0, %v1955
        %v1958 = vsub.s32 32, %v1957
        %v1959 = vshll.u32 %v1950, %v1957
        %v1960 = vshrl.u32 %v1942, %v1958
        %v1961 = vor.u32 %v1959, %v1960
        %v1962 = vsub.s32 4294967266, %v1957
        %v1963 = vadd.s32 %v1962, 127
        %v1964 = vshll.u32 %v1963, 23
        %v1965 = vor.u32 4788187, %v1964
        %v1966 = vand.u32 2147483647, %v1965
        %v1968 = vcvt.s32.f32 %v1961
        %v1969 = vmul.f32 %v1968, %v1966
        %v1970 = vxor.u32 %v1969, 2147483648
        %v1971 = vsel %vm1850, %v1970, %v1969
        %v1972 = vsub.s32 4, %v1948
        %v1973 = vsel %vm1850, %v1972, %v1948
        %v1974 = vsel %vm1849, %v1046, %v1971
        %v1975 = vsel %vm1849, 0, %v1973
        %v1976 = vmul.f32 %v1974, %v1974
        %v1977 = vmul.f32 %v1976, -0.001358992
        %v1978 = vadd.f32 %v1977, 0.041655596
        %v1979 = vmul.f32 %v1976, %v1978
        %v1980 = vadd.f32 %v1979, -0.4999988
        %v1981 = vmul.f32 %v1976, %v1980
        %v1982 = vadd.f32 1.0, %v1981
        %v1983 = vmul.f32 %v1974, %v1974
        %v1984 = vmul.f32 %v1983, -0.00019511016
        %v1985 = vadd.f32 %v1984, 0.008332121
        %v1986 = vmul.f32 %v1983, %v1985
        %v1987 = vadd.f32 %v1986, -0.16666654
        %v1988 = vmul.f32 %v1983, %v1987
        %v1989 = vadd.f32 %v1988, 1.0
        %v1990 = vmul.f32 %v1989, %v1974
        %vm1991 = vweird.f32 %v1046
        %v1992 = vand.u32 %v1975, 3
        %vm1993 = vcmp.lt.s32.totalorder %v1992, 2
        %vm1994 = vcmp.eq.s32.totalorder %v1992, 0
        %v1995 = vxor.u32 %v1990, 2147483648
        %v1996 = vsel %vm1994, %v1982, %v1995
        %vm1997 = vcmp.eq.s32.totalorder %v1992, 2
        %v1998 = vxor.u32 %v1982, 2147483648
        %v1999 = vsel %vm1997, %v1998, %v1990
        %v2000 = vsel %vm1993, %v1996, %v1999
        %v2001 = vsel %vm1991, nan, %v2000
        %v2002 = vand.u32 2147483647, %v1060
        %vm2003 = vcmp.le.f32.partialorder %v2002, 0.7853982
        %vm2004 = vcmp.lt.s32.totalorder %v1060, 0
        %v2005 = vand.u32 %v1060, 2139095040
        %v2006 = vshrl.u32 %v2005, 23
        %v2007 = vsub.s32 %v2006, 127
        %v2008 = vand.u32 2147483647, %v1060
        %v2009 = vand.u32 %v2008, 8388607
        %v2010 = vor.u32 %v2009, 8388608
        %v2011 = vsub.s32 0, %v2010
        %v2012 = vadd.s32 %v2007, 1
        %vm2013 = vcmp.gt.s32.totalorder %v2012, 0
        %v2014 = vsel %vm2013, %v2012, 0
        %v2015 = vshrl.u32 %v2014, 5
        %v2016 = vand.u32 %v2014, 31
        %v2017 = vsub.s32 32, %v2016
        %v2018 = vshrl.u32 683565275, %v2017
        %v2019 = vshll.u32 683565275, %v2016
        %v2020 = vshrl.u32 2475754826, %v2017
        %v2021 = vor.u32 %v2019, %v2020
        %v2022 = vshll.u32 2475754826, %v2016
        %v2023 = vshrl.u32 2131351028, %v2017
        %v2024 = vor.u32 %v2022, %v2023
        %v2025 = vshll.u32 2131351028, %v2016
        %v2026 = vshrl.u32 2102212464, %v2017
        %v2027 = vor.u32 %v2025, %v2026
        %v2028 = vshll.u32 2102212464, %v2016
        %v2029 = vshrl.u32 920167782, %v2017
        %v2030 = vor.u32 %v2028, %v2029
        %v2031 = vshll.u32 920167782, %v2016
        %v2032 = vshrl.u32 1326507024, %v2017
        %v2033 = vor.u32 %v2031, %v2032
        %vm2034 = vcmp.lt.s32.totalorder %v2015, 1
        %vm2035 = vcmp.lt.s32.totalorder %v2015, 2
        %vm2036 = vcmp.lt.s32.totalorder %v2015, 3
        %vm2037 = vcmp.lt.s32.totalorder %v2015, 4
        %v2038 = vsel %vm2034, %v2018, %v2021
        %v2039 = vsel %vm2037, %v2027, 2102212464
        %v2040 = vsel %vm2036, %v2024, %v2039
        %v2041 = vsel %vm2035, %v2038, %v2040
        %v2042 = vsel %vm2034, %v2021, %v2024
        %v2043 = vsel %vm2037, %v2030, 920167782
        %v2044 = vsel %vm2036, %v2027, %v2043
        %v2045 = vsel %vm2035, %v2042, %v2044
        %v2046 = vsel %vm2034, %v2024, %v2027
        %v2047 = vsel %vm2037, %v2033, 1326507024
        %v2048 = vsel %vm2036, %v2030, %v2047
        %v2049 = vsel %vm2035, %v2046, %v2048
        %v2050 = vshll.u32 %v2010, 8
        %v2051 = vand.u32 %v2050, 65535
        %v2052 = vshrl.u32 %v2050, 16
        %v2053 = vand.u32 %v2049, 65535
        %v2054 = vshrl.u32 %v2049, 16
        %v2055 = vmul.u32 %v2051, %v2053
        %v2056 = vmul.u32 %v2051, %v2054
        %v2057 = vmul.u32 %v2052, %v2053
        %v2058 = vmul.u32 %v2052, %v2054
        %v2059 = vshll.u32 %v2056, 16
        %v2060 = vshrl.u32 %v2056, 16
        %v2061 = vshll.u32 %v2057, 16
        %v2062 = vshrl.u32 %v2057, 16
        %vm2063 = vc.u32 %v2055, %v2059
        %v2064 = vsel %vm2063, 1, 0
        %v2065 = vadd.s32 %v2055, %v2059
        %v2066 = vadd.s32 %v2058, %v2064
        %vm2067 = vc.u32 %v2065, %v2061
        %v2068 = vsel %vm2067, 1, 0
        %v2069 = vadd.s32 %v2065, %v2061
        %v2070 = vadd.s32 %v2066, %v2068
        %v2071 = vadd.s32 %v2070, %v2060
        %v2072 = vadd.s32 %v2071, %v2062
        %v2073 = vand.u32 %v2050, 65535
        %v2074 = vshrl.u32 %v2050, 16
        %v2075 = vand.u32 %v2045, 65535
        %v2076 = vshrl.u32 %v2045, 16
        %v2077 = vmul.u32 %v2073, %v2075
        %v2078 = vmul.u32 %v2073, %v2076
        %v2079 = vmul.u32 %v2074, %v2075
        %v2080 = vmul.u32 %v2074, %v2076
        %v2081 = vshll.u32 %v2078, 16
        %v2082 = vshrl.u32 %v2078, 16
        %v2083 = vshll.u32 %v2079, 16
        %v2084 = vshrl.u32 %v2079, 16
        %vm2085 = vc.u32 %v2077, %v2081
        %v2086 = vsel %vm2085, 1, 0
        %v2087 = vadd.s32 %v2077, %v2081
        %v2088 = vadd.s32 %v2080, %v2086
        %vm2089 = vc.u32 %v2087, %v2083
        %v2090 = vsel %vm2089, 1, 0
        %v2091 = vadd.s32 %v2087, %v2083
        %v2092 = vadd.s32 %v2088, %v2090
        %v2093 = vadd.s32 %v2092, %v2082
        %v2094 = vadd.s32 %v2093, %v2084
        %v2095 = vmul.u32 %v2050, %v2041
        %v2096 = vadd.s32 %v2072, %v2091
        %vm2097 = vc.u32 %v2072, %v2091
        %v2098 = vadd.s32 %v2094, 1
        %v2099 = vsel %vm2097, %v2098, %v2094
        %v2100 = vadd.s32 %v2095, %v2099
        %v2101 = vadd.s32 %v2100, 536870912
        %v2102 = vshrl.u32 %v2101, 30
        %v2103 = vshll.u32 %v2102, 30
        %v2104 = vsub.s32 %v2100, %v2103
        %vm2105 = vcmp.lt.s32.totalorder %v2104, 0
        %v2106 = vsub.s32 0, %v2104
        %v2107 = vsel %vm2105, %v2106, %v2104
        %v2108 = vclz %v2107
        %v2109 = vsub.s32 %v2108, 2
        %vm2110 = vcmp.gt.s32.totalorder 0, %v2109
        %v2111 = vsel %vm2110, 0, %v2109
        %v2112 = vsub.s32 32, %v2111
        %v2113 = vshll.u32 %v2104, %v2111
        %v2114 = vshrl.u32 %v2096, %v2112
        %v2115 = vor.u32 %v2113, %v2114
        %v2116 = vsub.s32 4294967266, %v2111
        %v2117 = vadd.s32 %v2116, 127
        %v2118 = vshll.u32 %v2117, 23
        %v2119 = vor.u32 4788187, %v2118
        %v2120 = vand.u32 2147483647, %v2119
        %v2122 = vcvt.s32.f32 %v2115
        %v2123 = vmul.f32 %v2122, %v2120
        %v2124 = vxor.u32 %v2123, 2147483648
        %v2125 = vsel %vm2004, %v2124, %v2123
        %v2126 = vsub.s32 4, %v2102
        %v2127 = vsel %vm2004, %v2126, %v2102
        %v2128 = vsel %vm2003, %v1060, %v2125
        %v2129 = vsel %vm2003, 0, %v2127
        %v2130 = vmul.f32 %v2128, %v2128
        %v2131 = vmul.f32 %v2130, -0.001358992
        %v2132 = vadd.f32 %v2131, 0.041655596
        %v2133 = vmul.f32 %v2130, %v2132
        %v2134 = vadd.f32 %v2133, -0.4999988
        %v2135 = vmul.f32 %v2130, %v2134
        %v2136 = vadd.f32 1.0, %v2135
        %v2137 = vmul.f32 %v2128, %v2128
        %v2138 = vmul.f32 %v2137, -0.00019511016
        %v2139 = vadd.f32 %v2138, 0.008332121
        %v2140 = vmul.f32 %v2137, %v2139
        %v2141 = vadd.f32 %v2140, -0.16666654
        %v2142 = vmul.f32 %v2137, %v2141
        %v2143 = vadd.f32 %v2142, 1.0
        %v2144 = vmul.f32 %v2143, %v2128
        %vm2145 = vweird.f32 %v1060
        %v2146 = vand.u32 %v2129, 3
        %vm2147 = vcmp.lt.s32.totalorder %v2146, 2
        %vm2148 = vcmp.eq.s32.totalorder %v2146, 0
        %v2149 = vxor.u32 %v2144, 2147483648
        %v2150 = vsel %vm2148, %v2136, %v2149
        %vm2151 = vcmp.eq.s32.totalorder %v2146, 2
        %v2152 = vxor.u32 %v2136, 2147483648
        %v2153 = vsel %vm2151, %v2152, %v2144
        %v2154 = vsel %vm2147, %v2150, %v2153
        %v2155 = vsel %vm2145, nan, %v2154
        %v2156 = vand.u32 2147483647, %v1074
        %vm2157 = vcmp.le.f32.partialorder %v2156, 0.7853982
        %vm2158 = vcmp.lt.s32.totalorder %v1074, 0
        %v2159 = vand.u32 %v1074, 2139095040
        %v2160 = vshrl.u32 %v2159, 23
        %v2161 = vsub.s32 %v2160, 127
        %v2162 = vand.u32 2147483647, %v1074
        %v2163 = vand.u32 %v2162, 8388607
        %v2164 = vor.u32 %v2163, 8388608
        %v2165 = vsub.s32 0, %v2164
        %v2166 = vadd.s32 %v2161, 1
        %vm2167 = vcmp.gt.s32.totalorder %v2166, 0
        %v2168 = vsel %vm2167, %v2166, 0
        %v2169 = vshrl.u32 %v2168, 5
        %v2170 = vand.u32 %v2168, 31
        %v2171 = vsub.s32 32, %v2170
        %v2172 = vshrl.u32 683565275, %v2171
        %v2173 = vshll.u32 683565275, %v2170
        %v2174 = vshrl.u32 2475754826, %v2171
        %v2175 = vor.u32 %v2173, %v2174
        %v2176 = vshll.u32 2475754826, %v2170
        %v2177 = vshrl.u32 2131351028, %v2171
        %v2178 = vor.u32 %v2176, %v2177
        %v2179 = vshll.u32 2131351028, %v2170
        %v2180 = vshrl.u32 2102212464, %v2171
        %v2181 = vor.u32 %v2179, %v2180
        %v2182 = vshll.u32 2102212464, %v2170
        %v2183 = vshrl.u32 920167782, %v2171
        %v2184 = vor.u32 %v2182, %v2183
        %v2185 = vshll.u32 920167782, %v2170
        %v2186 = vshrl.u32 1326507024, %v2171
        %v2187 = vor.u32 %v2185, %v2186
        %vm2188 = vcmp.lt.s32.totalorder %v2169, 1
        %vm2189 = vcmp.lt.s32.totalorder %v2169, 2
        %vm2190 = vcmp.lt.s32.totalorder %v2169, 3
        %vm2191 = vcmp.lt.s32.totalorder %v2169, 4
        %v2192 = vsel %vm2188, %v2172, %v2175
        %v2193 = vsel %vm2191, %v2181, 2102212464
        %v2194 = vsel %vm2190, %v2178, %v2193
        %v2195 = vsel %vm2189, %v2192, %v2194
        %v2196 = vsel %vm2188, %v2175, %v2178
        %v2197 = vsel %vm2191, %v2184, 920167782
        %v2198 = vsel %vm2190, %v2181, %v2197
        %v2199 = vsel %vm2189, %v2196, %v2198
        %v2200 = vsel %vm2188, %v2178, %v2181
        %v2201 = vsel %vm2191, %v2187, 1326507024
        %v2202 = vsel %vm2190, %v2184, %v2201
        %v2203 = vsel %vm2189, %v2200, %v2202
        %v2204 = vshll.u32 %v2164, 8
        %v2205 = vand.u32 %v2204, 65535
        %v2206 = vshrl.u32 %v2204, 16
        %v2207 = vand.u32 %v2203, 65535
        %v2208 = vshrl.u32 %v2203, 16
        %v2209 = vmul.u32 %v2205, %v2207
        %v2210 = vmul.u32 %v2205, %v2208
        %v2211 = vmul.u32 %v2206, %v2207
        %v2212 = vmul.u32 %v2206, %v2208
        %v2213 = vshll.u32 %v2210, 16
        %v2214 = vshrl.u32 %v2210, 16
        %v2215 = vshll.u32 %v2211, 16
        %v2216 = vshrl.u32 %v2211, 16
        %vm2217 = vc.u32 %v2209, %v2213
        %v2218 = vsel %vm2217, 1, 0
        %v2219 = vadd.s32 %v2209, %v2213
        %v2220 = vadd.s32 %v2212, %v2218
        %vm2221 = vc.u32 %v2219, %v2215
        %v2222 = vsel %vm2221, 1, 0
        %v2223 = vadd.s32 %v2219, %v2215
        %v2224 = vadd.s32 %v2220, %v2222
        %v2225 = vadd.s32 %v2224, %v2214
        %v2226 = vadd.s32 %v2225, %v2216
        %v2227 = vand.u32 %v2204, 65535
        %v2228 = vshrl.u32 %v2204, 16
        %v2229 = vand.u32 %v2199, 65535
        %v2230 = vshrl.u32 %v2199, 16
        %v2231 = vmul.u32 %v2227, %v2229
        %v2232 = vmul.u32 %v2227, %v2230
        %v2233 = vmul.u32 %v2228, %v2229
        %v2234 = vmul.u32 %v2228, %v2230
        %v2235 = vshll.u32 %v2232, 16
        %v2236 = vshrl.u32 %v2232, 16
        %v2237 = vshll.u32 %v2233, 16
        %v2238 = vshrl.u32 %v2233, 16
        %vm2239 = vc.u32 %v2231, %v2235
        %v2240 = vsel %vm2239, 1, 0
        %v2241 = vadd.s32 %v2231, %v2235
        %v2242 = vadd.s32 %v2234, %v2240
        %vm2243 = vc.u32 %v2241, %v2237
        %v2244 = vsel %vm2243, 1, 0
        %v2245 = vadd.s32 %v2241, %v2237
        %v2246 = vadd.s32 %v2242, %v2244
        %v2247 = vadd.s32 %v2246, %v2236
        %v2248 = vadd.s32 %v2247, %v2238
        %v2249 = vmul.u32 %v2204, %v2195
        %v2250 = vadd.s32 %v2226, %v2245
        %vm2251 = vc.u32 %v2226, %v2245
        %v2252 = vadd.s32 %v2248, 1
        %v2253 = vsel %vm2251, %v2252, %v2248
        %v2254 = vadd.s32 %v2249, %v2253
        %v2255 = vadd.s32 %v2254, 536870912
        %v2256 = vshrl.u32 %v2255, 30
        %v2257 = vshll.u32 %v2256, 30
        %v2258 = vsub.s32 %v2254, %v2257
        %vm2259 = vcmp.lt.s32.totalorder %v2258, 0
        %v2260 = vsub.s32 0, %v2258
        %v2261 = vsel %vm2259, %v2260, %v2258
        %v2262 = vclz %v2261
        %v2263 = vsub.s32 %v2262, 2
        %vm2264 = vcmp.gt.s32.totalorder 0, %v2263
        %v2265 = vsel %vm2264, 0, %v2263
        %v2266 = vsub.s32 32, %v2265
        %v2267 = vshll.u32 %v2258, %v2265
        %v2268 = vshrl.u32 %v2250, %v2266
        %v2269 = vor.u32 %v2267, %v2268
        %v2270 = vsub.s32 4294967266, %v2265
        %v2271 = vadd.s32 %v2270, 127
        %v2272 = vshll.u32 %v2271, 23
        %v2273 = vor.u32 4788187, %v2272
        %v2274 = vand.u32 2147483647, %v2273
        %v2276 = vcvt.s32.f32 %v2269
        %v2277 = vmul.f32 %v2276, %v2274
        %v2278 = vxor.u32 %v2277, 2147483648
        %v2279 = vsel %vm2158, %v2278, %v2277
        %v2280 = vsub.s32 4, %v2256
        %v2281 = vsel %vm2158, %v2280, %v2256
        %v2282 = vsel %vm2157, %v1074, %v2279
        %v2283 = vsel %vm2157, 0, %v2281
        %v2284 = vmul.f32 %v2282, %v2282
        %v2285 = vmul.f32 %v2284, -0.001358992
        %v2286 = vadd.f32 %v2285, 0.041655596
        %v2287 = vmul.f32 %v2284, %v2286
        %v2288 = vadd.f32 %v2287, -0.4999988
        %v2289 = vmul.f32 %v2284, %v2288
        %v2290 = vadd.f32 1.0, %v2289
        %v2291 = vmul.f32 %v2282, %v2282
        %v2292 = vmul.f32 %v2291, -0.00019511016
        %v2293 = vadd.f32 %v2292, 0.008332121
        %v2294 = vmul.f32 %v2291, %v2293
        %v2295 = vadd.f32 %v2294, -0.16666654
        %v2296 = vmul.f32 %v2291, %v2295
        %v2297 = vadd.f32 %v2296, 1.0
        %v2298 = vmul.f32 %v2297, %v2282
        %vm2299 = vweird.f32 %v1074
        %v2300 = vand.u32 %v2283, 3
        %vm2301 = vcmp.lt.s32.totalorder %v2300, 2
        %vm2302 = vcmp.eq.s32.totalorder %v2300, 0
        %v2303 = vxor.u32 %v2298, 2147483648
        %v2304 = vsel %vm2302, %v2290, %v2303
        %vm2305 = vcmp.eq.s32.totalorder %v2300, 2
        %v2306 = vxor.u32 %v2290, 2147483648
        %v2307 = vsel %vm2305, %v2306, %v2298
        %v2308 = vsel %vm2301, %v2304, %v2307
        %v2309 = vsel %vm2299, nan, %v2308
        %v2310 = vand.u32 2147483647, %v978
        %vm2311 = vcmp.le.f32.partialorder %v2310, 0.7853982
        %vm2312 = vcmp.lt.s32.totalorder %v978, 0
        %v2313 = vand.u32 %v978, 2139095040
        %v2314 = vshrl.u32 %v2313, 23
        %v2315 = vsub.s32 %v2314, 127
        %v2316 = vand.u32 2147483647, %v978
        %v2317 = vand.u32 %v2316, 8388607
        %v2318 = vor.u32 %v2317, 8388608
        %v2319 = vsub.s32 0, %v2318
        %v2320 = vadd.s32 %v2315, 1
        %vm2321 = vcmp.gt.s32.totalorder %v2320, 0
        %v2322 = vsel %vm2321, %v2320, 0
        %v2323 = vshrl.u32 %v2322, 5
        %v2324 = vand.u32 %v2322, 31
        %v2325 = vsub.s32 32, %v2324
        %v2326 = vshrl.u32 683565275, %v2325
        %v2327 = vshll.u32 683565275, %v2324
        %v2328 = vshrl.u32 2475754826, %v2325
        %v2329 = vor.u32 %v2327, %v2328
        %v2330 = vshll.u32 2475754826, %v2324
        %v2331 = vshrl.u32 2131351028, %v2325
        %v2332 = vor.u32 %v2330, %v2331
        %v2333 = vshll.u32 2131351028, %v2324
        %v2334 = vshrl.u32 2102212464, %v2325
        %v2335 = vor.u32 %v2333, %v2334
        %v2336 = vshll.u32 2102212464, %v2324
        %v2337 = vshrl.u32 920167782, %v2325
        %v2338 = vor.u32 %v2336, %v2337
        %v2339 = vshll.u32 920167782, %v2324
        %v2340 = vshrl.u32 1326507024, %v2325
        %v2341 = vor.u32 %v2339, %v2340
        %vm2342 = vcmp.lt.s32.totalorder %v2323, 1
        %vm2343 = vcmp.lt.s32.totalorder %v2323, 2
        %vm2344 = vcmp.lt.s32.totalorder %v2323, 3
        %vm2345 = vcmp.lt.s32.totalorder %v2323, 4
        %v2346 = vsel %vm2342, %v2326, %v2329
        %v2347 = vsel %vm2345, %v2335, 2102212464
        %v2348 = vsel %vm2344, %v2332, %v2347
        %v2349 = vsel %vm2343, %v2346, %v2348
        %v2350 = vsel %vm2342, %v2329, %v2332
        %v2351 = vsel %vm2345, %v2338, 920167782
        %v2352 = vsel %vm2344, %v2335, %v2351
        %v2353 = vsel %vm2343, %v2350, %v2352
        %v2354 = vsel %vm2342, %v2332, %v2335
        %v2355 = vsel %vm2345, %v2341, 1326507024
        %v2356 = vsel %vm2344, %v2338, %v2355
        %v2357 = vsel %vm2343, %v2354, %v2356
        %v2358 = vshll.u32 %v2318, 8
        %v2359 = vand.u32 %v2358, 65535
        %v2360 = vshrl.u32 %v2358, 16
        %v2361 = vand.u32 %v2357, 65535
        %v2362 = vshrl.u32 %v2357, 16
        %v2363 = vmul.u32 %v2359, %v2361
        %v2364 = vmul.u32 %v2359, %v2362
        %v2365 = vmul.u32 %v2360, %v2361
        %v2366 = vmul.u32 %v2360, %v2362
        %v2367 = vshll.u32 %v2364, 16
        %v2368 = vshrl.u32 %v2364, 16
        %v2369 = vshll.u32 %v2365, 16
        %v2370 = vshrl.u32 %v2365, 16
        %vm2371 = vc.u32 %v2363, %v2367
        %v2372 = vsel %vm2371, 1, 0
        %v2373 = vadd.s32 %v2363, %v2367
        %v2374 = vadd.s32 %v2366, %v2372
        %vm2375 = vc.u32 %v2373, %v2369
        %v2376 = vsel %vm2375, 1, 0
        %v2377 = vadd.s32 %v2373, %v2369
        %v2378 = vadd.s32 %v2374, %v2376
        %v2379 = vadd.s32 %v2378, %v2368
        %v2380 = vadd.s32 %v2379, %v2370
        %v2381 = vand.u32 %v2358, 65535
        %v2382 = vshrl.u32 %v2358, 16
        %v2383 = vand.u32 %v2353, 65535
        %v2384 = vshrl.u32 %v2353, 16
        %v2385 = vmul.u32 %v2381, %v2383
        %v2386 = vmul.u32 %v2381, %v2384
        %v2387 = vmul.u32 %v2382, %v2383
        %v2388 = vmul.u32 %v2382, %v2384
        %v2389 = vshll.u32 %v2386, 16
        %v2390 = vshrl.u32 %v2386, 16
        %v2391 = vshll.u32 %v2387, 16
        %v2392 = vshrl.u32 %v2387, 16
        %vm2393 = vc.u32 %v2385, %v2389
        %v2394 = vsel %vm2393, 1, 0
        %v2395 = vadd.s32 %v2385, %v2389
        %v2396 = vadd.s32 %v2388, %v2394
        %vm2397 = vc.u32 %v2395, %v2391
        %v2398 = vsel %vm2397, 1, 0
        %v2399 = vadd.s32 %v2395, %v2391
        %v2400 = vadd.s32 %v2396, %v2398
        %v2401 = vadd.s32 %v2400, %v2390
        %v2402 = vadd.s32 %v2401, %v2392
        %v2403 = vmul.u32 %v2358, %v2349
        %v2404 = vadd.s32 %v2380, %v2399
        %vm2405 = vc.u32 %v2380, %v2399
        %v2406 = vadd.s32 %v2402, 1
        %v2407 = vsel %vm2405, %v2406, %v2402
        %v2408 = vadd.s32 %v2403, %v2407
        %v2409 = vadd.s32 %v2408, 536870912
        %v2410 = vshrl.u32 %v2409, 30
        %v2411 = vshll.u32 %v2410, 30
        %v2412 = vsub.s32 %v2408, %v2411
        %vm2413 = vcmp.lt.s32.totalorder %v2412, 0
        %v2414 = vsub.s32 0, %v2412
        %v2415 = vsel %vm2413, %v2414, %v2412
        %v2416 = vclz %v2415
        %v2417 = vsub.s32 %v2416, 2
        %vm2418 = vcmp.gt.s32.totalorder 0, %v2417
        %v2419 = vsel %vm2418, 0, %v2417
        %v2420 = vsub.s32 32, %v2419
        %v2421 = vshll.u32 %v2412, %v2419
        %v2422 = vshrl.u32 %v2404, %v2420
        %v2423 = vor.u32 %v2421, %v2422
        %v2424 = vsub.s32 4294967266, %v2419
        %v2425 = vadd.s32 %v2424, 127
        %v2426 = vshll.u32 %v2425, 23
        %v2427 = vor.u32 4788187, %v2426
        %v2428 = vand.u32 2147483647, %v2427
        %v2430 = vcvt.s32.f32 %v2423
        %v2431 = vmul.f32 %v2430, %v2428
        %v2432 = vxor.u32 %v2431, 2147483648
        %v2433 = vsel %vm2312, %v2432, %v2431
        %v2434 = vsub.s32 4, %v2410
        %v2435 = vsel %vm2312, %v2434, %v2410
        %v2436 = vsel %vm2311, %v978, %v2433
        %v2437 = vsel %vm2311, 0, %v2435
        %v2438 = vmul.f32 %v2436, %v2436
        %v2439 = vmul.f32 %v2438, -0.001358992
        %v2440 = vadd.f32 %v2439, 0.041655596
        %v2441 = vmul.f32 %v2438, %v2440
        %v2442 = vadd.f32 %v2441, -0.4999988
        %v2443 = vmul.f32 %v2438, %v2442
        %v2444 = vadd.f32 1.0, %v2443
        %v2445 = vmul.f32 %v2436, %v2436
        %v2446 = vmul.f32 %v2445, -0.00019511016
        %v2447 = vadd.f32 %v2446, 0.008332121
        %v2448 = vmul.f32 %v2445, %v2447
        %v2449 = vadd.f32 %v2448, -0.16666654
        %v2450 = vmul.f32 %v2445, %v2449
        %v2451 = vadd.f32 %v2450, 1.0
        %v2452 = vmul.f32 %v2451, %v2436
        %vm2453 = vweird.f32 %v978
        %v2454 = vand.u32 %v2437, 3
        %vm2455 = vcmp.lt.s32.totalorder %v2454, 2
        %vm2456 = vcmp.eq.s32.totalorder %v2454, 0
        %v2457 = vxor.u32 %v2452, 2147483648
        %v2458 = vsel %vm2456, %v2444, %v2457
        %vm2459 = vcmp.eq.s32.totalorder %v2454, 2
        %v2460 = vxor.u32 %v2444, 2147483648
        %v2461 = vsel %vm2459, %v2460, %v2452
        %v2462 = vsel %vm2455, %v2458, %v2461
        %v2463 = vsel %vm2453, nan, %v2462
        %v2464 = vand.u32 2147483647, %v992
        %vm2465 = vcmp.le.f32.partialorder %v2464, 0.7853982
        %vm2466 = vcmp.lt.s32.totalorder %v992, 0
        %v2467 = vand.u32 %v992, 2139095040
        %v2468 = vshrl.u32 %v2467, 23
        %v2469 = vsub.s32 %v2468, 127
        %v2470 = vand.u32 2147483647, %v992
        %v2471 = vand.u32 %v2470, 8388607
        %v2472 = vor.u32 %v2471, 8388608
        %v2473 = vsub.s32 0, %v2472
        %v2474 = vadd.s32 %v2469, 1
        %vm2475 = vcmp.gt.s32.totalorder %v2474, 0
        %v2476 = vsel %vm2475, %v2474, 0
        %v2477 = vshrl.u32 %v2476, 5
        %v2478 = vand.u32 %v2476, 31
        %v2479 = vsub.s32 32, %v2478
        %v2480 = vshrl.u32 683565275, %v2479
        %v2481 = vshll.u32 683565275, %v2478
        %v2482 = vshrl.u32 2475754826, %v2479
        %v2483 = vor.u32 %v2481, %v2482
        %v2484 = vshll.u32 2475754826, %v2478
        %v2485 = vshrl.u32 2131351028, %v2479
        %v2486 = vor.u32 %v2484, %v2485
        %v2487 = vshll.u32 2131351028, %v2478
        %v2488 = vshrl.u32 2102212464, %v2479
        %v2489 = vor.u32 %v2487, %v2488
        %v2490 = vshll.u32 2102212464, %v2478
        %v2491 = vshrl.u32 920167782, %v2479
        %v2492 = vor.u32 %v2490, %v2491
        %v2493 = vshll.u32 920167782, %v2478
        %v2494 = vshrl.u32 1326507024, %v2479
        %v2495 = vor.u32 %v2493, %v2494
        %vm2496 = vcmp.lt.s32.totalorder %v2477, 1
        %vm2497 = vcmp.lt.s32.totalorder %v2477, 2
        %vm2498 = vcmp.lt.s32.totalorder %v2477, 3
        %vm2499 = vcmp.lt.s32.totalorder %v2477, 4
        %v2500 = vsel %vm2496, %v2480, %v2483
        %v2501 = vsel %vm2499, %v2489, 2102212464
        %v2502 = vsel %vm2498, %v2486, %v2501
        %v2503 = vsel %vm2497, %v2500, %v2502
        %v2504 = vsel %vm2496, %v2483, %v2486
        %v2505 = vsel %vm2499, %v2492, 920167782
        %v2506 = vsel %vm2498, %v2489, %v2505
        %v2507 = vsel %vm2497, %v2504, %v2506
        %v2508 = vsel %vm2496, %v2486, %v2489
        %v2509 = vsel %vm2499, %v2495, 1326507024
        %v2510 = vsel %vm2498, %v2492, %v2509
        %v2511 = vsel %vm2497, %v2508, %v2510
        %v2512 = vshll.u32 %v2472, 8
        %v2513 = vand.u32 %v2512, 65535
        %v2514 = vshrl.u32 %v2512, 16
        %v2515 = vand.u32 %v2511, 65535
        %v2516 = vshrl.u32 %v2511, 16
        %v2517 = vmul.u32 %v2513, %v2515
        %v2518 = vmul.u32 %v2513, %v2516
        %v2519 = vmul.u32 %v2514, %v2515
        %v2520 = vmul.u32 %v2514, %v2516
        %v2521 = vshll.u32 %v2518, 16
        %v2522 = vshrl.u32 %v2518, 16
        %v2523 = vshll.u32 %v2519, 16
        %v2524 = vshrl.u32 %v2519, 16
        %vm2525 = vc.u32 %v2517, %v2521
        %v2526 = vsel %vm2525, 1, 0
        %v2527 = vadd.s32 %v2517, %v2521
        %v2528 = vadd.s32 %v2520, %v2526
        %vm2529 = vc.u32 %v2527, %v2523
        %v2530 = vsel %vm2529, 1, 0
        %v2531 = vadd.s32 %v2527, %v2523
        %v2532 = vadd.s32 %v2528, %v2530
        %v2533 = vadd.s32 %v2532, %v2522
        %v2534 = vadd.s32 %v2533, %v2524
        %v2535 = vand.u32 %v2512, 65535
        %v2536 = vshrl.u32 %v2512, 16
        %v2537 = vand.u32 %v2507, 65535
        %v2538 = vshrl.u32 %v2507, 16
        %v2539 = vmul.u32 %v2535, %v2537
        %v2540 = vmul.u32 %v2535, %v2538
        %v2541 = vmul.u32 %v2536, %v2537
        %v2542 = vmul.u32 %v2536, %v2538
        %v2543 = vshll.u32 %v2540, 16
        %v2544 = vshrl.u32 %v2540, 16
        %v2545 = vshll.u32 %v2541, 16
        %v2546 = vshrl.u32 %v2541, 16
        %vm2547 = vc.u32 %v2539, %v2543
        %v2548 = vsel %vm2547, 1, 0
        %v2549 = vadd.s32 %v2539, %v2543
        %v2550 = vadd.s32 %v2542, %v2548
        %vm2551 = vc.u32 %v2549, %v2545
        %v2552 = vsel %vm2551, 1, 0
        %v2553 = vadd.s32 %v2549, %v2545
        %v2554 = vadd.s32 %v2550, %v2552
        %v2555 = vadd.s32 %v2554, %v2544
        %v2556 = vadd.s32 %v2555, %v2546
        %v2557 = vmul.u32 %v2512, %v2503
        %v2558 = vadd.s32 %v2534, %v2553
        %vm2559 = vc.u32 %v2534, %v2553
        %v2560 = vadd.s32 %v2556, 1
        %v2561 = vsel %vm2559, %v2560, %v2556
        %v2562 = vadd.s32 %v2557, %v2561
        %v2563 = vadd.s32 %v2562, 536870912
        %v2564 = vshrl.u32 %v2563, 30
        %v2565 = vshll.u32 %v2564, 30
        %v2566 = vsub.s32 %v2562, %v2565
        %vm2567 = vcmp.lt.s32.totalorder %v2566, 0
        %v2568 = vsub.s32 0, %v2566
        %v2569 = vsel %vm2567, %v2568, %v2566
        %v2570 = vclz %v2569
        %v2571 = vsub.s32 %v2570, 2
        %vm2572 = vcmp.gt.s32.totalorder 0, %v2571
        %v2573 = vsel %vm2572, 0, %v2571
        %v2574 = vsub.s32 32, %v2573
        %v2575 = vshll.u32 %v2566, %v2573
        %v2576 = vshrl.u32 %v2558, %v2574
        %v2577 = vor.u32 %v2575, %v2576
        %v2578 = vsub.s32 4294967266, %v2573
        %v2579 = vadd.s32 %v2578, 127
        %v2580 = vshll.u32 %v2579, 23
        %v2581 = vor.u32 4788187, %v2580
        %v2582 = vand.u32 2147483647, %v2581
        %v2584 = vcvt.s32.f32 %v2577
        %v2585 = vmul.f32 %v2584, %v2582
        %v2586 = vxor.u32 %v2585, 2147483648
        %v2587 = vsel %vm2466, %v2586, %v2585
        %v2588 = vsub.s32 4, %v2564
        %v2589 = vsel %vm2466, %v2588, %v2564
        %v2590 = vsel %vm2465, %v992, %v2587
        %v2591 = vsel %vm2465, 0, %v2589
        %v2592 = vmul.f32 %v2590, %v2590
        %v2593 = vmul.f32 %v2592, -0.001358992
        %v2594 = vadd.f32 %v2593, 0.041655596
        %v2595 = vmul.f32 %v2592, %v2594
        %v2596 = vadd.f32 %v2595, -0.4999988
        %v2597 = vmul.f32 %v2592, %v2596
        %v2598 = vadd.f32 1.0, %v2597
        %v2599 = vmul.f32 %v2590, %v2590
        %v2600 = vmul.f32 %v2599, -0.00019511016
        %v2601 = vadd.f32 %v2600, 0.008332121
        %v2602 = vmul.f32 %v2599, %v2601
        %v2603 = vadd.f32 %v2602, -0.16666654
        %v2604 = vmul.f32 %v2599, %v2603
        %v2605 = vadd.f32 %v2604, 1.0
        %v2606 = vmul.f32 %v2605, %v2590
        %vm2607 = vweird.f32 %v992
        %v2608 = vand.u32 %v2591, 3
        %vm2609 = vcmp.lt.s32.totalorder %v2608, 2
        %vm2610 = vcmp.eq.s32.totalorder %v2608, 0
        %v2611 = vxor.u32 %v2606, 2147483648
        %v2612 = vsel %vm2610, %v2598, %v2611
        %vm2613 = vcmp.eq.s32.totalorder %v2608, 2
        %v2614 = vxor.u32 %v2598, 2147483648
        %v2615 = vsel %vm2613, %v2614, %v2606
        %v2616 = vsel %vm2609, %v2612, %v2615
        %v2617 = vsel %vm2607, nan, %v2616
        %v2618 = vand.u32 2147483647, %v1006
        %vm2619 = vcmp.le.f32.partialorder %v2618, 0.7853982
        %vm2620 = vcmp.lt.s32.totalorder %v1006, 0
        %v2621 = vand.u32 %v1006, 2139095040
        %v2622 = vshrl.u32 %v2621, 23
        %v2623 = vsub.s32 %v2622, 127
        %v2624 = vand.u32 2147483647, %v1006
        %v2625 = vand.u32 %v2624, 8388607
        %v2626 = vor.u32 %v2625, 8388608
        %v2627 = vsub.s32 0, %v2626
        %v2628 = vadd.s32 %v2623, 1
        %vm2629 = vcmp.gt.s32.totalorder %v2628, 0
        %v2630 = vsel %vm2629, %v2628, 0
        %v2631 = vshrl.u32 %v2630, 5
        %v2632 = vand.u32 %v2630, 31
        %v2633 = vsub.s32 32, %v2632
        %v2634 = vshrl.u32 683565275, %v2633
        %v2635 = vshll.u32 683565275, %v2632
        %v2636 = vshrl.u32 2475754826, %v2633
        %v2637 = vor.u32 %v2635, %v2636
        %v2638 = vshll.u32 2475754826, %v2632
        %v2639 = vshrl.u32 2131351028, %v2633
        %v2640 = vor.u32 %v2638, %v2639
        %v2641 = vshll.u32 2131351028, %v2632
        %v2642 = vshrl.u32 2102212464, %v2633
        %v2643 = vor.u32 %v2641, %v2642
        %v2644 = vshll.u32 2102212464, %v2632
        %v2645 = vshrl.u32 920167782, %v2633
        %v2646 = vor.u32 %v2644, %v2645
        %v2647 = vshll.u32 920167782, %v2632
        %v2648 = vshrl.u32 1326507024, %v2633
        %v2649 = vor.u32 %v2647, %v2648
        %vm2650 = vcmp.lt.s32.totalorder %v2631, 1
        %vm2651 = vcmp.lt.s32.totalorder %v2631, 2
        %vm2652 = vcmp.lt.s32.totalorder %v2631, 3
        %vm2653 = vcmp.lt.s32.totalorder %v2631, 4
        %v2654 = vsel %vm2650, %v2634, %v2637
        %v2655 = vsel %vm2653, %v2643, 2102212464
        %v2656 = vsel %vm2652, %v2640, %v2655
        %v2657 = vsel %vm2651, %v2654, %v2656
        %v2658 = vsel %vm2650, %v2637, %v2640
        %v2659 = vsel %vm2653, %v2646, 920167782
        %v2660 = vsel %vm2652, %v2643, %v2659
        %v2661 = vsel %vm2651, %v2658, %v2660
        %v2662 = vsel %vm2650, %v2640, %v2643
        %v2663 = vsel %vm2653, %v2649, 1326507024
        %v2664 = vsel %vm2652, %v2646, %v2663
        %v2665 = vsel %vm2651, %v2662, %v2664
        %v2666 = vshll.u32 %v2626, 8
        %v2667 = vand.u32 %v2666, 65535
        %v2668 = vshrl.u32 %v2666, 16
        %v2669 = vand.u32 %v2665, 65535
        %v2670 = vshrl.u32 %v2665, 16
        %v2671 = vmul.u32 %v2667, %v2669
        %v2672 = vmul.u32 %v2667, %v2670
        %v2673 = vmul.u32 %v2668, %v2669
        %v2674 = vmul.u32 %v2668, %v2670
        %v2675 = vshll.u32 %v2672, 16
        %v2676 = vshrl.u32 %v2672, 16
        %v2677 = vshll.u32 %v2673, 16
        %v2678 = vshrl.u32 %v2673, 16
        %vm2679 = vc.u32 %v2671, %v2675
        %v2680 = vsel %vm2679, 1, 0
        %v2681 = vadd.s32 %v2671, %v2675
        %v2682 = vadd.s32 %v2674, %v2680
        %vm2683 = vc.u32 %v2681, %v2677
        %v2684 = vsel %vm2683, 1, 0
        %v2685 = vadd.s32 %v2681, %v2677
        %v2686 = vadd.s32 %v2682, %v2684
        %v2687 = vadd.s32 %v2686, %v2676
        %v2688 = vadd.s32 %v2687, %v2678
        %v2689 = vand.u32 %v2666, 65535
        %v2690 = vshrl.u32 %v2666, 16
        %v2691 = vand.u32 %v2661, 65535
        %v2692 = vshrl.u32 %v2661, 16
        %v2693 = vmul.u32 %v2689, %v2691
        %v2694 = vmul.u32 %v2689, %v2692
        %v2695 = vmul.u32 %v2690, %v2691
        %v2696 = vmul.u32 %v2690, %v2692
        %v2697 = vshll.u32 %v2694, 16
        %v2698 = vshrl.u32 %v2694, 16
        %v2699 = vshll.u32 %v2695, 16
        %v2700 = vshrl.u32 %v2695, 16
        %vm2701 = vc.u32 %v2693, %v2697
        %v2702 = vsel %vm2701, 1, 0
        %v2703 = vadd.s32 %v2693, %v2697
        %v2704 = vadd.s32 %v2696, %v2702
        %vm2705 = vc.u32 %v2703, %v2699
        %v2706 = vsel %vm2705, 1, 0
        %v2707 = vadd.s32 %v2703, %v2699
        %v2708 = vadd.s32 %v2704, %v2706
        %v2709 = vadd.s32 %v2708, %v2698
        %v2710 = vadd.s32 %v2709, %v2700
        %v2711 = vmul.u32 %v2666, %v2657
        %v2712 = vadd.s32 %v2688, %v2707
        %vm2713 = vc.u32 %v2688, %v2707
        %v2714 = vadd.s32 %v2710, 1
        %v2715 = vsel %vm2713, %v2714, %v2710
        %v2716 = vadd.s32 %v2711, %v2715
        %v2717 = vadd.s32 %v2716, 536870912
        %v2718 = vshrl.u32 %v2717, 30
        %v2719 = vshll.u32 %v2718, 30
        %v2720 = vsub.s32 %v2716, %v2719
        %vm2721 = vcmp.lt.s32.totalorder %v2720, 0
        %v2722 = vsub.s32 0, %v2720
        %v2723 = vsel %vm2721, %v2722, %v2720
        %v2724 = vclz %v2723
        %v2725 = vsub.s32 %v2724, 2
        %vm2726 = vcmp.gt.s32.totalorder 0, %v2725
        %v2727 = vsel %vm2726, 0, %v2725
        %v2728 = vsub.s32 32, %v2727
        %v2729 = vshll.u32 %v2720, %v2727
        %v2730 = vshrl.u32 %v2712, %v2728
        %v2731 = vor.u32 %v2729, %v2730
        %v2732 = vsub.s32 4294967266, %v2727
        %v2733 = vadd.s32 %v2732, 127
        %v2734 = vshll.u32 %v2733, 23
        %v2735 = vor.u32 4788187, %v2734
        %v2736 = vand.u32 2147483647, %v2735
        %v2738 = vcvt.s32.f32 %v2731
        %v2739 = vmul.f32 %v2738, %v2736
        %v2740 = vxor.u32 %v2739, 2147483648
        %v2741 = vsel %vm2620, %v2740, %v2739
        %v2742 = vsub.s32 4, %v2718
        %v2743 = vsel %vm2620, %v2742, %v2718
        %v2744 = vsel %vm2619, %v1006, %v2741
        %v2745 = vsel %vm2619, 0, %v2743
        %v2746 = vmul.f32 %v2744, %v2744
        %v2747 = vmul.f32 %v2746, -0.001358992
        %v2748 = vadd.f32 %v2747, 0.041655596
        %v2749 = vmul.f32 %v2746, %v2748
        %v2750 = vadd.f32 %v2749, -0.4999988
        %v2751 = vmul.f32 %v2746, %v2750
        %v2752 = vadd.f32 1.0, %v2751
        %v2753 = vmul.f32 %v2744, %v2744
        %v2754 = vmul.f32 %v2753, -0.00019511016
        %v2755 = vadd.f32 %v2754, 0.008332121
        %v2756 = vmul.f32 %v2753, %v2755
        %v2757 = vadd.f32 %v2756, -0.16666654
        %v2758 = vmul.f32 %v2753, %v2757
        %v2759 = vadd.f32 %v2758, 1.0
        %v2760 = vmul.f32 %v2759, %v2744
        %vm2761 = vweird.f32 %v1006
        %v2762 = vand.u32 %v2745, 3
        %vm2763 = vcmp.lt.s32.totalorder %v2762, 2
        %vm2764 = vcmp.eq.s32.totalorder %v2762, 0
        %v2765 = vxor.u32 %v2760, 2147483648
        %v2766 = vsel %vm2764, %v2752, %v2765
        %vm2767 = vcmp.eq.s32.totalorder %v2762, 2
        %v2768 = vxor.u32 %v2752, 2147483648
        %v2769 = vsel %vm2767, %v2768, %v2760
        %v2770 = vsel %vm2763, %v2766, %v2769
        %v2771 = vsel %vm2761, nan, %v2770
        %v2772 = vand.u32 2147483647, %v1020
        %vm2773 = vcmp.le.f32.partialorder %v2772, 0.7853982
        %vm2774 = vcmp.lt.s32.totalorder %v1020, 0
        %v2775 = vand.u32 %v1020, 2139095040
        %v2776 = vshrl.u32 %v2775, 23
        %v2777 = vsub.s32 %v2776, 127
        %v2778 = vand.u32 2147483647, %v1020
        %v2779 = vand.u32 %v2778, 8388607
        %v2780 = vor.u32 %v2779, 8388608
        %v2781 = vsub.s32 0, %v2780
        %v2782 = vadd.s32 %v2777, 1
        %vm2783 = vcmp.gt.s32.totalorder %v2782, 0
        %v2784 = vsel %vm2783, %v2782, 0
        %v2785 = vshrl.u32 %v2784, 5
        %v2786 = vand.u32 %v2784, 31
        %v2787 = vsub.s32 32, %v2786
        %v2788 = vshrl.u32 683565275, %v2787
        %v2789 = vshll.u32 683565275, %v2786
        %v2790 = vshrl.u32 2475754826, %v2787
        %v2791 = vor.u32 %v2789, %v2790
        %v2792 = vshll.u32 2475754826, %v2786
        %v2793 = vshrl.u32 2131351028, %v2787
        %v2794 = vor.u32 %v2792, %v2793
        %v2795 = vshll.u32 2131351028, %v2786
        %v2796 = vshrl.u32 2102212464, %v2787
        %v2797 = vor.u32 %v2795, %v2796
        %v2798 = vshll.u32 2102212464, %v2786
        %v2799 = vshrl.u32 920167782, %v2787
        %v2800 = vor.u32 %v2798, %v2799
        %v2801 = vshll.u32 920167782, %v2786
        %v2802 = vshrl.u32 1326507024, %v2787
        %v2803 = vor.u32 %v2801, %v2802
        %vm2804 = vcmp.lt.s32.totalorder %v2785, 1
        %vm2805 = vcmp.lt.s32.totalorder %v2785, 2
        %vm2806 = vcmp.lt.s32.totalorder %v2785, 3
        %vm2807 = vcmp.lt.s32.totalorder %v2785, 4
        %v2808 = vsel %vm2804, %v2788, %v2791
        %v2809 = vsel %vm2807, %v2797, 2102212464
        %v2810 = vsel %vm2806, %v2794, %v2809
        %v2811 = vsel %vm2805, %v2808, %v2810
        %v2812 = vsel %vm2804, %v2791, %v2794
        %v2813 = vsel %vm2807, %v2800, 920167782
        %v2814 = vsel %vm2806, %v2797, %v2813
        %v2815 = vsel %vm2805, %v2812, %v2814
        %v2816 = vsel %vm2804, %v2794, %v2797
        %v2817 = vsel %vm2807, %v2803, 1326507024
        %v2818 = vsel %vm2806, %v2800, %v2817
        %v2819 = vsel %vm2805, %v2816, %v2818
        %v2820 = vshll.u32 %v2780, 8
        %v2821 = vand.u32 %v2820, 65535
        %v2822 = vshrl.u32 %v2820, 16
        %v2823 = vand.u32 %v2819, 65535
        %v2824 = vshrl.u32 %v2819, 16
        %v2825 = vmul.u32 %v2821, %v2823
        %v2826 = vmul.u32 %v2821, %v2824
        %v2827 = vmul.u32 %v2822, %v2823
        %v2828 = vmul.u32 %v2822, %v2824
        %v2829 = vshll.u32 %v2826, 16
        %v2830 = vshrl.u32 %v2826, 16
        %v2831 = vshll.u32 %v2827, 16
        %v2832 = vshrl.u32 %v2827, 16
        %vm2833 = vc.u32 %v2825, %v2829
        %v2834 = vsel %vm2833, 1, 0
        %v2835 = vadd.s32 %v2825, %v2829
        %v2836 = vadd.s32 %v2828, %v2834
        %vm2837 = vc.u32 %v2835, %v2831
        %v2838 = vsel %vm2837, 1, 0
        %v2839 = vadd.s32 %v2835, %v2831
        %v2840 = vadd.s32 %v2836, %v2838
        %v2841 = vadd.s32 %v2840, %v2830
        %v2842 = vadd.s32 %v2841, %v2832
        %v2843 = vand.u32 %v2820, 65535
        %v2844 = vshrl.u32 %v2820, 16
        %v2845 = vand.u32 %v2815, 65535
        %v2846 = vshrl.u32 %v2815, 16
        %v2847 = vmul.u32 %v2843, %v2845
        %v2848 = vmul.u32 %v2843, %v2846
        %v2849 = vmul.u32 %v2844, %v2845
        %v2850 = vmul.u32 %v2844, %v2846
        %v2851 = vshll.u32 %v2848, 16
        %v2852 = vshrl.u32 %v2848, 16
        %v2853 = vshll.u32 %v2849, 16
        %v2854 = vshrl.u32 %v2849, 16
        %vm2855 = vc.u32 %v2847, %v2851
        %v2856 = vsel %vm2855, 1, 0
        %v2857 = vadd.s32 %v2847, %v2851
        %v2858 = vadd.s32 %v2850, %v2856
        %vm2859 = vc.u32 %v2857, %v2853
        %v2860 = vsel %vm2859, 1, 0
        %v2861 = vadd.s32 %v2857, %v2853
        %v2862 = vadd.s32 %v2858, %v2860
        %v2863 = vadd.s32 %v2862, %v2852
        %v2864 = vadd.s32 %v2863, %v2854
        %v2865 = vmul.u32 %v2820, %v2811
        %v2866 = vadd.s32 %v2842, %v2861
        %vm2867 = vc.u32 %v2842, %v2861
        %v2868 = vadd.s32 %v2864, 1
        %v2869 = vsel %vm2867, %v2868, %v2864
        %v2870 = vadd.s32 %v2865, %v2869
        %v2871 = vadd.s32 %v2870, 536870912
        %v2872 = vshrl.u32 %v2871, 30
        %v2873 = vshll.u32 %v2872, 30
        %v2874 = vsub.s32 %v2870, %v2873
        %vm2875 = vcmp.lt.s32.totalorder %v2874, 0
        %v2876 = vsub.s32 0, %v2874
        %v2877 = vsel %vm2875, %v2876, %v2874
        %v2878 = vclz %v2877
        %v2879 = vsub.s32 %v2878, 2
        %vm2880 = vcmp.gt.s32.totalorder 0, %v2879
        %v2881 = vsel %vm2880, 0, %v2879
        %v2882 = vsub.s32 32, %v2881
        %v2883 = vshll.u32 %v2874, %v2881
        %v2884 = vshrl.u32 %v2866, %v2882
        %v2885 = vor.u32 %v2883, %v2884
        %v2886 = vsub.s32 4294967266, %v2881
        %v2887 = vadd.s32 %v2886, 127
        %v2888 = vshll.u32 %v2887, 23
        %v2889 = vor.u32 4788187, %v2888
        %v2890 = vand.u32 2147483647, %v2889
        %v2892 = vcvt.s32.f32 %v2885
        %v2893 = vmul.f32 %v2892, %v2890
        %v2894 = vxor.u32 %v2893, 2147483648
        %v2895 = vsel %vm2774, %v2894, %v2893
        %v2896 = vsub.s32 4, %v2872
        %v2897 = vsel %vm2774, %v2896, %v2872
        %v2898 = vsel %vm2773, %v1020, %v2895
        %v2899 = vsel %vm2773, 0, %v2897
        %v2900 = vmul.f32 %v2898, %v2898
        %v2901 = vmul.f32 %v2900, -0.001358992
        %v2902 = vadd.f32 %v2901, 0.041655596
        %v2903 = vmul.f32 %v2900, %v2902
        %v2904 = vadd.f32 %v2903, -0.4999988
        %v2905 = vmul.f32 %v2900, %v2904
        %v2906 = vadd.f32 1.0, %v2905
        %v2907 = vmul.f32 %v2898, %v2898
        %v2908 = vmul.f32 %v2907, -0.00019511016
        %v2909 = vadd.f32 %v2908, 0.008332121
        %v2910 = vmul.f32 %v2907, %v2909
        %v2911 = vadd.f32 %v2910, -0.16666654
        %v2912 = vmul.f32 %v2907, %v2911
        %v2913 = vadd.f32 %v2912, 1.0
        %v2914 = vmul.f32 %v2913, %v2898
        %vm2915 = vweird.f32 %v1020
        %v2916 = vand.u32 %v2899, 3
        %vm2917 = vcmp.lt.s32.totalorder %v2916, 2
        %vm2918 = vcmp.eq.s32.totalorder %v2916, 0
        %v2919 = vxor.u32 %v2914, 2147483648
        %v2920 = vsel %vm2918, %v2906, %v2919
        %vm2921 = vcmp.eq.s32.totalorder %v2916, 2
        %v2922 = vxor.u32 %v2906, 2147483648
        %v2923 = vsel %vm2921, %v2922, %v2914
        %v2924 = vsel %vm2917, %v2920, %v2923
        %v2925 = vsel %vm2915, nan, %v2924
        %v2926 = vand.u32 2147483647, %v1034
        %vm2927 = vcmp.le.f32.partialorder %v2926, 0.7853982
        %vm2928 = vcmp.lt.s32.totalorder %v1034, 0
        %v2929 = vand.u32 %v1034, 2139095040
        %v2930 = vshrl.u32 %v2929, 23
        %v2931 = vsub.s32 %v2930, 127
        %v2932 = vand.u32 2147483647, %v1034
        %v2933 = vand.u32 %v2932, 8388607
        %v2934 = vor.u32 %v2933, 8388608
        %v2935 = vsub.s32 0, %v2934
        %v2936 = vadd.s32 %v2931, 1
        %vm2937 = vcmp.gt.s32.totalorder %v2936, 0
        %v2938 = vsel %vm2937, %v2936, 0
        %v2939 = vshrl.u32 %v2938, 5
        %v2940 = vand.u32 %v2938, 31
        %v2941 = vsub.s32 32, %v2940
        %v2942 = vshrl.u32 683565275, %v2941
        %v2943 = vshll.u32 683565275, %v2940
        %v2944 = vshrl.u32 2475754826, %v2941
        %v2945 = vor.u32 %v2943, %v2944
        %v2946 = vshll.u32 2475754826, %v2940
        %v2947 = vshrl.u32 2131351028, %v2941
        %v2948 = vor.u32 %v2946, %v2947
        %v2949 = vshll.u32 2131351028, %v2940
        %v2950 = vshrl.u32 2102212464, %v2941
        %v2951 = vor.u32 %v2949, %v2950
        %v2952 = vshll.u32 2102212464, %v2940
        %v2953 = vshrl.u32 920167782, %v2941
        %v2954 = vor.u32 %v2952, %v2953
        %v2955 = vshll.u32 920167782, %v2940
        %v2956 = vshrl.u32 1326507024, %v2941
        %v2957 = vor.u32 %v2955, %v2956
        %vm2958 = vcmp.lt.s32.totalorder %v2939, 1
        %vm2959 = vcmp.lt.s32.totalorder %v2939, 2
        %vm2960 = vcmp.lt.s32.totalorder %v2939, 3
        %vm2961 = vcmp.lt.s32.totalorder %v2939, 4
        %v2962 = vsel %vm2958, %v2942, %v2945
        %v2963 = vsel %vm2961, %v2951, 2102212464
        %v2964 = vsel %vm2960, %v2948, %v2963
        %v2965 = vsel %vm2959, %v2962, %v2964
        %v2966 = vsel %vm2958, %v2945, %v2948
        %v2967 = vsel %vm2961, %v2954, 920167782
        %v2968 = vsel %vm2960, %v2951, %v2967
        %v2969 = vsel %vm2959, %v2966, %v2968
        %v2970 = vsel %vm2958, %v2948, %v2951
        %v2971 = vsel %vm2961, %v2957, 1326507024
        %v2972 = vsel %vm2960, %v2954, %v2971
        %v2973 = vsel %vm2959, %v2970, %v2972
        %v2974 = vshll.u32 %v2934, 8
        %v2975 = vand.u32 %v2974, 65535
        %v2976 = vshrl.u32 %v2974, 16
        %v2977 = vand.u32 %v2973, 65535
        %v2978 = vshrl.u32 %v2973, 16
        %v2979 = vmul.u32 %v2975, %v2977
        %v2980 = vmul.u32 %v2975, %v2978
        %v2981 = vmul.u32 %v2976, %v2977
        %v2982 = vmul.u32 %v2976, %v2978
        %v2983 = vshll.u32 %v2980, 16
        %v2984 = vshrl.u32 %v2980, 16
        %v2985 = vshll.u32 %v2981, 16
        %v2986 = vshrl.u32 %v2981, 16
        %vm2987 = vc.u32 %v2979, %v2983
        %v2988 = vsel %vm2987, 1, 0
        %v2989 = vadd.s32 %v2979, %v2983
        %v2990 = vadd.s32 %v2982, %v2988
        %vm2991 = vc.u32 %v2989, %v2985
        %v2992 = vsel %vm2991, 1, 0
        %v2993 = vadd.s32 %v2989, %v2985
        %v2994 = vadd.s32 %v2990, %v2992
        %v2995 = vadd.s32 %v2994, %v2984
        %v2996 = vadd.s32 %v2995, %v2986
        %v2997 = vand.u32 %v2974, 65535
        %v2998 = vshrl.u32 %v2974, 16
        %v2999 = vand.u32 %v2969, 65535
        %v3000 = vshrl.u32 %v2969, 16
        %v3001 = vmul.u32 %v2997, %v2999
        %v3002 = vmul.u32 %v2997, %v3000
        %v3003 = vmul.u32 %v2998, %v2999
        %v3004 = vmul.u32 %v2998, %v3000
        %v3005 = vshll.u32 %v3002, 16
        %v3006 = vshrl.u32 %v3002, 16
        %v3007 = vshll.u32 %v3003, 16
        %v3008 = vshrl.u32 %v3003, 16
        %vm3009 = vc.u32 %v3001, %v3005
        %v3010 = vsel %vm3009, 1, 0
        %v3011 = vadd.s32 %v3001, %v3005
        %v3012 = vadd.s32 %v3004, %v3010
        %vm3013 = vc.u32 %v3011, %v3007
        %v3014 = vsel %vm3013, 1, 0
        %v3015 = vadd.s32 %v3011, %v3007
        %v3016 = vadd.s32 %v3012, %v3014
        %v3017 = vadd.s32 %v3016, %v3006
        %v3018 = vadd.s32 %v3017, %v3008
        %v3019 = vmul.u32 %v2974, %v2965
        %v3020 = vadd.s32 %v2996, %v3015
        %vm3021 = vc.u32 %v2996, %v3015
        %v3022 = vadd.s32 %v3018, 1
        %v3023 = vsel %vm3021, %v3022, %v3018
        %v3024 = vadd.s32 %v3019, %v3023
        %v3025 = vadd.s32 %v3024, 536870912
        %v3026 = vshrl.u32 %v3025, 30
        %v3027 = vshll.u32 %v3026, 30
        %v3028 = vsub.s32 %v3024, %v3027
        %vm3029 = vcmp.lt.s32.totalorder %v3028, 0
        %v3030 = vsub.s32 0, %v3028
        %v3031 = vsel %vm3029, %v3030, %v3028
        %v3032 = vclz %v3031
        %v3033 = vsub.s32 %v3032, 2
        %vm3034 = vcmp.gt.s32.totalorder 0, %v3033
        %v3035 = vsel %vm3034, 0, %v3033
        %v3036 = vsub.s32 32, %v3035
        %v3037 = vshll.u32 %v3028, %v3035
        %v3038 = vshrl.u32 %v3020, %v3036
        %v3039 = vor.u32 %v3037, %v3038
        %v3040 = vsub.s32 4294967266, %v3035
        %v3041 = vadd.s32 %v3040, 127
        %v3042 = vshll.u32 %v3041, 23
        %v3043 = vor.u32 4788187, %v3042
        %v3044 = vand.u32 2147483647, %v3043
        %v3046 = vcvt.s32.f32 %v3039
        %v3047 = vmul.f32 %v3046, %v3044
        %v3048 = vxor.u32 %v3047, 2147483648
        %v3049 = vsel %vm2928, %v3048, %v3047
        %v3050 = vsub.s32 4, %v3026
        %v3051 = vsel %vm2928, %v3050, %v3026
        %v3052 = vsel %vm2927, %v1034, %v3049
        %v3053 = vsel %vm2927, 0, %v3051
        %v3054 = vmul.f32 %v3052, %v3052
        %v3055 = vmul.f32 %v3054, -0.001358992
        %v3056 = vadd.f32 %v3055, 0.041655596
        %v3057 = vmul.f32 %v3054, %v3056
        %v3058 = vadd.f32 %v3057, -0.4999988
        %v3059 = vmul.f32 %v3054, %v3058
        %v3060 = vadd.f32 1.0, %v3059
        %v3061 = vmul.f32 %v3052, %v3052
        %v3062 = vmul.f32 %v3061, -0.00019511016
        %v3063 = vadd.f32 %v3062, 0.008332121
        %v3064 = vmul.f32 %v3061, %v3063
        %v3065 = vadd.f32 %v3064, -0.16666654
        %v3066 = vmul.f32 %v3061, %v3065
        %v3067 = vadd.f32 %v3066, 1.0
        %v3068 = vmul.f32 %v3067, %v3052
        %vm3069 = vweird.f32 %v1034
        %v3070 = vand.u32 %v3053, 3
        %vm3071 = vcmp.lt.s32.totalorder %v3070, 2
        %vm3072 = vcmp.eq.s32.totalorder %v3070, 0
        %v3073 = vxor.u32 %v3068, 2147483648
        %v3074 = vsel %vm3072, %v3060, %v3073
        %vm3075 = vcmp.eq.s32.totalorder %v3070, 2
        %v3076 = vxor.u32 %v3060, 2147483648
        %v3077 = vsel %vm3075, %v3076, %v3068
        %v3078 = vsel %vm3071, %v3074, %v3077
        %v3079 = vsel %vm3069, nan, %v3078
        %v3080 = vand.u32 2147483647, %v1048
        %vm3081 = vcmp.le.f32.partialorder %v3080, 0.7853982
        %vm3082 = vcmp.lt.s32.totalorder %v1048, 0
        %v3083 = vand.u32 %v1048, 2139095040
        %v3084 = vshrl.u32 %v3083, 23
        %v3085 = vsub.s32 %v3084, 127
        %v3086 = vand.u32 2147483647, %v1048
        %v3087 = vand.u32 %v3086, 8388607
        %v3088 = vor.u32 %v3087, 8388608
        %v3089 = vsub.s32 0, %v3088
        %v3090 = vadd.s32 %v3085, 1
        %vm3091 = vcmp.gt.s32.totalorder %v3090, 0
        %v3092 = vsel %vm3091, %v3090, 0
        %v3093 = vshrl.u32 %v3092, 5
        %v3094 = vand.u32 %v3092, 31
        %v3095 = vsub.s32 32, %v3094
        %v3096 = vshrl.u32 683565275, %v3095
        %v3097 = vshll.u32 683565275, %v3094
        %v3098 = vshrl.u32 2475754826, %v3095
        %v3099 = vor.u32 %v3097, %v3098
        %v3100 = vshll.u32 2475754826, %v3094
        %v3101 = vshrl.u32 2131351028, %v3095
        %v3102 = vor.u32 %v3100, %v3101
        %v3103 = vshll.u32 2131351028, %v3094
        %v3104 = vshrl.u32 2102212464, %v3095
        %v3105 = vor.u32 %v3103, %v3104
        %v3106 = vshll.u32 2102212464, %v3094
        %v3107 = vshrl.u32 920167782, %v3095
        %v3108 = vor.u32 %v3106, %v3107
        %v3109 = vshll.u32 920167782, %v3094
        %v3110 = vshrl.u32 1326507024, %v3095
        %v3111 = vor.u32 %v3109, %v3110
        %vm3112 = vcmp.lt.s32.totalorder %v3093, 1
        %vm3113 = vcmp.lt.s32.totalorder %v3093, 2
        %vm3114 = vcmp.lt.s32.totalorder %v3093, 3
        %vm3115 = vcmp.lt.s32.totalorder %v3093, 4
        %v3116 = vsel %vm3112, %v3096, %v3099
        %v3117 = vsel %vm3115, %v3105, 2102212464
        %v3118 = vsel %vm3114, %v3102, %v3117
        %v3119 = vsel %vm3113, %v3116, %v3118
        %v3120 = vsel %vm3112, %v3099, %v3102
        %v3121 = vsel %vm3115, %v3108, 920167782
        %v3122 = vsel %vm3114, %v3105, %v3121
        %v3123 = vsel %vm3113, %v3120, %v3122
        %v3124 = vsel %vm3112, %v3102, %v3105
        %v3125 = vsel %vm3115, %v3111, 1326507024
        %v3126 = vsel %vm3114, %v3108, %v3125
        %v3127 = vsel %vm3113, %v3124, %v3126
        %v3128 = vshll.u32 %v3088, 8
        %v3129 = vand.u32 %v3128, 65535
        %v3130 = vshrl.u32 %v3128, 16
        %v3131 = vand.u32 %v3127, 65535
        %v3132 = vshrl.u32 %v3127, 16
        %v3133 = vmul.u32 %v3129, %v3131
        %v3134 = vmul.u32 %v3129, %v3132
        %v3135 = vmul.u32 %v3130, %v3131
        %v3136 = vmul.u32 %v3130, %v3132
        %v3137 = vshll.u32 %v3134, 16
        %v3138 = vshrl.u32 %v3134, 16
        %v3139 = vshll.u32 %v3135, 16
        %v3140 = vshrl.u32 %v3135, 16
        %vm3141 = vc.u32 %v3133, %v3137
        %v3142 = vsel %vm3141, 1, 0
        %v3143 = vadd.s32 %v3133, %v3137
        %v3144 = vadd.s32 %v3136, %v3142
        %vm3145 = vc.u32 %v3143, %v3139
        %v3146 = vsel %vm3145, 1, 0
        %v3147 = vadd.s32 %v3143, %v3139
        %v3148 = vadd.s32 %v3144, %v3146
        %v3149 = vadd.s32 %v3148, %v3138
        %v3150 = vadd.s32 %v3149, %v3140
        %v3151 = vand.u32 %v3128, 65535
        %v3152 = vshrl.u32 %v3128, 16
        %v3153 = vand.u32 %v3123, 65535
        %v3154 = vshrl.u32 %v3123, 16
        %v3155 = vmul.u32 %v3151, %v3153
        %v3156 = vmul.u32 %v3151, %v3154
        %v3157 = vmul.u32 %v3152, %v3153
        %v3158 = vmul.u32 %v3152, %v3154
        %v3159 = vshll.u32 %v3156, 16
        %v3160 = vshrl.u32 %v3156, 16
        %v3161 = vshll.u32 %v3157, 16
        %v3162 = vshrl.u32 %v3157, 16
        %vm3163 = vc.u32 %v3155, %v3159
        %v3164 = vsel %vm3163, 1, 0
        %v3165 = vadd.s32 %v3155, %v3159
        %v3166 = vadd.s32 %v3158, %v3164
        %vm3167 = vc.u32 %v3165, %v3161
        %v3168 = vsel %vm3167, 1, 0
        %v3169 = vadd.s32 %v3165, %v3161
        %v3170 = vadd.s32 %v3166, %v3168
        %v3171 = vadd.s32 %v3170, %v3160
        %v3172 = vadd.s32 %v3171, %v3162
        %v3173 = vmul.u32 %v3128, %v3119
        %v3174 = vadd.s32 %v3150, %v3169
        %vm3175 = vc.u32 %v3150, %v3169
        %v3176 = vadd.s32 %v3172, 1
        %v3177 = vsel %vm3175, %v3176, %v3172
        %v3178 = vadd.s32 %v3173, %v3177
        %v3179 = vadd.s32 %v3178, 536870912
        %v3180 = vshrl.u32 %v3179, 30
        %v3181 = vshll.u32 %v3180, 30
        %v3182 = vsub.s32 %v3178, %v3181
        %vm3183 = vcmp.lt.s32.totalorder %v3182, 0
        %v3184 = vsub.s32 0, %v3182
        %v3185 = vsel %vm3183, %v3184, %v3182
        %v3186 = vclz %v3185
        %v3187 = vsub.s32 %v3186, 2
        %vm3188 = vcmp.gt.s32.totalorder 0, %v3187
        %v3189 = vsel %vm3188, 0, %v3187
        %v3190 = vsub.s32 32, %v3189
        %v3191 = vshll.u32 %v3182, %v3189
        %v3192 = vshrl.u32 %v3174, %v3190
        %v3193 = vor.u32 %v3191, %v3192
        %v3194 = vsub.s32 4294967266, %v3189
        %v3195 = vadd.s32 %v3194, 127
        %v3196 = vshll.u32 %v3195, 23
        %v3197 = vor.u32 4788187, %v3196
        %v3198 = vand.u32 2147483647, %v3197
        %v3200 = vcvt.s32.f32 %v3193
        %v3201 = vmul.f32 %v3200, %v3198
        %v3202 = vxor.u32 %v3201, 2147483648
        %v3203 = vsel %vm3082, %v3202, %v3201
        %v3204 = vsub.s32 4, %v3180
        %v3205 = vsel %vm3082, %v3204, %v3180
        %v3206 = vsel %vm3081, %v1048, %v3203
        %v3207 = vsel %vm3081, 0, %v3205
        %v3208 = vmul.f32 %v3206, %v3206
        %v3209 = vmul.f32 %v3208, -0.001358992
        %v3210 = vadd.f32 %v3209, 0.041655596
        %v3211 = vmul.f32 %v3208, %v3210
        %v3212 = vadd.f32 %v3211, -0.4999988
        %v3213 = vmul.f32 %v3208, %v3212
        %v3214 = vadd.f32 1.0, %v3213
        %v3215 = vmul.f32 %v3206, %v3206
        %v3216 = vmul.f32 %v3215, -0.00019511016
        %v3217 = vadd.f32 %v3216, 0.008332121
        %v3218 = vmul.f32 %v3215, %v3217
        %v3219 = vadd.f32 %v3218, -0.16666654
        %v3220 = vmul.f32 %v3215, %v3219
        %v3221 = vadd.f32 %v3220, 1.0
        %v3222 = vmul.f32 %v3221, %v3206
        %vm3223 = vweird.f32 %v1048
        %v3224 = vand.u32 %v3207, 3
        %vm3225 = vcmp.lt.s32.totalorder %v3224, 2
        %vm3226 = vcmp.eq.s32.totalorder %v3224, 0
        %v3227 = vxor.u32 %v3222, 2147483648
        %v3228 = vsel %vm3226, %v3214, %v3227
        %vm3229 = vcmp.eq.s32.totalorder %v3224, 2
        %v3230 = vxor.u32 %v3214, 2147483648
        %v3231 = vsel %vm3229, %v3230, %v3222
        %v3232 = vsel %vm3225, %v3228, %v3231
        %v3233 = vsel %vm3223, nan, %v3232
        %v3234 = vand.u32 2147483647, %v1062
        %vm3235 = vcmp.le.f32.partialorder %v3234, 0.7853982
        %vm3236 = vcmp.lt.s32.totalorder %v1062, 0
        %v3237 = vand.u32 %v1062, 2139095040
        %v3238 = vshrl.u32 %v3237, 23
        %v3239 = vsub.s32 %v3238, 127
        %v3240 = vand.u32 2147483647, %v1062
        %v3241 = vand.u32 %v3240, 8388607
        %v3242 = vor.u32 %v3241, 8388608
        %v3243 = vsub.s32 0, %v3242
        %v3244 = vadd.s32 %v3239, 1
        %vm3245 = vcmp.gt.s32.totalorder %v3244, 0
        %v3246 = vsel %vm3245, %v3244, 0
        %v3247 = vshrl.u32 %v3246, 5
        %v3248 = vand.u32 %v3246, 31
        %v3249 = vsub.s32 32, %v3248
        %v3250 = vshrl.u32 683565275, %v3249
        %v3251 = vshll.u32 683565275, %v3248
        %v3252 = vshrl.u32 2475754826, %v3249
        %v3253 = vor.u32 %v3251, %v3252
        %v3254 = vshll.u32 2475754826, %v3248
        %v3255 = vshrl.u32 2131351028, %v3249
        %v3256 = vor.u32 %v3254, %v3255
        %v3257 = vshll.u32 2131351028, %v3248
        %v3258 = vshrl.u32 2102212464, %v3249
        %v3259 = vor.u32 %v3257, %v3258
        %v3260 = vshll.u32 2102212464, %v3248
        %v3261 = vshrl.u32 920167782, %v3249
        %v3262 = vor.u32 %v3260, %v3261
        %v3263 = vshll.u32 920167782, %v3248
        %v3264 = vshrl.u32 1326507024, %v3249
        %v3265 = vor.u32 %v3263, %v3264
        %vm3266 = vcmp.lt.s32.totalorder %v3247, 1
        %vm3267 = vcmp.lt.s32.totalorder %v3247, 2
        %vm3268 = vcmp.lt.s32.totalorder %v3247, 3
        %vm3269 = vcmp.lt.s32.totalorder %v3247, 4
        %v3270 = vsel %vm3266, %v3250, %v3253
        %v3271 = vsel %vm3269, %v3259, 2102212464
        %v3272 = vsel %vm3268, %v3256, %v3271
        %v3273 = vsel %vm3267, %v3270, %v3272
        %v3274 = vsel %vm3266, %v3253, %v3256
        %v3275 = vsel %vm3269, %v3262, 920167782
        %v3276 = vsel %vm3268, %v3259, %v3275
        %v3277 = vsel %vm3267, %v3274, %v3276
        %v3278 = vsel %vm3266, %v3256, %v3259
        %v3279 = vsel %vm3269, %v3265, 1326507024
        %v3280 = vsel %vm3268, %v3262, %v3279
        %v3281 = vsel %vm3267, %v3278, %v3280
        %v3282 = vshll.u32 %v3242, 8
        %v3283 = vand.u32 %v3282, 65535
        %v3284 = vshrl.u32 %v3282, 16
        %v3285 = vand.u32 %v3281, 65535
        %v3286 = vshrl.u32 %v3281, 16
        %v3287 = vmul.u32 %v3283, %v3285
        %v3288 = vmul.u32 %v3283, %v3286
        %v3289 = vmul.u32 %v3284, %v3285
        %v3290 = vmul.u32 %v3284, %v3286
        %v3291 = vshll.u32 %v3288, 16
        %v3292 = vshrl.u32 %v3288, 16
        %v3293 = vshll.u32 %v3289, 16
        %v3294 = vshrl.u32 %v3289, 16
        %vm3295 = vc.u32 %v3287, %v3291
        %v3296 = vsel %vm3295, 1, 0
        %v3297 = vadd.s32 %v3287, %v3291
        %v3298 = vadd.s32 %v3290, %v3296
        %vm3299 = vc.u32 %v3297, %v3293
        %v3300 = vsel %vm3299, 1, 0
        %v3301 = vadd.s32 %v3297, %v3293
        %v3302 = vadd.s32 %v3298, %v3300
        %v3303 = vadd.s32 %v3302, %v3292
        %v3304 = vadd.s32 %v3303, %v3294
        %v3305 = vand.u32 %v3282, 65535
        %v3306 = vshrl.u32 %v3282, 16
        %v3307 = vand.u32 %v3277, 65535
        %v3308 = vshrl.u32 %v3277, 16
        %v3309 = vmul.u32 %v3305, %v3307
        %v3310 = vmul.u32 %v3305, %v3308
        %v3311 = vmul.u32 %v3306, %v3307
        %v3312 = vmul.u32 %v3306, %v3308
        %v3313 = vshll.u32 %v3310, 16
        %v3314 = vshrl.u32 %v3310, 16
        %v3315 = vshll.u32 %v3311, 16
        %v3316 = vshrl.u32 %v3311, 16
        %vm3317 = vc.u32 %v3309, %v3313
        %v3318 = vsel %vm3317, 1, 0
        %v3319 = vadd.s32 %v3309, %v3313
        %v3320 = vadd.s32 %v3312, %v3318
        %vm3321 = vc.u32 %v3319, %v3315
        %v3322 = vsel %vm3321, 1, 0
        %v3323 = vadd.s32 %v3319, %v3315
        %v3324 = vadd.s32 %v3320, %v3322
        %v3325 = vadd.s32 %v3324, %v3314
        %v3326 = vadd.s32 %v3325, %v3316
        %v3327 = vmul.u32 %v3282, %v3273
        %v3328 = vadd.s32 %v3304, %v3323
        %vm3329 = vc.u32 %v3304, %v3323
        %v3330 = vadd.s32 %v3326, 1
        %v3331 = vsel %vm3329, %v3330, %v3326
        %v3332 = vadd.s32 %v3327, %v3331
        %v3333 = vadd.s32 %v3332, 536870912
        %v3334 = vshrl.u32 %v3333, 30
        %v3335 = vshll.u32 %v3334, 30
        %v3336 = vsub.s32 %v3332, %v3335
        %vm3337 = vcmp.lt.s32.totalorder %v3336, 0
        %v3338 = vsub.s32 0, %v3336
        %v3339 = vsel %vm3337, %v3338, %v3336
        %v3340 = vclz %v3339
        %v3341 = vsub.s32 %v3340, 2
        %vm3342 = vcmp.gt.s32.totalorder 0, %v3341
        %v3343 = vsel %vm3342, 0, %v3341
        %v3344 = vsub.s32 32, %v3343
        %v3345 = vshll.u32 %v3336, %v3343
        %v3346 = vshrl.u32 %v3328, %v3344
        %v3347 = vor.u32 %v3345, %v3346
        %v3348 = vsub.s32 4294967266, %v3343
        %v3349 = vadd.s32 %v3348, 127
        %v3350 = vshll.u32 %v3349, 23
        %v3351 = vor.u32 4788187, %v3350
        %v3352 = vand.u32 2147483647, %v3351
        %v3354 = vcvt.s32.f32 %v3347
        %v3355 = vmul.f32 %v3354, %v3352
        %v3356 = vxor.u32 %v3355, 2147483648
        %v3357 = vsel %vm3236, %v3356, %v3355
        %v3358 = vsub.s32 4, %v3334
        %v3359 = vsel %vm3236, %v3358, %v3334
        %v3360 = vsel %vm3235, %v1062, %v3357
        %v3361 = vsel %vm3235, 0, %v3359
        %v3362 = vmul.f32 %v3360, %v3360
        %v3363 = vmul.f32 %v3362, -0.001358992
        %v3364 = vadd.f32 %v3363, 0.041655596
        %v3365 = vmul.f32 %v3362, %v3364
        %v3366 = vadd.f32 %v3365, -0.4999988
        %v3367 = vmul.f32 %v3362, %v3366
        %v3368 = vadd.f32 1.0, %v3367
        %v3369 = vmul.f32 %v3360, %v3360
        %v3370 = vmul.f32 %v3369, -0.00019511016
        %v3371 = vadd.f32 %v3370, 0.008332121
        %v3372 = vmul.f32 %v3369, %v3371
        %v3373 = vadd.f32 %v3372, -0.16666654
        %v3374 = vmul.f32 %v3369, %v3373
        %v3375 = vadd.f32 %v3374, 1.0
        %v3376 = vmul.f32 %v3375, %v3360
        %vm3377 = vweird.f32 %v1062
        %v3378 = vand.u32 %v3361, 3
        %vm3379 = vcmp.lt.s32.totalorder %v3378, 2
        %vm3380 = vcmp.eq.s32.totalorder %v3378, 0
        %v3381 = vxor.u32 %v3376, 2147483648
        %v3382 = vsel %vm3380, %v3368, %v3381
        %vm3383 = vcmp.eq.s32.totalorder %v3378, 2
        %v3384 = vxor.u32 %v3368, 2147483648
        %v3385 = vsel %vm3383, %v3384, %v3376
        %v3386 = vsel %vm3379, %v3382, %v3385
        %v3387 = vsel %vm3377, nan, %v3386
        %v3388 = vand.u32 2147483647, %v1076
        %vm3389 = vcmp.le.f32.partialorder %v3388, 0.7853982
        %vm3390 = vcmp.lt.s32.totalorder %v1076, 0
        %v3391 = vand.u32 %v1076, 2139095040
        %v3392 = vshrl.u32 %v3391, 23
        %v3393 = vsub.s32 %v3392, 127
        %v3394 = vand.u32 2147483647, %v1076
        %v3395 = vand.u32 %v3394, 8388607
        %v3396 = vor.u32 %v3395, 8388608
        %v3397 = vsub.s32 0, %v3396
        %v3398 = vadd.s32 %v3393, 1
        %vm3399 = vcmp.gt.s32.totalorder %v3398, 0
        %v3400 = vsel %vm3399, %v3398, 0
        %v3401 = vshrl.u32 %v3400, 5
        %v3402 = vand.u32 %v3400, 31
        %v3403 = vsub.s32 32, %v3402
        %v3404 = vshrl.u32 683565275, %v3403
        %v3405 = vshll.u32 683565275, %v3402
        %v3406 = vshrl.u32 2475754826, %v3403
        %v3407 = vor.u32 %v3405, %v3406
        %v3408 = vshll.u32 2475754826, %v3402
        %v3409 = vshrl.u32 2131351028, %v3403
        %v3410 = vor.u32 %v3408, %v3409
        %v3411 = vshll.u32 2131351028, %v3402
        %v3412 = vshrl.u32 2102212464, %v3403
        %v3413 = vor.u32 %v3411, %v3412
        %v3414 = vshll.u32 2102212464, %v3402
        %v3415 = vshrl.u32 920167782, %v3403
        %v3416 = vor.u32 %v3414, %v3415
        %v3417 = vshll.u32 920167782, %v3402
        %v3418 = vshrl.u32 1326507024, %v3403
        %v3419 = vor.u32 %v3417, %v3418
        %vm3420 = vcmp.lt.s32.totalorder %v3401, 1
        %vm3421 = vcmp.lt.s32.totalorder %v3401, 2
        %vm3422 = vcmp.lt.s32.totalorder %v3401, 3
        %vm3423 = vcmp.lt.s32.totalorder %v3401, 4
        %v3424 = vsel %vm3420, %v3404, %v3407
        %v3425 = vsel %vm3423, %v3413, 2102212464
        %v3426 = vsel %vm3422, %v3410, %v3425
        %v3427 = vsel %vm3421, %v3424, %v3426
        %v3428 = vsel %vm3420, %v3407, %v3410
        %v3429 = vsel %vm3423, %v3416, 920167782
        %v3430 = vsel %vm3422, %v3413, %v3429
        %v3431 = vsel %vm3421, %v3428, %v3430
        %v3432 = vsel %vm3420, %v3410, %v3413
        %v3433 = vsel %vm3423, %v3419, 1326507024
        %v3434 = vsel %vm3422, %v3416, %v3433
        %v3435 = vsel %vm3421, %v3432, %v3434
        %v3436 = vshll.u32 %v3396, 8
        %v3437 = vand.u32 %v3436, 65535
        %v3438 = vshrl.u32 %v3436, 16
        %v3439 = vand.u32 %v3435, 65535
        %v3440 = vshrl.u32 %v3435, 16
        %v3441 = vmul.u32 %v3437, %v3439
        %v3442 = vmul.u32 %v3437, %v3440
        %v3443 = vmul.u32 %v3438, %v3439
        %v3444 = vmul.u32 %v3438, %v3440
        %v3445 = vshll.u32 %v3442, 16
        %v3446 = vshrl.u32 %v3442, 16
        %v3447 = vshll.u32 %v3443, 16
        %v3448 = vshrl.u32 %v3443, 16
        %vm3449 = vc.u32 %v3441, %v3445
        %v3450 = vsel %vm3449, 1, 0
        %v3451 = vadd.s32 %v3441, %v3445
        %v3452 = vadd.s32 %v3444, %v3450
        %vm3453 = vc.u32 %v3451, %v3447
        %v3454 = vsel %vm3453, 1, 0
        %v3455 = vadd.s32 %v3451, %v3447
        %v3456 = vadd.s32 %v3452, %v3454
        %v3457 = vadd.s32 %v3456, %v3446
        %v3458 = vadd.s32 %v3457, %v3448
        %v3459 = vand.u32 %v3436, 65535
        %v3460 = vshrl.u32 %v3436, 16
        %v3461 = vand.u32 %v3431, 65535
        %v3462 = vshrl.u32 %v3431, 16
        %v3463 = vmul.u32 %v3459, %v3461
        %v3464 = vmul.u32 %v3459, %v3462
        %v3465 = vmul.u32 %v3460, %v3461
        %v3466 = vmul.u32 %v3460, %v3462
        %v3467 = vshll.u32 %v3464, 16
        %v3468 = vshrl.u32 %v3464, 16
        %v3469 = vshll.u32 %v3465, 16
        %v3470 = vshrl.u32 %v3465, 16
        %vm3471 = vc.u32 %v3463, %v3467
        %v3472 = vsel %vm3471, 1, 0
        %v3473 = vadd.s32 %v3463, %v3467
        %v3474 = vadd.s32 %v3466, %v3472
        %vm3475 = vc.u32 %v3473, %v3469
        %v3476 = vsel %vm3475, 1, 0
        %v3477 = vadd.s32 %v3473, %v3469
        %v3478 = vadd.s32 %v3474, %v3476
        %v3479 = vadd.s32 %v3478, %v3468
        %v3480 = vadd.s32 %v3479, %v3470
        %v3481 = vmul.u32 %v3436, %v3427
        %v3482 = vadd.s32 %v3458, %v3477
        %vm3483 = vc.u32 %v3458, %v3477
        %v3484 = vadd.s32 %v3480, 1
        %v3485 = vsel %vm3483, %v3484, %v3480
        %v3486 = vadd.s32 %v3481, %v3485
        %v3487 = vadd.s32 %v3486, 536870912
        %v3488 = vshrl.u32 %v3487, 30
        %v3489 = vshll.u32 %v3488, 30
        %v3490 = vsub.s32 %v3486, %v3489
        %vm3491 = vcmp.lt.s32.totalorder %v3490, 0
        %v3492 = vsub.s32 0, %v3490
        %v3493 = vsel %vm3491, %v3492, %v3490
        %v3494 = vclz %v3493
        %v3495 = vsub.s32 %v3494, 2
        %vm3496 = vcmp.gt.s32.totalorder 0, %v3495
        %v3497 = vsel %vm3496, 0, %v3495
        %v3498 = vsub.s32 32, %v3497
        %v3499 = vshll.u32 %v3490, %v3497
        %v3500 = vshrl.u32 %v3482, %v3498
        %v3501 = vor.u32 %v3499, %v3500
        %v3502 = vsub.s32 4294967266, %v3497
        %v3503 = vadd.s32 %v3502, 127
        %v3504 = vshll.u32 %v3503, 23
        %v3505 = vor.u32 4788187, %v3504
        %v3506 = vand.u32 2147483647, %v3505
        %v3508 = vcvt.s32.f32 %v3501
        %v3509 = vmul.f32 %v3508, %v3506
        %v3510 = vxor.u32 %v3509, 2147483648
        %v3511 = vsel %vm3390, %v3510, %v3509
        %v3512 = vsub.s32 4, %v3488
        %v3513 = vsel %vm3390, %v3512, %v3488
        %v3514 = vsel %vm3389, %v1076, %v3511
        %v3515 = vsel %vm3389, 0, %v3513
        %v3516 = vmul.f32 %v3514, %v3514
        %v3517 = vmul.f32 %v3516, -0.001358992
        %v3518 = vadd.f32 %v3517, 0.041655596
        %v3519 = vmul.f32 %v3516, %v3518
        %v3520 = vadd.f32 %v3519, -0.4999988
        %v3521 = vmul.f32 %v3516, %v3520
        %v3522 = vadd.f32 1.0, %v3521
        %v3523 = vmul.f32 %v3514, %v3514
        %v3524 = vmul.f32 %v3523, -0.00019511016
        %v3525 = vadd.f32 %v3524, 0.008332121
        %v3526 = vmul.f32 %v3523, %v3525
        %v3527 = vadd.f32 %v3526, -0.16666654
        %v3528 = vmul.f32 %v3523, %v3527
        %v3529 = vadd.f32 %v3528, 1.0
        %v3530 = vmul.f32 %v3529, %v3514
        %vm3531 = vweird.f32 %v1076
        %v3532 = vand.u32 %v3515, 3
        %vm3533 = vcmp.lt.s32.totalorder %v3532, 2
        %vm3534 = vcmp.eq.s32.totalorder %v3532, 0
        %v3535 = vxor.u32 %v3530, 2147483648
        %v3536 = vsel %vm3534, %v3522, %v3535
        %vm3537 = vcmp.eq.s32.totalorder %v3532, 2
        %v3538 = vxor.u32 %v3522, 2147483648
        %v3539 = vsel %vm3537, %v3538, %v3530
        %v3540 = vsel %vm3533, %v3536, %v3539
        %v3541 = vsel %vm3531, nan, %v3540
        %v3542 = vpack.c.bf16 %v1385, %v1231
        %v3543 = vpack.c.bf16 %v1693, %v1539
        %v3544 = vpack.c.bf16 %v2001, %v1847
        %v3545 = vpack.c.bf16 %v2309, %v2155
        %v3546 = vpack.c.bf16 %v2617, %v2463
        %v3547 = vpack.c.bf16 %v2925, %v2771
        %v3548 = vpack.c.bf16 %v3233, %v3079
        %v3549 = vpack.c.bf16 %v3541, %v3387
        %3550 = vst [vmem:[%s454] sm:$0xff] %v3542
        %3551 = vst [vmem:[%s454 + $0x8] sm:$0xff] %v3543
        %3552 = vst [vmem:[%s454 + $0x10] sm:$0xff] %v3544
        %3553 = vst [vmem:[%s454 + $0x18] sm:$0xff] %v3545
        %3554 = vst [vmem:[%s454 + $0x20] sm:$0xff] %v3546
        %3555 = vst [vmem:[%s454 + $0x28] sm:$0xff] %v3547
        %3556 = vst [vmem:[%s454 + $0x30] sm:$0xff] %v3548
        %3557 = vst [vmem:[%s454 + $0x38] sm:$0xff] %v3549
        %v3558 = vld [vmem:[#allocation10] sm:$0xf]
        %v3559 = vld [vmem:[#allocation10 + $0x4] sm:$0xf]
        %v3560 = vld [vmem:[#allocation10 + $0x8] sm:$0xf]
        %v3561 = vld [vmem:[#allocation10 + $0xc] sm:$0xf]
        %v3562 = vld [vmem:[#allocation10 + $0x10] sm:$0xf]
        %v3563 = vld [vmem:[#allocation10 + $0x14] sm:$0xf]
        %v3564 = vld [vmem:[#allocation10 + $0x18] sm:$0xf]
        %v3565 = vld [vmem:[#allocation10 + $0x1c] sm:$0xf]
        %v3566 = vld [vmem:[#allocation10 + $0x20] sm:$0xf]
        %v3567 = vld [vmem:[#allocation10 + $0x24] sm:$0xf]
        %v3568 = vld [vmem:[#allocation10 + $0x28] sm:$0xf]
        %v3569 = vld [vmem:[#allocation10 + $0x2c] sm:$0xf]
        %v3570 = vld [vmem:[#allocation10 + $0x30] sm:$0xf]
        %v3571 = vld [vmem:[#allocation10 + $0x34] sm:$0xf]
        %v3572 = vld [vmem:[#allocation10 + $0x38] sm:$0xf]
        %v3573 = vld [vmem:[#allocation10 + $0x3c] sm:$0xf]
        %v3574 = vld [vmem:[#allocation10 + $0x40] sm:$0xf]
        %v3575 = vld [vmem:[#allocation10 + $0x44] sm:$0xf]
        %v3576 = vld [vmem:[#allocation10 + $0x48] sm:$0xf]
        %v3577 = vld [vmem:[#allocation10 + $0x4c] sm:$0xf]
        %v3578 = vld [vmem:[#allocation10 + $0x50] sm:$0xf]
        %v3579 = vld [vmem:[#allocation10 + $0x54] sm:$0xf]
        %v3580 = vld [vmem:[#allocation10 + $0x58] sm:$0xf]
        %v3581 = vld [vmem:[#allocation10 + $0x5c] sm:$0xf]
        %v3582 = vld [vmem:[#allocation10 + $0x60] sm:$0xf]
        %v3583 = vld [vmem:[#allocation10 + $0x64] sm:$0xf]
        %v3584 = vld [vmem:[#allocation10 + $0x68] sm:$0xf]
        %v3585 = vld [vmem:[#allocation10 + $0x6c] sm:$0xf]
        %v3586 = vld [vmem:[#allocation10 + $0x70] sm:$0xf]
        %v3587 = vld [vmem:[#allocation10 + $0x74] sm:$0xf]
        %v3588 = vld [vmem:[#allocation10 + $0x78] sm:$0xf]
        %v3589 = vld [vmem:[#allocation10 + $0x7c] sm:$0xf]
        %v3590 = vld [vmem:[#allocation10 + $0x80] sm:$0xf]
        %v3591 = vld [vmem:[#allocation10 + $0x84] sm:$0xf]
        %v3592 = vld [vmem:[#allocation10 + $0x88] sm:$0xf]
        %v3593 = vld [vmem:[#allocation10 + $0x8c] sm:$0xf]
        %v3594 = vld [vmem:[#allocation10 + $0x90] sm:$0xf]
        %v3595 = vld [vmem:[#allocation10 + $0x94] sm:$0xf]
        %v3596 = vld [vmem:[#allocation10 + $0x98] sm:$0xf]
        %v3597 = vld [vmem:[#allocation10 + $0x9c] sm:$0xf]
        %v3598 = vld [vmem:[#allocation10 + $0xa0] sm:$0xf]
        %v3599 = vld [vmem:[#allocation10 + $0xa4] sm:$0xf]
        %v3600 = vld [vmem:[#allocation10 + $0xa8] sm:$0xf]
        %v3601 = vld [vmem:[#allocation10 + $0xac] sm:$0xf]
        %v3602 = vld [vmem:[#allocation10 + $0xb0] sm:$0xf]
        %v3603 = vld [vmem:[#allocation10 + $0xb4] sm:$0xf]
        %v3604 = vld [vmem:[#allocation10 + $0xb8] sm:$0xf]
        %v3605 = vld [vmem:[#allocation10 + $0xbc] sm:$0xf]
        %v3606 = vld [vmem:[#allocation10 + $0xc0] sm:$0xf]
        %v3607 = vld [vmem:[#allocation10 + $0xc4] sm:$0xf]
        %v3608 = vld [vmem:[#allocation10 + $0xc8] sm:$0xf]
        %v3609 = vld [vmem:[#allocation10 + $0xcc] sm:$0xf]
        %v3610 = vld [vmem:[#allocation10 + $0xd0] sm:$0xf]
        %v3611 = vld [vmem:[#allocation10 + $0xd4] sm:$0xf]
        %v3612 = vld [vmem:[#allocation10 + $0xd8] sm:$0xf]
        %v3613 = vld [vmem:[#allocation10 + $0xdc] sm:$0xf]
        %v3614 = vld [vmem:[#allocation10 + $0xe0] sm:$0xf]
        %v3615 = vld [vmem:[#allocation10 + $0xe4] sm:$0xf]
        %v3616 = vld [vmem:[#allocation10 + $0xe8] sm:$0xf]
        %v3617 = vld [vmem:[#allocation10 + $0xec] sm:$0xf]
        %v3618 = vld [vmem:[#allocation10 + $0xf0] sm:$0xf]
        %v3619 = vld [vmem:[#allocation10 + $0xf4] sm:$0xf]
        %v3620 = vld [vmem:[#allocation10 + $0xf8] sm:$0xf]
        %v3621 = vld [vmem:[#allocation10 + $0xfc] sm:$0xf]
        %v3622 = vld [vmem:[#allocation10 + $0x100] sm:$0xf]
        %v3623 = vld [vmem:[#allocation10 + $0x104] sm:$0xf]
        %v3624 = vld [vmem:[#allocation10 + $0x108] sm:$0xf]
        %v3625 = vld [vmem:[#allocation10 + $0x10c] sm:$0xf]
        %v3626 = vld [vmem:[#allocation10 + $0x110] sm:$0xf]
        %v3627 = vld [vmem:[#allocation10 + $0x114] sm:$0xf]
        %v3628 = vld [vmem:[#allocation10 + $0x118] sm:$0xf]
        %v3629 = vld [vmem:[#allocation10 + $0x11c] sm:$0xf]
        %v3630 = vld [vmem:[#allocation10 + $0x120] sm:$0xf]
        %v3631 = vld [vmem:[#allocation10 + $0x124] sm:$0xf]
        %v3632 = vld [vmem:[#allocation10 + $0x128] sm:$0xf]
        %v3633 = vld [vmem:[#allocation10 + $0x12c] sm:$0xf]
        %v3634 = vld [vmem:[#allocation10 + $0x130] sm:$0xf]
        %v3635 = vld [vmem:[#allocation10 + $0x134] sm:$0xf]
        %v3636 = vld [vmem:[#allocation10 + $0x138] sm:$0xf]
        %v3637 = vld [vmem:[#allocation10 + $0x13c] sm:$0xf]
        %v3638 = vld [vmem:[#allocation10 + $0x140] sm:$0xf]
        %v3639 = vld [vmem:[#allocation10 + $0x144] sm:$0xf]
        %v3640 = vld [vmem:[#allocation10 + $0x148] sm:$0xf]
        %v3641 = vld [vmem:[#allocation10 + $0x14c] sm:$0xf]
        %v3642 = vld [vmem:[#allocation10 + $0x150] sm:$0xf]
        %v3643 = vld [vmem:[#allocation10 + $0x154] sm:$0xf]
        %v3644 = vld [vmem:[#allocation10 + $0x158] sm:$0xf]
        %v3645 = vld [vmem:[#allocation10 + $0x15c] sm:$0xf]
        %v3646 = vld [vmem:[#allocation10 + $0x160] sm:$0xf]
        %v3647 = vld [vmem:[#allocation10 + $0x164] sm:$0xf]
        %v3648 = vld [vmem:[#allocation10 + $0x168] sm:$0xf]
        %v3649 = vld [vmem:[#allocation10 + $0x16c] sm:$0xf]
        %v3650 = vld [vmem:[#allocation10 + $0x170] sm:$0xf]
        %v3651 = vld [vmem:[#allocation10 + $0x174] sm:$0xf]
        %v3652 = vld [vmem:[#allocation10 + $0x178] sm:$0xf]
        %v3653 = vld [vmem:[#allocation10 + $0x17c] sm:$0xf]
        %v3654 = vld [vmem:[#allocation10 + $0x180] sm:$0xf]
        %v3655 = vld [vmem:[#allocation10 + $0x184] sm:$0xf]
        %v3656 = vld [vmem:[#allocation10 + $0x188] sm:$0xf]
        %v3657 = vld [vmem:[#allocation10 + $0x18c] sm:$0xf]
        %v3658 = vld [vmem:[#allocation10 + $0x190] sm:$0xf]
        %v3659 = vld [vmem:[#allocation10 + $0x194] sm:$0xf]
        %v3660 = vld [vmem:[#allocation10 + $0x198] sm:$0xf]
        %v3661 = vld [vmem:[#allocation10 + $0x19c] sm:$0xf]
        %v3662 = vld [vmem:[#allocation10 + $0x1a0] sm:$0xf]
        %v3663 = vld [vmem:[#allocation10 + $0x1a4] sm:$0xf]
        %v3664 = vld [vmem:[#allocation10 + $0x1a8] sm:$0xf]
        %v3665 = vld [vmem:[#allocation10 + $0x1ac] sm:$0xf]
        %v3666 = vld [vmem:[#allocation10 + $0x1b0] sm:$0xf]
        %v3667 = vld [vmem:[#allocation10 + $0x1b4] sm:$0xf]
        %v3668 = vld [vmem:[#allocation10 + $0x1b8] sm:$0xf]
        %v3669 = vld [vmem:[#allocation10 + $0x1bc] sm:$0xf]
        %v3670 = vld [vmem:[#allocation10 + $0x1c0] sm:$0xf]
        %v3671 = vld [vmem:[#allocation10 + $0x1c4] sm:$0xf]
        %v3672 = vld [vmem:[#allocation10 + $0x1c8] sm:$0xf]
        %v3673 = vld [vmem:[#allocation10 + $0x1cc] sm:$0xf]
        %v3674 = vld [vmem:[#allocation10 + $0x1d0] sm:$0xf]
        %v3675 = vld [vmem:[#allocation10 + $0x1d4] sm:$0xf]
        %v3676 = vld [vmem:[#allocation10 + $0x1d8] sm:$0xf]
        %v3677 = vld [vmem:[#allocation10 + $0x1dc] sm:$0xf]
        %v3678 = vld [vmem:[#allocation10 + $0x1e0] sm:$0xf]
        %v3679 = vld [vmem:[#allocation10 + $0x1e4] sm:$0xf]
        %v3680 = vld [vmem:[#allocation10 + $0x1e8] sm:$0xf]
        %v3681 = vld [vmem:[#allocation10 + $0x1ec] sm:$0xf]
        %v3682 = vld [vmem:[#allocation10 + $0x1f0] sm:$0xf]
        %v3683 = vld [vmem:[#allocation10 + $0x1f4] sm:$0xf]
        %v3684 = vld [vmem:[#allocation10 + $0x1f8] sm:$0xf]
        %v3685 = vld [vmem:[#allocation10 + $0x1fc] sm:$0xf]
        %v3686 = vld [vmem:[%s8] sm:$0x1]
        %v3688 = vperm.slane %v3686, 0
        %v3698 = vunpack.c.l.b16 %v3542
        %v3699 = vunpack.c.h.b16 %v3542
        %v3700 = vunpack.c.l.b16 %v3543
        %v3701 = vunpack.c.h.b16 %v3543
        %v3702 = vunpack.c.l.b16 %v3544
        %v3703 = vunpack.c.h.b16 %v3544
        %v3704 = vunpack.c.l.b16 %v3545
        %v3705 = vunpack.c.h.b16 %v3545
        %v3706 = vunpack.c.l.b16 %v3546
        %v3707 = vunpack.c.h.b16 %v3546
        %v3708 = vunpack.c.l.b16 %v3547
        %v3709 = vunpack.c.h.b16 %v3547
        %v3710 = vunpack.c.l.b16 %v3548
        %v3711 = vunpack.c.h.b16 %v3548
        %v3712 = vunpack.c.l.b16 %v3549
        %v3713 = vunpack.c.h.b16 %v3549
        %v3714 = vpack.c.b16 %v3706, %v3698
        %v3715 = vpack.c.b16 %v3707, %v3699
        %v3716 = vpack.c.b16 %v3708, %v3700
        %v3717 = vpack.c.b16 %v3709, %v3701
        %v3718 = vpack.c.b16 %v3710, %v3702
        %v3719 = vpack.c.b16 %v3711, %v3703
        %v3720 = vpack.c.b16 %v3712, %v3704
        %v3721 = vpack.c.b16 %v3713, %v3705
        %v3858 = vunpack.c.l.b16 %v3558
        %v3859 = vunpack.c.l.b16 %v3559
        %v3860 = vunpack.c.l.b16 %v3560
        %v3861 = vunpack.c.l.b16 %v3561
        %v3862 = vunpack.c.l.b16 %v3562
        %v3863 = vunpack.c.l.b16 %v3563
        %v3864 = vunpack.c.l.b16 %v3564
        %v3865 = vunpack.c.l.b16 %v3565
        %v3866 = vunpack.c.l.b16 %v3566
        %v3867 = vunpack.c.l.b16 %v3567
        %v3868 = vunpack.c.l.b16 %v3568
        %v3869 = vunpack.c.l.b16 %v3569
        %v3870 = vunpack.c.l.b16 %v3570
        %v3871 = vunpack.c.l.b16 %v3571
        %v3872 = vunpack.c.l.b16 %v3572
        %v3873 = vunpack.c.l.b16 %v3573
        %v3874 = vunpack.c.l.b16 %v3574
        %v3875 = vunpack.c.l.b16 %v3575
        %v3876 = vunpack.c.l.b16 %v3576
        %v3877 = vunpack.c.l.b16 %v3577
        %v3878 = vunpack.c.l.b16 %v3578
        %v3879 = vunpack.c.l.b16 %v3579
        %v3880 = vunpack.c.l.b16 %v3580
        %v3881 = vunpack.c.l.b16 %v3581
        %v3882 = vunpack.c.l.b16 %v3582
        %v3883 = vunpack.c.l.b16 %v3583
        %v3884 = vunpack.c.l.b16 %v3584
        %v3885 = vunpack.c.l.b16 %v3585
        %v3886 = vunpack.c.l.b16 %v3586
        %v3887 = vunpack.c.l.b16 %v3587
        %v3888 = vunpack.c.l.b16 %v3588
        %v3889 = vunpack.c.l.b16 %v3589
        %v3890 = vunpack.c.l.b16 %v3590
        %v3891 = vunpack.c.l.b16 %v3591
        %v3892 = vunpack.c.l.b16 %v3592
        %v3893 = vunpack.c.l.b16 %v3593
        %v3894 = vunpack.c.l.b16 %v3594
        %v3895 = vunpack.c.l.b16 %v3595
        %v3896 = vunpack.c.l.b16 %v3596
        %v3897 = vunpack.c.l.b16 %v3597
        %v3898 = vunpack.c.l.b16 %v3598
        %v3899 = vunpack.c.l.b16 %v3599
        %v3900 = vunpack.c.l.b16 %v3600
        %v3901 = vunpack.c.l.b16 %v3601
        %v3902 = vunpack.c.l.b16 %v3602
        %v3903 = vunpack.c.l.b16 %v3603
        %v3904 = vunpack.c.l.b16 %v3604
        %v3905 = vunpack.c.l.b16 %v3605
        %v3906 = vunpack.c.l.b16 %v3606
        %v3907 = vunpack.c.l.b16 %v3607
        %v3908 = vunpack.c.l.b16 %v3608
        %v3909 = vunpack.c.l.b16 %v3609
        %v3910 = vunpack.c.l.b16 %v3610
        %v3911 = vunpack.c.l.b16 %v3611
        %v3912 = vunpack.c.l.b16 %v3612
        %v3913 = vunpack.c.l.b16 %v3613
        %v3914 = vunpack.c.l.b16 %v3614
        %v3915 = vunpack.c.l.b16 %v3615
        %v3916 = vunpack.c.l.b16 %v3616
        %v3917 = vunpack.c.l.b16 %v3617
        %v3918 = vunpack.c.l.b16 %v3618
        %v3919 = vunpack.c.l.b16 %v3619
        %v3920 = vunpack.c.l.b16 %v3620
        %v3921 = vunpack.c.l.b16 %v3621
        %v3922 = vunpack.c.l.b16 %v3622
        %v3923 = vunpack.c.l.b16 %v3623
        %v3924 = vunpack.c.l.b16 %v3624
        %v3925 = vunpack.c.l.b16 %v3625
        %v3926 = vunpack.c.l.b16 %v3626
        %v3927 = vunpack.c.l.b16 %v3627
        %v3928 = vunpack.c.l.b16 %v3628
        %v3929 = vunpack.c.l.b16 %v3629
        %v3930 = vunpack.c.l.b16 %v3630
        %v3931 = vunpack.c.l.b16 %v3631
        %v3932 = vunpack.c.l.b16 %v3632
        %v3933 = vunpack.c.l.b16 %v3633
        %v3934 = vunpack.c.l.b16 %v3634
        %v3935 = vunpack.c.l.b16 %v3635
        %v3936 = vunpack.c.l.b16 %v3636
        %v3937 = vunpack.c.l.b16 %v3637
        %v3938 = vunpack.c.l.b16 %v3638
        %v3939 = vunpack.c.l.b16 %v3639
        %v3940 = vunpack.c.l.b16 %v3640
        %v3941 = vunpack.c.l.b16 %v3641
        %v3942 = vunpack.c.l.b16 %v3642
        %v3943 = vunpack.c.l.b16 %v3643
        %v3944 = vunpack.c.l.b16 %v3644
        %v3945 = vunpack.c.l.b16 %v3645
        %v3946 = vunpack.c.l.b16 %v3646
        %v3947 = vunpack.c.l.b16 %v3647
        %v3948 = vunpack.c.l.b16 %v3648
        %v3949 = vunpack.c.l.b16 %v3649
        %v3950 = vunpack.c.l.b16 %v3650
        %v3951 = vunpack.c.l.b16 %v3651
        %v3952 = vunpack.c.l.b16 %v3652
        %v3953 = vunpack.c.l.b16 %v3653
        %v3954 = vunpack.c.l.b16 %v3654
        %v3955 = vunpack.c.l.b16 %v3655
        %v3956 = vunpack.c.l.b16 %v3656
        %v3957 = vunpack.c.l.b16 %v3657
        %v3958 = vunpack.c.l.b16 %v3658
        %v3959 = vunpack.c.l.b16 %v3659
        %v3960 = vunpack.c.l.b16 %v3660
        %v3961 = vunpack.c.l.b16 %v3661
        %v3962 = vunpack.c.l.b16 %v3662
        %v3963 = vunpack.c.l.b16 %v3663
        %v3964 = vunpack.c.l.b16 %v3664
        %v3965 = vunpack.c.l.b16 %v3665
        %v3966 = vunpack.c.l.b16 %v3666
        %v3967 = vunpack.c.l.b16 %v3667
        %v3968 = vunpack.c.l.b16 %v3668
        %v3969 = vunpack.c.l.b16 %v3669
        %v3970 = vunpack.c.l.b16 %v3670
        %v3971 = vunpack.c.l.b16 %v3671
        %v3972 = vunpack.c.l.b16 %v3672
        %v3973 = vunpack.c.l.b16 %v3673
        %v3974 = vunpack.c.l.b16 %v3674
        %v3975 = vunpack.c.l.b16 %v3675
        %v3976 = vunpack.c.l.b16 %v3676
        %v3977 = vunpack.c.l.b16 %v3677
        %v3978 = vunpack.c.l.b16 %v3678
        %v3979 = vunpack.c.l.b16 %v3679
        %v3980 = vunpack.c.l.b16 %v3680
        %v3981 = vunpack.c.l.b16 %v3681
        %v3982 = vunpack.c.l.b16 %v3682
        %v3983 = vunpack.c.l.b16 %v3683
        %v3984 = vunpack.c.l.b16 %v3684
        %v3985 = vunpack.c.l.b16 %v3685
        %v3986 = vpack.c.b16 %v3859, %v3858
        %v3987 = vpack.c.b16 %v3861, %v3860
        %v3988 = vpack.c.b16 %v3863, %v3862
        %v3989 = vpack.c.b16 %v3865, %v3864
        %v3990 = vpack.c.b16 %v3867, %v3866
        %v3991 = vpack.c.b16 %v3869, %v3868
        %v3992 = vpack.c.b16 %v3871, %v3870
        %v3993 = vpack.c.b16 %v3873, %v3872
        %v3994 = vpack.c.b16 %v3875, %v3874
        %v3995 = vpack.c.b16 %v3877, %v3876
        %v3996 = vpack.c.b16 %v3879, %v3878
        %v3997 = vpack.c.b16 %v3881, %v3880
        %v3998 = vpack.c.b16 %v3883, %v3882
        %v3999 = vpack.c.b16 %v3885, %v3884
        %v4000 = vpack.c.b16 %v3887, %v3886
        %v4001 = vpack.c.b16 %v3889, %v3888
        %v4002 = vpack.c.b16 %v3891, %v3890
        %v4003 = vpack.c.b16 %v3893, %v3892
        %v4004 = vpack.c.b16 %v3895, %v3894
        %v4005 = vpack.c.b16 %v3897, %v3896
        %v4006 = vpack.c.b16 %v3899, %v3898
        %v4007 = vpack.c.b16 %v3901, %v3900
        %v4008 = vpack.c.b16 %v3903, %v3902
        %v4009 = vpack.c.b16 %v3905, %v3904
        %v4010 = vpack.c.b16 %v3907, %v3906
        %v4011 = vpack.c.b16 %v3909, %v3908
        %v4012 = vpack.c.b16 %v3911, %v3910
        %v4013 = vpack.c.b16 %v3913, %v3912
        %v4014 = vpack.c.b16 %v3915, %v3914
        %v4015 = vpack.c.b16 %v3917, %v3916
        %v4016 = vpack.c.b16 %v3919, %v3918
        %v4017 = vpack.c.b16 %v3921, %v3920
        %v4018 = vpack.c.b16 %v3923, %v3922
        %v4019 = vpack.c.b16 %v3925, %v3924
        %v4020 = vpack.c.b16 %v3927, %v3926
        %v4021 = vpack.c.b16 %v3929, %v3928
        %v4022 = vpack.c.b16 %v3931, %v3930
        %v4023 = vpack.c.b16 %v3933, %v3932
        %v4024 = vpack.c.b16 %v3935, %v3934
        %v4025 = vpack.c.b16 %v3937, %v3936
        %v4026 = vpack.c.b16 %v3939, %v3938
        %v4027 = vpack.c.b16 %v3941, %v3940
        %v4028 = vpack.c.b16 %v3943, %v3942
        %v4029 = vpack.c.b16 %v3945, %v3944
        %v4030 = vpack.c.b16 %v3947, %v3946
        %v4031 = vpack.c.b16 %v3949, %v3948
        %v4032 = vpack.c.b16 %v3951, %v3950
        %v4033 = vpack.c.b16 %v3953, %v3952
        %v4034 = vpack.c.b16 %v3955, %v3954
        %v4035 = vpack.c.b16 %v3957, %v3956
        %v4036 = vpack.c.b16 %v3959, %v3958
        %v4037 = vpack.c.b16 %v3961, %v3960
        %v4038 = vpack.c.b16 %v3963, %v3962
        %v4039 = vpack.c.b16 %v3965, %v3964
        %v4040 = vpack.c.b16 %v3967, %v3966
        %v4041 = vpack.c.b16 %v3969, %v3968
        %v4042 = vpack.c.b16 %v3971, %v3970
        %v4043 = vpack.c.b16 %v3973, %v3972
        %v4044 = vpack.c.b16 %v3975, %v3974
        %v4045 = vpack.c.b16 %v3977, %v3976
        %v4046 = vpack.c.b16 %v3979, %v3978
        %v4047 = vpack.c.b16 %v3981, %v3980
        %v4048 = vpack.c.b16 %v3983, %v3982
        %v4049 = vpack.c.b16 %v3985, %v3984
        %4114 = vmatpush.bf16.msra.mxu0 %v3993
        %4115 = vmatpush.bf16.msra.mxu0 %v3992
        %4116 = vmatpush.bf16.msra.mxu0 %v3991
        %4117 = vmatpush.bf16.msra.mxu0 %v3990
        %4118 = vmatpush.bf16.msra.mxu0 %v3989
        %4119 = vmatpush.bf16.msra.mxu0 %v3988
        %4120 = vmatpush.bf16.msra.mxu0 %v3987
        %4121 = vmatpush.bf16.msra.mxu0 %v3986
        %4122 = vmatmul.bf16.gmra.mxu0 %v3714
        %v4123 = vpop.f32.mrf.mxu0
        %v4124 = vadd.f32 %v3688, %v4123
        %v4125 = vpop.f32.mrf.mxu0
        %v4126 = vadd.f32 %v3688, %v4125
        %4127 = vdwg.mxu0
        %4128 = vmatpush.bf16.msra.mxu0 %v4001
        %4129 = vmatpush.bf16.msra.mxu0 %v4000
        %4130 = vmatpush.bf16.msra.mxu0 %v3999
        %4131 = vmatpush.bf16.msra.mxu0 %v3998
        %4132 = vmatpush.bf16.msra.mxu0 %v3997
        %4133 = vmatpush.bf16.msra.mxu0 %v3996
        %4134 = vmatpush.bf16.msra.mxu0 %v3995
        %4135 = vmatpush.bf16.msra.mxu0 %v3994
        %4136 = vmatmul.bf16.gmra.mxu0 %v3715
        %v4137 = vpop.f32.mrf.mxu0
        %v4138 = vadd.f32 %v4124, %v4137
        %v4139 = vpop.f32.mrf.mxu0
        %v4140 = vadd.f32 %v4126, %v4139
        %4141 = vdwg.mxu0
        %4142 = vmatpush.bf16.msra.mxu0 %v4009
        %4143 = vmatpush.bf16.msra.mxu0 %v4008
        %4144 = vmatpush.bf16.msra.mxu0 %v4007
        %4145 = vmatpush.bf16.msra.mxu0 %v4006
        %4146 = vmatpush.bf16.msra.mxu0 %v4005
        %4147 = vmatpush.bf16.msra.mxu0 %v4004
        %4148 = vmatpush.bf16.msra.mxu0 %v4003
        %4149 = vmatpush.bf16.msra.mxu0 %v4002
        %4150 = vmatmul.bf16.gmra.mxu0 %v3716
        %v4151 = vpop.f32.mrf.mxu0
        %v4152 = vadd.f32 %v4138, %v4151
        %v4153 = vpop.f32.mrf.mxu0
        %v4154 = vadd.f32 %v4140, %v4153
        %4155 = vdwg.mxu0
        %4156 = vmatpush.bf16.msra.mxu0 %v4017
        %4157 = vmatpush.bf16.msra.mxu0 %v4016
        %4158 = vmatpush.bf16.msra.mxu0 %v4015
        %4159 = vmatpush.bf16.msra.mxu0 %v4014
        %4160 = vmatpush.bf16.msra.mxu0 %v4013
        %4161 = vmatpush.bf16.msra.mxu0 %v4012
        %4162 = vmatpush.bf16.msra.mxu0 %v4011
        %4163 = vmatpush.bf16.msra.mxu0 %v4010
        %4164 = vmatmul.bf16.gmra.mxu0 %v3717
        %v4165 = vpop.f32.mrf.mxu0
        %v4166 = vadd.f32 %v4152, %v4165
        %v4167 = vpop.f32.mrf.mxu0
        %v4168 = vadd.f32 %v4154, %v4167
        %4169 = vdwg.mxu0
        %4170 = vmatpush.bf16.msra.mxu0 %v4025
        %4171 = vmatpush.bf16.msra.mxu0 %v4024
        %4172 = vmatpush.bf16.msra.mxu0 %v4023
        %4173 = vmatpush.bf16.msra.mxu0 %v4022
        %4174 = vmatpush.bf16.msra.mxu0 %v4021
        %4175 = vmatpush.bf16.msra.mxu0 %v4020
        %4176 = vmatpush.bf16.msra.mxu0 %v4019
        %4177 = vmatpush.bf16.msra.mxu0 %v4018
        %4178 = vmatmul.bf16.gmra.mxu0 %v3718
        %v4179 = vpop.f32.mrf.mxu0
        %v4180 = vadd.f32 %v4166, %v4179
        %v4181 = vpop.f32.mrf.mxu0
        %v4182 = vadd.f32 %v4168, %v4181
        %4183 = vdwg.mxu0
        %4184 = vmatpush.bf16.msra.mxu0 %v4033
        %4185 = vmatpush.bf16.msra.mxu0 %v4032
        %4186 = vmatpush.bf16.msra.mxu0 %v4031
        %4187 = vmatpush.bf16.msra.mxu0 %v4030
        %4188 = vmatpush.bf16.msra.mxu0 %v4029
        %4189 = vmatpush.bf16.msra.mxu0 %v4028
        %4190 = vmatpush.bf16.msra.mxu0 %v4027
        %4191 = vmatpush.bf16.msra.mxu0 %v4026
        %4192 = vmatmul.bf16.gmra.mxu0 %v3719
        %v4193 = vpop.f32.mrf.mxu0
        %v4194 = vadd.f32 %v4180, %v4193
        %v4195 = vpop.f32.mrf.mxu0
        %v4196 = vadd.f32 %v4182, %v4195
        %4197 = vdwg.mxu0
        %4198 = vmatpush.bf16.msra.mxu0 %v4041
        %4199 = vmatpush.bf16.msra.mxu0 %v4040
        %4200 = vmatpush.bf16.msra.mxu0 %v4039
        %4201 = vmatpush.bf16.msra.mxu0 %v4038
        %4202 = vmatpush.bf16.msra.mxu0 %v4037
        %4203 = vmatpush.bf16.msra.mxu0 %v4036
        %4204 = vmatpush.bf16.msra.mxu0 %v4035
        %4205 = vmatpush.bf16.msra.mxu0 %v4034
        %4206 = vmatmul.bf16.gmra.mxu0 %v3720
        %v4207 = vpop.f32.mrf.mxu0
        %v4208 = vadd.f32 %v4194, %v4207
        %v4209 = vpop.f32.mrf.mxu0
        %v4210 = vadd.f32 %v4196, %v4209
        %4211 = vdwg.mxu0
        %4212 = vmatpush.bf16.msra.mxu0 %v4049
        %4213 = vmatpush.bf16.msra.mxu0 %v4048
        %4214 = vmatpush.bf16.msra.mxu0 %v4047
        %4215 = vmatpush.bf16.msra.mxu0 %v4046
        %4216 = vmatpush.bf16.msra.mxu0 %v4045
        %4217 = vmatpush.bf16.msra.mxu0 %v4044
        %4218 = vmatpush.bf16.msra.mxu0 %v4043
        %4219 = vmatpush.bf16.msra.mxu0 %v4042
        %4220 = vmatmul.bf16.gmra.mxu0 %v3721
        %v4221 = vpop.f32.mrf.mxu0
        %v4222 = vadd.f32 %v4208, %v4221
        %v4223 = vpop.f32.mrf.mxu0
        %v4224 = vadd.f32 %v4210, %v4223
        %4225 = vdwg.mxu0
        %4226 = vst [vmem:[%s447] sm:$0xff] %v4222
        %4227 = vst [vmem:[%s447 + $0x8] sm:$0xff] %v4224
        %s4228 = sand.u32 %s235, 1
        %s4229 = scalar_lea.sflag [#allocation4], %s4228
        %s4230 = sand.u32 %s235, 1
        %s4231 = smul.addr %s4230, 16
        %s4232 = scalar_lea.vmem [#allocation11], %s4231
        %s4233 = sand.u32 %s261, 1
        %s4234 = scalar_lea.sflag [#allocation13], %s4233
        %s4235 = sand.u32 %s261, 1
        %s4236 = smul.addr %s4235, 64
        %s4237 = scalar_lea.vmem [#allocation12], %s4236
        // Predicated region
        $region77: #{tpu_custom_call.1} parent=55 // pred_check
          %p4238 = pneg %p245
        $region78: #{tpu_custom_call.1} parent=55 // pred_check_branch
          %4240 = sbr.rel (%p4238) target = $region80
        $region79: #{tpu_custom_call.1} parent=55 // pred_region
          %s4241 = smul.u32 2, %s33
          %4243 = vsyncadd %s4229, 0
          %s4244 = smul.addr %s4241, 8
          %s4245 = scalar_lea.hbm %s9, %s4244
          %s4246 = sshll.u32 %s4232, 4
          %s4247 = int_to_ptr.vmem [resolvable:$true] %s4246
          %s4248 = sshll.u32 %s4245, 4
          %s4249 = int_to_ptr.hbm [resolvable:$true] %s4248
          %4254 = dma.vmem_to_hbm [thread:$0]  %s4247, 256, %s4249, %s4229, 128, 128, 8
        $region80: #{tpu_custom_call.1} parent=55 // pred_fallthru
          _
        // Predicated region
        $region81: #{tpu_custom_call.1} parent=55 // pred_check
          %p4255 = pneg %p271
        $region82: #{tpu_custom_call.1} parent=55 // pred_check_branch
          %4257 = sbr.rel (%p4255) target = $region84
        $region83: #{tpu_custom_call.1} parent=55 // pred_region
          %s4258 = smul.u32 2, %s33
          %4260 = vsyncadd %s4234, 0
          %s4261 = smul.addr %s4258, 8
          %s4262 = smul.addr %s4261, 4
          %s4263 = scalar_lea.hbm %s10, %s4262
          %s4264 = sshll.u32 %s4237, 4
          %s4265 = int_to_ptr.vmem [resolvable:$true] %s4264
          %s4266 = sshll.u32 %s4263, 4
          %s4267 = int_to_ptr.hbm [resolvable:$true] %s4266
          %4272 = dma.vmem_to_hbm [thread:$0]  %s4265, 1024, %s4267, %s4234, 512, 512, 32
        $region84: #{tpu_custom_call.1} parent=55 // pred_fallthru
          _
      $region56: #{tpu_custom_call.1} parent=5 // pred_fallthru
        _
      %p4273 = scmp.le.s32.totalorder 2, %s28
      // Predicated region
      $region85: #{tpu_custom_call.1} parent=5 // pred_check
        %p4274 = pneg %p4273
      $region86: #{tpu_custom_call.1} parent=5 // pred_check_branch
        %4276 = sbr.rel (%p4274) target = $region88
      $region87: #{tpu_custom_call.1} parent=5 // pred_region
        %s4277 = ssub.s32 %s28, 2
        // Predicated region
        $region89: #{tpu_custom_call.1} parent=87 // pred_check
          %p4278 = pneg %p251
        $region90: #{tpu_custom_call.1} parent=87 // pred_check_branch
          %4280 = sbr.rel (%p4278) target = $region92
        $region91: #{tpu_custom_call.1} parent=87 // pred_region
          %s4281 = sand.u32 %s236, 1
          %s4282 = scalar_lea.sflag [#allocation4], %s4281
          %s4283 = sand.u32 %s236, 1
          %s4284 = smul.addr %s4283, 16
          %s4285 = scalar_lea.vmem [#allocation11], %s4284
          %4287 = dma.done %s4282, 256
        $region92: #{tpu_custom_call.1} parent=87 // pred_fallthru
          _
        // Predicated region
        $region93: #{tpu_custom_call.1} parent=87 // pred_check
          %p4288 = pneg %p277
        $region94: #{tpu_custom_call.1} parent=87 // pred_check_branch
          %4290 = sbr.rel (%p4288) target = $region96
        $region95: #{tpu_custom_call.1} parent=87 // pred_region
          %s4291 = sand.u32 %s262, 1
          %s4292 = scalar_lea.sflag [#allocation13], %s4291
          %s4293 = sand.u32 %s262, 1
          %s4294 = smul.addr %s4293, 64
          %s4295 = scalar_lea.vmem [#allocation12], %s4294
          %4297 = dma.done %s4292, 1024
        $region96: #{tpu_custom_call.1} parent=87 // pred_fallthru
          _
      $region88: #{tpu_custom_call.1} parent=5 // pred_fallthru
        _
    $region6: #{tpu_custom_call.1} parent=1 // loop_footer
      %s32 = sadd.s32 1, %s28
    $region7: #{tpu_custom_call.1} parent=1 // loop_footer_branch
      %27 = sbr.rel target = $region3
    $region8: #{tpu_custom_call.1} parent=1 // loop_exit
      _
    %4298 = vsyncpa [#allocation3], 1
    %s4299 = scalar_lea.sflag [#allocation3], 1
    %4300 = vsyncpa %s4299, 1
    %4301 = vsyncpa [#allocation6], 1
    %4302 = vsyncpa [#allocation9], 1
    %4303 = vsyncpa [#allocation4], 1
    %s4304 = scalar_lea.sflag [#allocation4], 1
    %4305 = vsyncpa %s4304, 1
    %4306 = vsyncpa [#allocation13], 1
    %s4307 = scalar_lea.sflag [#allocation13], 1
    %4308 = vsyncpa %s4307, 1

</llo_original>
